<compile_context>
chip_gen: v5e
topology: v5e:2x2
jax: 0.10.0
libtpu: 0.0.40
codegen_flags: <defaults>
</compile_context>

<pallas_src>
from functools import partial

import jax
import jax.numpy as jnp
from jax.experimental import pallas as pl
from jax.experimental.pallas import tpu as pltpu

BN_EPS = 1e-5
PRELU_INIT = 0.25          # nn.PReLU() default single shared parameter
VMEM_LIMIT = 32 << 20      # modest scoped-VMEM request (v7x has only 64 MiB/TC)


# ---------------------------------------------------------------------------
# Kernel A: 3x3 same-padding conv (stride 1, bias=False) + BatchNorm partials.
# Grid over the batch; each step holds one padded NHWC image in VMEM and does
# 9 accumulating bf16 MXU dots (one per kernel tap) from shifted views, plus
# per-channel (sum, sum_sq) partials for the decoupled BatchNorm reduction.
# ---------------------------------------------------------------------------
def _conv3x3_stats_kernel(xp_ref, w_ref, y_ref, st_ref, *, H, W):
    C = xp_ref.shape[-1]                      # input channels
    acc = jnp.zeros((H * W, w_ref.shape[-1]), jnp.float32)
    for ky in range(3):
        for kx in range(3):
            k = ky * 3 + kx
            patch = xp_ref[pl.ds(ky, H), pl.ds(kx, W), :].reshape(H * W, C)
            w_tap = w_ref[pl.ds(k * C, C), :]                       # (C, Co)
            acc = acc + jnp.dot(patch, w_tap,
                                preferred_element_type=jnp.float32)
    y_ref[...] = acc                                                # (H*W, Co)
    s1 = jnp.sum(acc, axis=0, keepdims=True)                        # (1, Co)
    s2 = jnp.sum(acc * acc, axis=0, keepdims=True)                  # (1, Co)
    st_ref[...] = jnp.concatenate([s1, s2], axis=0)                 # (2, Co)


def conv3x3_stats(xp, w2d):
    """xp: (N, H+2, W+2, C) bf16 zero-padded NHWC; w2d: (9*C, Co) bf16."""
    N, Hp, Wp, C = xp.shape
    H, W = Hp - 2, Wp - 2
    Co = w2d.shape[-1]
    kernel = partial(_conv3x3_stats_kernel, H=H, W=W)
    flops = 2 * N * H * W * 9 * C * Co
    bytes_accessed = (xp.size * 2 + w2d.size * 2
                      + N * H * W * Co * 4 + N * 2 * Co * 4)
    return pl.pallas_call(
        kernel,
        out_shape=(jax.ShapeDtypeStruct((N, H * W, Co), jnp.float32),
                   jax.ShapeDtypeStruct((N, 2, Co), jnp.float32)),
        grid=(N,),
        in_specs=[
            pl.BlockSpec((None, Hp, Wp, C), lambda i: (i, 0, 0, 0)),
            pl.BlockSpec((9 * C, Co), lambda i: (0, 0)),
        ],
        out_specs=(
            pl.BlockSpec((None, H * W, Co), lambda i: (i, 0, 0)),
            pl.BlockSpec((None, 2, Co), lambda i: (i, 0, 0)),
        ),
        compiler_params=pltpu.CompilerParams(
            dimension_semantics=("parallel",),
            vmem_limit_bytes=VMEM_LIMIT),
        cost_estimate=pl.CostEstimate(flops=flops, transcendentals=0,
                                      bytes_accessed=bytes_accessed),
    )(xp, w2d)


# ---------------------------------------------------------------------------
# Kernel B: elementwise  out = PReLU( y * scale + shift )   (BN1 + PReLU)
# Kernel C: elementwise  out = y * scale + shift + x        (BN2 + residual)
# Both operate on a lane-dense (rows, 128) view of the activations.
# ---------------------------------------------------------------------------
def _bn_prelu_kernel(y_ref, sc_ref, sh_ref, alpha_ref, o_ref):
    z = y_ref[...] * sc_ref[...] + sh_ref[...]
    a = alpha_ref[0]
    o_ref[...] = jnp.where(z >= 0.0, z, a * z).astype(o_ref.dtype)


def bn_prelu(y, scale, shift, alpha, out_dtype):
    N, M, CW = y.shape
    bytes_accessed = (y.size * 4 + 2 * CW * 4 + 4
                      + N * M * CW * jnp.dtype(out_dtype).itemsize)
    return pl.pallas_call(
        _bn_prelu_kernel,
        out_shape=jax.ShapeDtypeStruct((N, M, CW), out_dtype),
        grid=(N,),
        in_specs=[
            pl.BlockSpec((None, M, CW), lambda i: (i, 0, 0)),
            pl.BlockSpec((1, CW), lambda i: (0, 0)),
            pl.BlockSpec((1, CW), lambda i: (0, 0)),
            pl.BlockSpec(memory_space=pltpu.MemorySpace.SMEM),   # PReLU alpha
        ],
        out_specs=pl.BlockSpec((None, M, CW), lambda i: (i, 0, 0)),
        compiler_params=pltpu.CompilerParams(
            dimension_semantics=("parallel",),
            vmem_limit_bytes=VMEM_LIMIT),
        cost_estimate=pl.CostEstimate(flops=4 * N * M * CW, transcendentals=0,
                                      bytes_accessed=bytes_accessed),
    )(y, scale, shift, alpha)


def _bn_add_kernel(y_ref, x_ref, sc_ref, sh_ref, o_ref):
    o_ref[...] = y_ref[...] * sc_ref[...] + sh_ref[...] + x_ref[...]


def bn_residual(y, x, scale, shift):
    N, M, CW = y.shape
    bytes_accessed = y.size * 4 + x.size * 4 + 2 * CW * 4 + N * M * CW * 4
    return pl.pallas_call(
        _bn_add_kernel,
        out_shape=jax.ShapeDtypeStruct((N, M, CW), jnp.float32),
        grid=(N,),
        in_specs=[
            pl.BlockSpec((None, M, CW), lambda i: (i, 0, 0)),
            pl.BlockSpec((None, M, CW), lambda i: (i, 0, 0)),
            pl.BlockSpec((1, CW), lambda i: (0, 0)),
            pl.BlockSpec((1, CW), lambda i: (0, 0)),
        ],
        out_specs=pl.BlockSpec((None, M, CW), lambda i: (i, 0, 0)),
        compiler_params=pltpu.CompilerParams(
            dimension_semantics=("parallel",),
            vmem_limit_bytes=VMEM_LIMIT),
        cost_estimate=pl.CostEstimate(flops=3 * N * M * CW, transcendentals=0,
                                      bytes_accessed=bytes_accessed),
    )(y, x, scale, shift)


# ---------------------------------------------------------------------------
# BatchNorm statistics finalize (training-mode batch stats, biased variance).
# ---------------------------------------------------------------------------
def _bn_scale_shift(st, gamma, beta, count):
    """st: (N, 2, C) per-image (sum, sum_sq) partials -> affine (scale, shift)."""
    tot = jnp.sum(st, axis=0)                                    # (2, C)
    mean = tot[0] / count
    var = jnp.maximum(tot[1] / count - mean * mean, 0.0)         # biased var
    scale = gamma * jax.lax.rsqrt(var + BN_EPS)
    shift = beta - mean * scale
    # TODO(synk): running_mean / running_var buffer updates (training-time side
    # effect of nn.BatchNorm2d) are not produced by this pure forward pass.
    return scale, shift


# ---------------------------------------------------------------------------
# Full ResidualBlock forward (matches the PyTorch module semantics).
# ---------------------------------------------------------------------------
def residual_block_forward(params, x_nchw):
    x = jnp.transpose(x_nchw, (0, 2, 3, 1)).astype(jnp.float32)  # NCHW -> NHWC
    N, H, W, C = x.shape
    pack = 2 if (H * W) % 2 == 0 else 1      # lane-dense packing for elementwise
    CW = C * pack
    M = (H * W) // pack
    count = N * H * W

    w1 = params["w1"].reshape(9 * C, C).astype(jnp.bfloat16)     # (ky,kx,Cin)-major
    w2 = params["w2"].reshape(9 * C, C).astype(jnp.bfloat16)

    def tile_cw(v):                                              # (C,) -> (1, CW)
        return jnp.tile(v.reshape(1, C), (1, pack))

    # conv1 (bias=False) + BN1 partial stats
    xp = jnp.pad(x.astype(jnp.bfloat16), ((0, 0), (1, 1), (1, 1), (0, 0)))
    y1, st1 = conv3x3_stats(xp, w1)                              # (N,H*W,C), (N,2,C)
    sc1, sh1 = _bn_scale_shift(st1, params["g1"], params["b1"], count)

    # BN1 + PReLU (lane-dense elementwise pass; bf16 output feeds conv2's MXU)
    o1 = bn_prelu(y1.reshape(N, M, CW), tile_cw(sc1), tile_cw(sh1),
                  params["prelu_a"], out_dtype=jnp.bfloat16)
    o1 = o1.reshape(N, H, W, C)

    # conv2 (bias=False) + BN2 partial stats
    o1p = jnp.pad(o1, ((0, 0), (1, 1), (1, 1), (0, 0)))
    y2, st2 = conv3x3_stats(o1p, w2)
    sc2, sh2 = _bn_scale_shift(st2, params["g2"], params["b2"], count)

    # BN2 + residual add (f32, exact residual against the original input)
    out = bn_residual(y2.reshape(N, M, CW), x.reshape(N, M, CW),
                      tile_cw(sc2), tile_cw(sh2))
    out = out.reshape(N, H, W, C)
    return jnp.transpose(out, (0, 3, 1, 2))                      # back to NCHW


# ---------------------------------------------------------------------------
# Parameters (deterministic synthetic init — shapes follow the PyTorch module)
# ---------------------------------------------------------------------------
def init_params(key):
    C = 64
    k = jax.random.split(key, 6)
    return {
        "w1": 0.05 * jax.random.normal(k[0], (3, 3, C, C), jnp.float32),  # HWIO
        "g1": 1.0 + 0.1 * jax.random.normal(k[1], (C,), jnp.float32),
        "b1": 0.1 * jax.random.normal(k[2], (C,), jnp.float32),
        "prelu_a": jnp.full((1,), PRELU_INIT, jnp.float32),   # learnable in torch
        "w2": 0.05 * jax.random.normal(k[3], (3, 3, C, C), jnp.float32),
        "g2": 1.0 + 0.1 * jax.random.normal(k[4], (C,), jnp.float32),
        "b2": 0.1 * jax.random.normal(k[5], (C,), jnp.float32),
    }


# ---------------------------------------------------------------------------
# Pure-XLA reference with the same bf16-input / f32-accumulate policy.
# ---------------------------------------------------------------------------
def residual_block_reference(params, x_nchw):
    x = jnp.transpose(x_nchw, (0, 2, 3, 1)).astype(jnp.float32)

    def conv(inp, w_hwio):
        return jax.lax.conv_general_dilated(
            inp.astype(jnp.bfloat16), w_hwio.astype(jnp.bfloat16),
            window_strides=(1, 1), padding=((1, 1), (1, 1)),
            dimension_numbers=("NHWC", "HWIO", "NHWC"),
            preferred_element_type=jnp.float32)

    def bn(y, g, b):
        mean = jnp.mean(y, axis=(0, 1, 2))
        var = jnp.mean(jnp.square(y - mean), axis=(0, 1, 2))
        return (y - mean) * jax.lax.rsqrt(var + BN_EPS) * g + b

    a = params["prelu_a"][0]
    z1 = bn(conv(x, params["w1"]), params["g1"], params["b1"])
    o1 = jnp.where(z1 >= 0.0, z1, a * z1).astype(jnp.bfloat16)
    z2 = bn(conv(o1, params["w2"]), params["g2"], params["b2"])
    out = z2 + x
    return jnp.transpose(out, (0, 3, 1, 2))


if __name__ == "__main__":
    BATCH, C, H, W = 2, 64, 16, 16        # ResidualBlock is fixed at 64 channels

    key = jax.random.PRNGKey(0)
    k_params, k_x = jax.random.split(key)
    params = init_params(k_params)
    x = jax.random.normal(k_x, (BATCH, C, H, W), jnp.float32)    # NCHW like torch

    fwd = jax.jit(residual_block_forward)
    out = jax.block_until_ready(fwd(params, x))

    assert out.shape == (BATCH, C, H, W), out.shape
    assert bool(jnp.all(jnp.isfinite(out))), "non-finite output"

    ref = jax.block_until_ready(jax.jit(residual_block_reference)(params, x))
    err = float(jnp.max(jnp.abs(out - ref)))
    assert err < 5e-2, f"kernel vs reference mismatch: max abs err = {err}"

    print("KERNEL_OK")
</pallas_src>

<mosaic_0001>
module attributes {stable_mosaic.version = 11 : i64} {
  func.func @_conv3x3_stats_kernel(%arg0: i32, %arg1: memref<1x18x18x64xbf16, #tpu.memory_space<vmem>>, %arg2: memref<576x64xbf16, #tpu.memory_space<vmem>>, %arg3: memref<1x256x64xf32, #tpu.memory_space<vmem>>, %arg4: memref<1x2x64xf32, #tpu.memory_space<vmem>>) attributes {dimension_semantics = [#tpu.dimension_semantics<parallel>], iteration_bounds = array<i64: 2>, scalar_prefetch = 0 : i64, scratch_operands = 0 : i64, tpu.core_type = #tpu.core_type<tc>, window_params = [{transform_indices = @transform_0, window_bounds = array<i64: 1, 18, 18, 64>}, {pipeline_mode = #tpu.pipeline_mode<synchronous>, transform_indices = @transform_1, window_bounds = array<i64: 576, 64>}, {transform_indices = @transform_2, window_bounds = array<i64: 1, 256, 64>}, {transform_indices = @transform_3, window_bounds = array<i64: 1, 2, 64>}]} {
    %cst = arith.constant 0.000000e+00 : f32
    %0 = vector.broadcast %cst : f32 to vector<256x64xf32>
    %c0 = arith.constant 0 : index
    %c0_0 = arith.constant 0 : index
    %c0_1 = arith.constant 0 : index
    %c0_2 = arith.constant 0 : index
    %1 = vector.load %arg1[%c0, %c0_0, %c0_1, %c0_2] : memref<1x18x18x64xbf16, #tpu.memory_space<vmem>>, vector<1x16x16x64xbf16>
    %2 = vector.shape_cast %1 : vector<1x16x16x64xbf16> to vector<16x16x64xbf16>
    %3 = vector.shape_cast %2 : vector<16x16x64xbf16> to vector<256x64xbf16>
    %c0_3 = arith.constant 0 : index
    %c0_4 = arith.constant 0 : index
    %4 = vector.load %arg2[%c0_3, %c0_4] : memref<576x64xbf16, #tpu.memory_space<vmem>>, vector<64x64xbf16>
    %cst_5 = arith.constant dense<0.000000e+00> : vector<256x64xf32>
    %5 = tpu.matmul %3, %4, %cst_5 {dimension_numbers = #tpu.dot_dimension_numbers<[1], [0], [0], [1], [0, 0, 1, 1], [], []>} : vector<256x64xbf16>, vector<64x64xbf16>, vector<256x64xf32> -> vector<256x64xf32>
    %6 = arith.addf %0, %5 : vector<256x64xf32>
    %c0_6 = arith.constant 0 : index
    %c0_7 = arith.constant 0 : index
    %c1 = arith.constant 1 : index
    %c0_8 = arith.constant 0 : index
    %7 = vector.load %arg1[%c0_6, %c0_7, %c1, %c0_8] : memref<1x18x18x64xbf16, #tpu.memory_space<vmem>>, vector<1x16x16x64xbf16>
    %8 = vector.shape_cast %7 : vector<1x16x16x64xbf16> to vector<16x16x64xbf16>
    %9 = vector.shape_cast %8 : vector<16x16x64xbf16> to vector<256x64xbf16>
    %c64 = arith.constant 64 : index
    %c0_9 = arith.constant 0 : index
    %10 = vector.load %arg2[%c64, %c0_9] : memref<576x64xbf16, #tpu.memory_space<vmem>>, vector<64x64xbf16>
    %cst_10 = arith.constant dense<0.000000e+00> : vector<256x64xf32>
    %11 = tpu.matmul %9, %10, %cst_10 {dimension_numbers = #tpu.dot_dimension_numbers<[1], [0], [0], [1], [0, 0, 1, 1], [], []>} : vector<256x64xbf16>, vector<64x64xbf16>, vector<256x64xf32> -> vector<256x64xf32>
    %12 = arith.addf %6, %11 : vector<256x64xf32>
    %c0_11 = arith.constant 0 : index
    %c0_12 = arith.constant 0 : index
    %c2 = arith.constant 2 : index
    %c0_13 = arith.constant 0 : index
    %13 = vector.load %arg1[%c0_11, %c0_12, %c2, %c0_13] : memref<1x18x18x64xbf16, #tpu.memory_space<vmem>>, vector<1x16x16x64xbf16>
    %14 = vector.shape_cast %13 : vector<1x16x16x64xbf16> to vector<16x16x64xbf16>
    %15 = vector.shape_cast %14 : vector<16x16x64xbf16> to vector<256x64xbf16>
    %c128 = arith.constant 128 : index
    %c0_14 = arith.constant 0 : index
    %16 = vector.load %arg2[%c128, %c0_14] : memref<576x64xbf16, #tpu.memory_space<vmem>>, vector<64x64xbf16>
    %cst_15 = arith.constant dense<0.000000e+00> : vector<256x64xf32>
    %17 = tpu.matmul %15, %16, %cst_15 {dimension_numbers = #tpu.dot_dimension_numbers<[1], [0], [0], [1], [0, 0, 1, 1], [], []>} : vector<256x64xbf16>, vector<64x64xbf16>, vector<256x64xf32> -> vector<256x64xf32>
    %18 = arith.addf %12, %17 : vector<256x64xf32>
    %c0_16 = arith.constant 0 : index
    %c1_17 = arith.constant 1 : index
    %c0_18 = arith.constant 0 : index
    %c0_19 = arith.constant 0 : index
    %19 = vector.load %arg1[%c0_16, %c1_17, %c0_18, %c0_19] : memref<1x18x18x64xbf16, #tpu.memory_space<vmem>>, vector<1x16x16x64xbf16>
    %20 = vector.shape_cast %19 : vector<1x16x16x64xbf16> to vector<16x16x64xbf16>
    %21 = vector.shape_cast %20 : vector<16x16x64xbf16> to vector<256x64xbf16>
    %c192 = arith.constant 192 : index
    %c0_20 = arith.constant 0 : index
    %22 = vector.load %arg2[%c192, %c0_20] : memref<576x64xbf16, #tpu.memory_space<vmem>>, vector<64x64xbf16>
    %cst_21 = arith.constant dense<0.000000e+00> : vector<256x64xf32>
    %23 = tpu.matmul %21, %22, %cst_21 {dimension_numbers = #tpu.dot_dimension_numbers<[1], [0], [0], [1], [0, 0, 1, 1], [], []>} : vector<256x64xbf16>, vector<64x64xbf16>, vector<256x64xf32> -> vector<256x64xf32>
    %24 = arith.addf %18, %23 : vector<256x64xf32>
    %c0_22 = arith.constant 0 : index
    %c1_23 = arith.constant 1 : index
    %c1_24 = arith.constant 1 : index
    %c0_25 = arith.constant 0 : index
    %25 = vector.load %arg1[%c0_22, %c1_23, %c1_24, %c0_25] : memref<1x18x18x64xbf16, #tpu.memory_space<vmem>>, vector<1x16x16x64xbf16>
    %26 = vector.shape_cast %25 : vector<1x16x16x64xbf16> to vector<16x16x64xbf16>
    %27 = vector.shape_cast %26 : vector<16x16x64xbf16> to vector<256x64xbf16>
    %c256 = arith.constant 256 : index
    %c0_26 = arith.constant 0 : index
    %28 = vector.load %arg2[%c256, %c0_26] : memref<576x64xbf16, #tpu.memory_space<vmem>>, vector<64x64xbf16>
    %cst_27 = arith.constant dense<0.000000e+00> : vector<256x64xf32>
    %29 = tpu.matmul %27, %28, %cst_27 {dimension_numbers = #tpu.dot_dimension_numbers<[1], [0], [0], [1], [0, 0, 1, 1], [], []>} : vector<256x64xbf16>, vector<64x64xbf16>, vector<256x64xf32> -> vector<256x64xf32>
    %30 = arith.addf %24, %29 : vector<256x64xf32>
    %c0_28 = arith.constant 0 : index
    %c1_29 = arith.constant 1 : index
    %c2_30 = arith.constant 2 : index
    %c0_31 = arith.constant 0 : index
    %31 = vector.load %arg1[%c0_28, %c1_29, %c2_30, %c0_31] : memref<1x18x18x64xbf16, #tpu.memory_space<vmem>>, vector<1x16x16x64xbf16>
    %32 = vector.shape_cast %31 : vector<1x16x16x64xbf16> to vector<16x16x64xbf16>
    %33 = vector.shape_cast %32 : vector<16x16x64xbf16> to vector<256x64xbf16>
    %c320 = arith.constant 320 : index
    %c0_32 = arith.constant 0 : index
    %34 = vector.load %arg2[%c320, %c0_32] : memref<576x64xbf16, #tpu.memory_space<vmem>>, vector<64x64xbf16>
    %cst_33 = arith.constant dense<0.000000e+00> : vector<256x64xf32>
    %35 = tpu.matmul %33, %34, %cst_33 {dimension_numbers = #tpu.dot_dimension_numbers<[1], [0], [0], [1], [0, 0, 1, 1], [], []>} : vector<256x64xbf16>, vector<64x64xbf16>, vector<256x64xf32> -> vector<256x64xf32>
    %36 = arith.addf %30, %35 : vector<256x64xf32>
    %c0_34 = arith.constant 0 : index
    %c2_35 = arith.constant 2 : index
    %c0_36 = arith.constant 0 : index
    %c0_37 = arith.constant 0 : index
    %37 = vector.load %arg1[%c0_34, %c2_35, %c0_36, %c0_37] : memref<1x18x18x64xbf16, #tpu.memory_space<vmem>>, vector<1x16x16x64xbf16>
    %38 = vector.shape_cast %37 : vector<1x16x16x64xbf16> to vector<16x16x64xbf16>
    %39 = vector.shape_cast %38 : vector<16x16x64xbf16> to vector<256x64xbf16>
    %c384 = arith.constant 384 : index
    %c0_38 = arith.constant 0 : index
    %40 = vector.load %arg2[%c384, %c0_38] : memref<576x64xbf16, #tpu.memory_space<vmem>>, vector<64x64xbf16>
    %cst_39 = arith.constant dense<0.000000e+00> : vector<256x64xf32>
    %41 = tpu.matmul %39, %40, %cst_39 {dimension_numbers = #tpu.dot_dimension_numbers<[1], [0], [0], [1], [0, 0, 1, 1], [], []>} : vector<256x64xbf16>, vector<64x64xbf16>, vector<256x64xf32> -> vector<256x64xf32>
    %42 = arith.addf %36, %41 : vector<256x64xf32>
    %c0_40 = arith.constant 0 : index
    %c2_41 = arith.constant 2 : index
    %c1_42 = arith.constant 1 : index
    %c0_43 = arith.constant 0 : index
    %43 = vector.load %arg1[%c0_40, %c2_41, %c1_42, %c0_43] : memref<1x18x18x64xbf16, #tpu.memory_space<vmem>>, vector<1x16x16x64xbf16>
    %44 = vector.shape_cast %43 : vector<1x16x16x64xbf16> to vector<16x16x64xbf16>
    %45 = vector.shape_cast %44 : vector<16x16x64xbf16> to vector<256x64xbf16>
    %c448 = arith.constant 448 : index
    %c0_44 = arith.constant 0 : index
    %46 = vector.load %arg2[%c448, %c0_44] : memref<576x64xbf16, #tpu.memory_space<vmem>>, vector<64x64xbf16>
    %cst_45 = arith.constant dense<0.000000e+00> : vector<256x64xf32>
    %47 = tpu.matmul %45, %46, %cst_45 {dimension_numbers = #tpu.dot_dimension_numbers<[1], [0], [0], [1], [0, 0, 1, 1], [], []>} : vector<256x64xbf16>, vector<64x64xbf16>, vector<256x64xf32> -> vector<256x64xf32>
    %48 = arith.addf %42, %47 : vector<256x64xf32>
    %c0_46 = arith.constant 0 : index
    %c2_47 = arith.constant 2 : index
    %c2_48 = arith.constant 2 : index
    %c0_49 = arith.constant 0 : index
    %49 = vector.load %arg1[%c0_46, %c2_47, %c2_48, %c0_49] : memref<1x18x18x64xbf16, #tpu.memory_space<vmem>>, vector<1x16x16x64xbf16>
    %50 = vector.shape_cast %49 : vector<1x16x16x64xbf16> to vector<16x16x64xbf16>
    %51 = vector.shape_cast %50 : vector<16x16x64xbf16> to vector<256x64xbf16>
    %c512 = arith.constant 512 : index
    %c0_50 = arith.constant 0 : index
    %52 = vector.load %arg2[%c512, %c0_50] : memref<576x64xbf16, #tpu.memory_space<vmem>>, vector<64x64xbf16>
    %cst_51 = arith.constant dense<0.000000e+00> : vector<256x64xf32>
    %53 = tpu.matmul %51, %52, %cst_51 {dimension_numbers = #tpu.dot_dimension_numbers<[1], [0], [0], [1], [0, 0, 1, 1], [], []>} : vector<256x64xbf16>, vector<64x64xbf16>, vector<256x64xf32> -> vector<256x64xf32>
    %54 = arith.addf %48, %53 : vector<256x64xf32>
    %c0_52 = arith.constant 0 : index
    %c0_53 = arith.constant 0 : index
    %c0_54 = arith.constant 0 : index
    %55 = vector.load %arg3[%c0_52, %c0_53, %c0_54] : memref<1x256x64xf32, #tpu.memory_space<vmem>>, vector<1x256x64xf32>
    %56 = vector.shape_cast %55 : vector<1x256x64xf32> to vector<256x64xf32>
    %57 = vector.shape_cast %54 : vector<256x64xf32> to vector<1x256x64xf32>
    tpu.vector_store %arg3[%c0_52, %c0_53, %c0_54], %57 {strides = array<i32>} : memref<1x256x64xf32, #tpu.memory_space<vmem>>, vector<1x256x64xf32>,
    %cst_55 = arith.constant dense<0.000000e+00> : vector<64xf32>
    %58 = vector.multi_reduction <add>, %54, %cst_55 [0] : vector<256x64xf32> to vector<64xf32>
    %59 = vector.shape_cast %58 : vector<64xf32> to vector<1x64xf32>
    %60 = arith.mulf %54, %54 : vector<256x64xf32>
    %cst_56 = arith.constant dense<0.000000e+00> : vector<64xf32>
    %61 = vector.multi_reduction <add>, %60, %cst_56 [0] : vector<256x64xf32> to vector<64xf32>
    %62 = vector.shape_cast %61 : vector<64xf32> to vector<1x64xf32>
    %63 = tpu.concatenate %59, %62 in 0 : vector<1x64xf32>, vector<1x64xf32> -> vector<2x64xf32>
    %c0_57 = arith.constant 0 : index
    %c0_58 = arith.constant 0 : index
    %c0_59 = arith.constant 0 : index
    %64 = vector.load %arg4[%c0_57, %c0_58, %c0_59] : memref<1x2x64xf32, #tpu.memory_space<vmem>>, vector<1x2x64xf32>
    %65 = vector.shape_cast %64 : vector<1x2x64xf32> to vector<2x64xf32>
    %66 = vector.shape_cast %63 : vector<2x64xf32> to vector<1x2x64xf32>
    tpu.vector_store %arg4[%c0_57, %c0_58, %c0_59], %66 {strides = array<i32>} : memref<1x2x64xf32, #tpu.memory_space<vmem>>, vector<1x2x64xf32>,
    return
  }
  func.func @transform_0(%arg0: i32) -> (i32, i32, i32, i32) {
    %c0_i32 = arith.constant 0 : i32
    %c0_i32_0 = arith.constant 0 : i32
    %c0_i32_1 = arith.constant 0 : i32
    %c0_i32_2 = arith.constant 0 : i32
    return %arg0, %c0_i32, %c0_i32_0, %c0_i32_1 : i32, i32, i32, i32
  }
  func.func @transform_1(%arg0: i32) -> (i32, i32) {
    %c0_i32 = arith.constant 0 : i32
    %c0_i32_0 = arith.constant 0 : i32
    %c0_i32_1 = arith.constant 0 : i32
    return %c0_i32, %c0_i32_0 : i32, i32
  }
  func.func @transform_2(%arg0: i32) -> (i32, i32, i32) {
    %c0_i32 = arith.constant 0 : i32
    %c0_i32_0 = arith.constant 0 : i32
    %c0_i32_1 = arith.constant 0 : i32
    return %arg0, %c0_i32, %c0_i32_0 : i32, i32, i32
  }
  func.func @transform_3(%arg0: i32) -> (i32, i32, i32) {
    %c0_i32 = arith.constant 0 : i32
    %c0_i32_0 = arith.constant 0 : i32
    %c0_i32_1 = arith.constant 0 : i32
    return %arg0, %c0_i32, %c0_i32_0 : i32, i32, i32
  }
}

module attributes {stable_mosaic.version = 11 : i64} {
  func.func @_bn_prelu_kernel(%arg0: i32, %arg1: memref<1x128x128xf32, #tpu.memory_space<vmem>>, %arg2: memref<1x128xf32, #tpu.memory_space<vmem>>, %arg3: memref<1x128xf32, #tpu.memory_space<vmem>>, %arg4: memref<1xf32, #tpu.memory_space<smem>>, %arg5: memref<1x128x128xbf16, #tpu.memory_space<vmem>>) attributes {dimension_semantics = [#tpu.dimension_semantics<parallel>], iteration_bounds = array<i64: 2>, scalar_prefetch = 0 : i64, scratch_operands = 0 : i64, tpu.core_type = #tpu.core_type<tc>, window_params = [{transform_indices = @transform_0, window_bounds = array<i64: 1, 128, 128>}, {pipeline_mode = #tpu.pipeline_mode<synchronous>, transform_indices = @transform_1, window_bounds = array<i64: 1, 128>}, {pipeline_mode = #tpu.pipeline_mode<synchronous>, transform_indices = @transform_2, window_bounds = array<i64: 1, 128>}, {transform_indices = @transform_3, window_bounds = array<i64: 1>}, {transform_indices = @transform_4, window_bounds = array<i64: 1, 128, 128>}]} {
    %c0 = arith.constant 0 : index
    %c0_0 = arith.constant 0 : index
    %c0_1 = arith.constant 0 : index
    %0 = vector.load %arg1[%c0, %c0_0, %c0_1] : memref<1x128x128xf32, #tpu.memory_space<vmem>>, vector<1x128x128xf32>
    %1 = vector.shape_cast %0 : vector<1x128x128xf32> to vector<128x128xf32>
    %c0_2 = arith.constant 0 : index
    %c0_3 = arith.constant 0 : index
    %2 = vector.load %arg2[%c0_2, %c0_3] : memref<1x128xf32, #tpu.memory_space<vmem>>, vector<1x128xf32>
    %3 = vector.broadcast %2 : vector<1x128xf32> to vector<128x128xf32>
    %4 = arith.mulf %1, %3 : vector<128x128xf32>
    %c0_4 = arith.constant 0 : index
    %c0_5 = arith.constant 0 : index
    %5 = vector.load %arg3[%c0_4, %c0_5] : memref<1x128xf32, #tpu.memory_space<vmem>>, vector<1x128xf32>
    %6 = vector.broadcast %5 : vector<1x128xf32> to vector<128x128xf32>
    %7 = arith.addf %4, %6 : vector<128x128xf32>
    %c0_6 = arith.constant 0 : index
    %8 = memref.load %arg4[%c0_6] : memref<1xf32, #tpu.memory_space<smem>>
    %cst = arith.constant 0.000000e+00 : f32
    %9 = vector.broadcast %cst : f32 to vector<128x128xf32>
    %10 = arith.cmpf oge, %7, %9 : vector<128x128xf32>
    %11 = vector.broadcast %8 : f32 to vector<128x128xf32>
    %12 = arith.mulf %11, %7 : vector<128x128xf32>
    %13 = arith.select %10, %7, %12 : vector<128x128xi1>, vector<128x128xf32>
    %14 = arith.truncf %13 : vector<128x128xf32> to vector<128x128xbf16>
    %c0_7 = arith.constant 0 : index
    %c0_8 = arith.constant 0 : index
    %c0_9 = arith.constant 0 : index
    %15 = vector.load %arg5[%c0_7, %c0_8, %c0_9] : memref<1x128x128xbf16, #tpu.memory_space<vmem>>, vector<1x128x128xbf16>
    %16 = vector.shape_cast %15 : vector<1x128x128xbf16> to vector<128x128xbf16>
    %17 = vector.shape_cast %14 : vector<128x128xbf16> to vector<1x128x128xbf16>
    tpu.vector_store %arg5[%c0_7, %c0_8, %c0_9], %17 {strides = array<i32>} : memref<1x128x128xbf16, #tpu.memory_space<vmem>>, vector<1x128x128xbf16>,
    return
  }
  func.func @transform_0(%arg0: i32) -> (i32, i32, i32) {
    %c0_i32 = arith.constant 0 : i32
    %c0_i32_0 = arith.constant 0 : i32
    %c0_i32_1 = arith.constant 0 : i32
    return %arg0, %c0_i32, %c0_i32_0 : i32, i32, i32
  }
  func.func @transform_1(%arg0: i32) -> (i32, i32) {
    %c0_i32 = arith.constant 0 : i32
    %c0_i32_0 = arith.constant 0 : i32
    %c0_i32_1 = arith.constant 0 : i32
    return %c0_i32, %c0_i32_0 : i32, i32
  }
  func.func @transform_2(%arg0: i32) -> (i32, i32) {
    %c0_i32 = arith.constant 0 : i32
    %c0_i32_0 = arith.constant 0 : i32
    %c0_i32_1 = arith.constant 0 : i32
    return %c0_i32, %c0_i32_0 : i32, i32
  }
  func.func @transform_3(%arg0: i32) -> i32 {
    %c0_i32 = arith.constant 0 : i32
    %c0_i32_0 = arith.constant 0 : i32
    return %c0_i32 : i32
  }
  func.func @transform_4(%arg0: i32) -> (i32, i32, i32) {
    %c0_i32 = arith.constant 0 : i32
    %c0_i32_0 = arith.constant 0 : i32
    %c0_i32_1 = arith.constant 0 : i32
    return %arg0, %c0_i32, %c0_i32_0 : i32, i32, i32
  }
}

module attributes {stable_mosaic.version = 11 : i64} {
  func.func @_bn_add_kernel(%arg0: i32, %arg1: memref<1x128x128xf32, #tpu.memory_space<vmem>>, %arg2: memref<1x128x128xf32, #tpu.memory_space<vmem>>, %arg3: memref<1x128xf32, #tpu.memory_space<vmem>>, %arg4: memref<1x128xf32, #tpu.memory_space<vmem>>, %arg5: memref<1x128x128xf32, #tpu.memory_space<vmem>>) attributes {dimension_semantics = [#tpu.dimension_semantics<parallel>], iteration_bounds = array<i64: 2>, scalar_prefetch = 0 : i64, scratch_operands = 0 : i64, tpu.core_type = #tpu.core_type<tc>, window_params = [{transform_indices = @transform_0, window_bounds = array<i64: 1, 128, 128>}, {transform_indices = @transform_1, window_bounds = array<i64: 1, 128, 128>}, {pipeline_mode = #tpu.pipeline_mode<synchronous>, transform_indices = @transform_2, window_bounds = array<i64: 1, 128>}, {pipeline_mode = #tpu.pipeline_mode<synchronous>, transform_indices = @transform_3, window_bounds = array<i64: 1, 128>}, {transform_indices = @transform_4, window_bounds = array<i64: 1, 128, 128>}]} {
    %c0 = arith.constant 0 : index
    %c0_0 = arith.constant 0 : index
    %c0_1 = arith.constant 0 : index
    %0 = vector.load %arg1[%c0, %c0_0, %c0_1] : memref<1x128x128xf32, #tpu.memory_space<vmem>>, vector<1x128x128xf32>
    %1 = vector.shape_cast %0 : vector<1x128x128xf32> to vector<128x128xf32>
    %c0_2 = arith.constant 0 : index
    %c0_3 = arith.constant 0 : index
    %2 = vector.load %arg3[%c0_2, %c0_3] : memref<1x128xf32, #tpu.memory_space<vmem>>, vector<1x128xf32>
    %3 = vector.broadcast %2 : vector<1x128xf32> to vector<128x128xf32>
    %4 = arith.mulf %1, %3 : vector<128x128xf32>
    %c0_4 = arith.constant 0 : index
    %c0_5 = arith.constant 0 : index
    %5 = vector.load %arg4[%c0_4, %c0_5] : memref<1x128xf32, #tpu.memory_space<vmem>>, vector<1x128xf32>
    %6 = vector.broadcast %5 : vector<1x128xf32> to vector<128x128xf32>
    %7 = arith.addf %4, %6 : vector<128x128xf32>
    %c0_6 = arith.constant 0 : index
    %c0_7 = arith.constant 0 : index
    %c0_8 = arith.constant 0 : index
    %8 = vector.load %arg2[%c0_6, %c0_7, %c0_8] : memref<1x128x128xf32, #tpu.memory_space<vmem>>, vector<1x128x128xf32>
    %9 = vector.shape_cast %8 : vector<1x128x128xf32> to vector<128x128xf32>
    %10 = arith.addf %7, %9 : vector<128x128xf32>
    %c0_9 = arith.constant 0 : index
    %c0_10 = arith.constant 0 : index
    %c0_11 = arith.constant 0 : index
    %11 = vector.load %arg5[%c0_9, %c0_10, %c0_11] : memref<1x128x128xf32, #tpu.memory_space<vmem>>, vector<1x128x128xf32>
    %12 = vector.shape_cast %11 : vector<1x128x128xf32> to vector<128x128xf32>
    %13 = vector.shape_cast %10 : vector<128x128xf32> to vector<1x128x128xf32>
    tpu.vector_store %arg5[%c0_9, %c0_10, %c0_11], %13 {strides = array<i32>} : memref<1x128x128xf32, #tpu.memory_space<vmem>>, vector<1x128x128xf32>,
    return
  }
  func.func @transform_0(%arg0: i32) -> (i32, i32, i32) {
    %c0_i32 = arith.constant 0 : i32
    %c0_i32_0 = arith.constant 0 : i32
    %c0_i32_1 = arith.constant 0 : i32
    return %arg0, %c0_i32, %c0_i32_0 : i32, i32, i32
  }
  func.func @transform_1(%arg0: i32) -> (i32, i32, i32) {
    %c0_i32 = arith.constant 0 : i32
    %c0_i32_0 = arith.constant 0 : i32
    %c0_i32_1 = arith.constant 0 : i32
    return %arg0, %c0_i32, %c0_i32_0 : i32, i32, i32
  }
  func.func @transform_2(%arg0: i32) -> (i32, i32) {
    %c0_i32 = arith.constant 0 : i32
    %c0_i32_0 = arith.constant 0 : i32
    %c0_i32_1 = arith.constant 0 : i32
    return %c0_i32, %c0_i32_0 : i32, i32
  }
  func.func @transform_3(%arg0: i32) -> (i32, i32) {
    %c0_i32 = arith.constant 0 : i32
    %c0_i32_0 = arith.constant 0 : i32
    %c0_i32_1 = arith.constant 0 : i32
    return %c0_i32, %c0_i32_0 : i32, i32
  }
  func.func @transform_4(%arg0: i32) -> (i32, i32, i32) {
    %c0_i32 = arith.constant 0 : i32
    %c0_i32_0 = arith.constant 0 : i32
    %c0_i32_1 = arith.constant 0 : i32
    return %arg0, %c0_i32, %c0_i32_0 : i32, i32, i32
  }
}

</mosaic_0001>

<llo_original>
// kernel: residual_block_forward.5
$region0: #{residual_block_forward.5}
  #allocation0 [shape = 'u32[]', space=smem, size = 0x4, offset = 0x4, fixed_abs, tag = 'smem constant byte address 0x4 - core index']
  #allocation1 [shape = 'u32[72,128]{1,0:T(1,128)}', space=vmem, size = 0x9000, scoped, tag = 'internal scratch']
  #allocation2 [shape = 'f32[1]{0:T(128)S(6)}', space=smem, size = 0x200, scoped, tag = 'scoped memory for residual_block_forward.5']
  %s0 = inlined_call_operand.vmem [shape: f32[2,128,128], index: 0, kind: input, shape index: {}]
  %s1 = inlined_call_operand.vmem [shape: f32[1,128], index: 1, kind: input, shape index: {}]
  %s2 = inlined_call_operand.vmem [shape: f32[1,128], index: 2, kind: input, shape index: {}]
  %s3 = inlined_call_operand.<no memory space> [shape: f32[1], index: 3, kind: input, shape index: {}]
  %s4 = inlined_call_operand.vmem [shape: bf16[2,128,128], index: 4, kind: output, shape index: {}]
  %s5 = sld [smem:[#allocation0]]
  $region49: #{residual_block_forward.5} parent=0
    _
  %s7 = ssub.s32 1, %s5
  %s8 = scalar_select 0, %s7, %s5
  %9 = sst [smem:[#allocation2]] %s3
  loop: start=0, step=1, limit=4
  $region2: #{residual_block_forward.5} parent=0 // loop_pre_header
    _
  $region3: #{residual_block_forward.5} parent=0 // loop_header
    %s11 = sphi 0, %s15
    %p12 = scmp.ge.s32.totalorder %s11, 4
    %s21 = sphi 0, %s23
    %s24 = sphi 0, %s21
    %s25 = sphi 0, %s24
    %s41 = sphi 0, %s25
    %s45 = sphi 0, %s45
    %s47 = sphi 0, %s45
    %s48 = sphi 0, %s47
    %s62 = sphi 0, %s48
    %s66 = sphi 0, %s66
    %s68 = sphi 0, %s66
    %s69 = sphi 0, %s68
    %s83 = sphi 0, %s69
    %s87 = sphi 0, %s87
    %s89 = sphi 0, %s87
    %s90 = sphi 0, %s89
    %s104 = sphi 0, %s90
    %s110 = sphi 0, %s112
    %s113 = sphi 0, %s110
    %s114 = sphi 0, %s113
    %s130 = sphi 0, %s114
  $region4: #{residual_block_forward.5} parent=0 // loop_header_branch
    %14 = sbr.rel (%p12) target = $region8
  $region5: #{residual_block_forward.5} parent=0 // loop_body
    %s16 = ssub.s32 %s11, 1
    %s17 = ssub.s32 %s11, 2
    %s18 = sadd.s32 %s11, 1
    %s19 = ssub.s32 %s11, %s18
    %p20 = scmp.eq.s32.totalorder %s19, 0
    %s22 = sadd.s32 %s21, 1
    %s23 = scalar_select %p20, %s21, %s22
    %p26 = pneg %p20
    %p27 = scmp.eq.s32.totalorder %s11, 1
    %p28 = por %p26, %p27
    %p29 = scmp.ne.s32.totalorder %s21, %s24
    %p30 = scmp.eq.s32.totalorder %s11, 0
    %p31 = por %p29, %p30
    %p32 = scmp.ne.s32.totalorder %s21, %s24
    %p33 = scmp.eq.s32.totalorder %s16, 1
    %p34 = por %p32, %p33
    %p35 = scmp.ne.s32.totalorder %s24, %s25
    %p36 = scmp.eq.s32.totalorder %s16, 0
    %p37 = por %p35, %p36
    %p38 = scmp.ne.s32.totalorder %s24, %s25
    %p39 = scmp.eq.s32.totalorder %s17, 1
    %p40 = por %p38, %p39
    %p42 = scmp.ne.s32.totalorder %s25, %s41
    %p43 = scmp.eq.s32.totalorder %s17, 0
    %p44 = por %p42, %p43
    %s46 = sadd.s32 %s45, 1
    %p49 = scmp.eq.s32.totalorder %s11, 1
    %p50 = scmp.ne.s32.totalorder %s45, %s47
    %p51 = scmp.eq.s32.totalorder %s11, 0
    %p52 = por %p50, %p51
    %p53 = scmp.ne.s32.totalorder %s45, %s47
    %p54 = scmp.eq.s32.totalorder %s16, 1
    %p55 = por %p53, %p54
    %p56 = scmp.ne.s32.totalorder %s47, %s48
    %p57 = scmp.eq.s32.totalorder %s16, 0
    %p58 = por %p56, %p57
    %p59 = scmp.ne.s32.totalorder %s47, %s48
    %p60 = scmp.eq.s32.totalorder %s17, 1
    %p61 = por %p59, %p60
    %p63 = scmp.ne.s32.totalorder %s48, %s62
    %p64 = scmp.eq.s32.totalorder %s17, 0
    %p65 = por %p63, %p64
    %s67 = sadd.s32 %s66, 1
    %p70 = scmp.eq.s32.totalorder %s11, 1
    %p71 = scmp.ne.s32.totalorder %s66, %s68
    %p72 = scmp.eq.s32.totalorder %s11, 0
    %p73 = por %p71, %p72
    %p74 = scmp.ne.s32.totalorder %s66, %s68
    %p75 = scmp.eq.s32.totalorder %s16, 1
    %p76 = por %p74, %p75
    %p77 = scmp.ne.s32.totalorder %s68, %s69
    %p78 = scmp.eq.s32.totalorder %s16, 0
    %p79 = por %p77, %p78
    %p80 = scmp.ne.s32.totalorder %s68, %s69
    %p81 = scmp.eq.s32.totalorder %s17, 1
    %p82 = por %p80, %p81
    %p84 = scmp.ne.s32.totalorder %s69, %s83
    %p85 = scmp.eq.s32.totalorder %s17, 0
    %p86 = por %p84, %p85
    %s88 = sadd.s32 %s87, 1
    %p91 = scmp.eq.s32.totalorder %s11, 1
    %p92 = scmp.ne.s32.totalorder %s87, %s89
    %p93 = scmp.eq.s32.totalorder %s11, 0
    %p94 = por %p92, %p93
    %p95 = scmp.ne.s32.totalorder %s87, %s89
    %p96 = scmp.eq.s32.totalorder %s16, 1
    %p97 = por %p95, %p96
    %p98 = scmp.ne.s32.totalorder %s89, %s90
    %p99 = scmp.eq.s32.totalorder %s16, 0
    %p100 = por %p98, %p99
    %p101 = scmp.ne.s32.totalorder %s89, %s90
    %p102 = scmp.eq.s32.totalorder %s17, 1
    %p103 = por %p101, %p102
    %p105 = scmp.ne.s32.totalorder %s90, %s104
    %p106 = scmp.eq.s32.totalorder %s17, 0
    %p107 = por %p105, %p106
    %s108 = ssub.s32 %s11, %s18
    %p109 = scmp.eq.s32.totalorder %s108, 0
    %s111 = sadd.s32 %s110, 1
    %s112 = scalar_select %p109, %s110, %s111
    %p115 = pneg %p109
    %p116 = scmp.eq.s32.totalorder %s11, 1
    %p117 = por %p115, %p116
    %p118 = scmp.ne.s32.totalorder %s110, %s113
    %p119 = scmp.eq.s32.totalorder %s11, 0
    %p120 = por %p118, %p119
    %p121 = scmp.ne.s32.totalorder %s110, %s113
    %p122 = scmp.eq.s32.totalorder %s16, 1
    %p123 = por %p121, %p122
    %p124 = scmp.ne.s32.totalorder %s113, %s114
    %p125 = scmp.eq.s32.totalorder %s16, 0
    %p126 = por %p124, %p125
    %p127 = scmp.ne.s32.totalorder %s113, %s114
    %p128 = scmp.eq.s32.totalorder %s17, 1
    %p129 = por %p127, %p128
    %p131 = scmp.ne.s32.totalorder %s114, %s130
    %p132 = scmp.eq.s32.totalorder %s17, 0
    %p133 = por %p131, %p132
    %p134 = scmp.le.s32.totalorder 1, %s11
    %p135 = scmp.lt.s32.totalorder %s11, 3
    %p136 = pnand %p134, %p135
    %p137 = pneg %p136
    // Predicated region
    $region9: #{residual_block_forward.5} parent=5 // pred_check
      _
    $region10: #{residual_block_forward.5} parent=5 // pred_check_branch
      %139 = sbr.rel (%p136) target = $region12
    $region11: #{residual_block_forward.5} parent=5 // pred_region
      %s140 = ssub.s32 %s11, 1
      // Predicated region
      $region13: #{residual_block_forward.5} parent=11 // pred_check
        %p141 = pneg %p58
      $region14: #{residual_block_forward.5} parent=11 // pred_check_branch
        %143 = sbr.rel (%p141) target = $region16
      $region15: #{residual_block_forward.5} parent=11 // pred_region
        _
      $region16: #{residual_block_forward.5} parent=11 // pred_fallthru
        _
      // Predicated region
      $region17: #{residual_block_forward.5} parent=11 // pred_check
        %p144 = pneg %p79
      $region18: #{residual_block_forward.5} parent=11 // pred_check_branch
        %146 = sbr.rel (%p144) target = $region20
      $region19: #{residual_block_forward.5} parent=11 // pred_region
        _
      $region20: #{residual_block_forward.5} parent=11 // pred_fallthru
        _
      // Predicated region
      $region21: #{residual_block_forward.5} parent=11 // pred_check
        %p147 = pneg %p100
      $region22: #{residual_block_forward.5} parent=11 // pred_check_branch
        %149 = sbr.rel (%p147) target = $region24
      $region23: #{residual_block_forward.5} parent=11 // pred_region
        _
      $region24: #{residual_block_forward.5} parent=11 // pred_fallthru
        _
    $region12: #{residual_block_forward.5} parent=5 // pred_fallthru
      _
    %p150 = scmp.lt.s32.totalorder %s11, 2
    // Predicated region
    $region25: #{residual_block_forward.5} parent=5 // pred_check
      %p151 = pneg %p150
    $region26: #{residual_block_forward.5} parent=5 // pred_check_branch
      %153 = sbr.rel (%p151) target = $region28
    $region27: #{residual_block_forward.5} parent=5 // pred_region
      // Predicated region
      $region29: #{residual_block_forward.5} parent=27 // pred_check
        %p154 = pneg %p31
      $region30: #{residual_block_forward.5} parent=27 // pred_check_branch
        %156 = sbr.rel (%p154) target = $region32
      $region31: #{residual_block_forward.5} parent=27 // pred_region
        %p157 = scmp.lt.s32.totalorder %s11, 1
        %s158 = scalar_select %p157, %s11, 1
        %s159 = smul.addr %s158, 16
        %s160 = smul.addr %s159, 8
        %s161 = scalar_lea.vmem %s0, %s160
      $region32: #{residual_block_forward.5} parent=27 // pred_fallthru
        _
    $region28: #{residual_block_forward.5} parent=5 // pred_fallthru
      _
    %p162 = scmp.le.s32.totalorder 1, %s11
    %p163 = scmp.lt.s32.totalorder %s11, 3
    %p164 = pnand %p162, %p163
    %p165 = pneg %p164
    // Predicated region
    $region33: #{residual_block_forward.5} parent=5 // pred_check
      _
    $region34: #{residual_block_forward.5} parent=5 // pred_check_branch
      %167 = sbr.rel (%p164) target = $region36
    $region35: #{residual_block_forward.5} parent=5 // pred_region
      %s168 = ssub.s32 %s11, 1
      %p169 = scmp.lt.s32.totalorder %s16, 1
      %s170 = scalar_select %p169, %s16, 1
      %s171 = smul.addr %s170, 16
      %s172 = smul.addr %s171, 8
      %s173 = scalar_lea.vmem %s0, %s172
      %p174 = pneg %p37
      %p175 = pneg %p34
      %p176 = pneg %p58
      %p177 = pneg %p55
      %p178 = pneg %p79
      %p179 = pneg %p76
      %p180 = pneg %p100
      %p181 = pneg %p97
      %p182 = pneg %p126
      %p183 = pneg %p123
      %p184 = scmp.lt.s32.totalorder %s16, 1
      %s185 = scalar_select %p184, %s16, 1
      %s186 = smul.addr %s185, 16
      %s187 = smul.addr %s186, 4
      %s188 = scalar_lea.vmem %s4, %s187
      %p189 = scmp.lt.s32.totalorder %s16, 1
      %s190 = scalar_select %p189, %s16, 1
      %s191 = smul.addr %s190, 16
      %s192 = smul.addr %s191, 8
      %s193 = scalar_lea.vmem %s0, %s192
      %p194 = scmp.lt.s32.totalorder %s16, 1
      %s195 = scalar_select %p194, %s16, 1
      %s196 = smul.addr %s195, 16
      %s197 = smul.addr %s196, 4
      %s198 = scalar_lea.vmem %s4, %s197
      %v199 = vld [vmem:[%s193] sm:$0xff]
      %v200 = vld [vmem:[%s193 + $0x8] sm:$0xff]
      %v201 = vld [vmem:[%s193 + $0x10] sm:$0xff]
      %v202 = vld [vmem:[%s193 + $0x18] sm:$0xff]
      %v203 = vld [vmem:[%s193 + $0x20] sm:$0xff]
      %v204 = vld [vmem:[%s193 + $0x28] sm:$0xff]
      %v205 = vld [vmem:[%s193 + $0x30] sm:$0xff]
      %v206 = vld [vmem:[%s193 + $0x38] sm:$0xff]
      %v207 = vld [vmem:[%s193 + $0x40] sm:$0xff]
      %v208 = vld [vmem:[%s193 + $0x48] sm:$0xff]
      %v209 = vld [vmem:[%s193 + $0x50] sm:$0xff]
      %v210 = vld [vmem:[%s193 + $0x58] sm:$0xff]
      %v211 = vld [vmem:[%s193 + $0x60] sm:$0xff]
      %v212 = vld [vmem:[%s193 + $0x68] sm:$0xff]
      %v213 = vld [vmem:[%s193 + $0x70] sm:$0xff]
      %v214 = vld [vmem:[%s193 + $0x78] sm:$0xff]
      %v215 = vld [vmem:[%s1] sm:$0x1]
      %v217 = vperm.slane %v215, 0
      %v219 = vmul.f32 %v199, %v217
      %v220 = vmul.f32 %v200, %v217
      %v221 = vmul.f32 %v201, %v217
      %v222 = vmul.f32 %v202, %v217
      %v223 = vmul.f32 %v203, %v217
      %v224 = vmul.f32 %v204, %v217
      %v225 = vmul.f32 %v205, %v217
      %v226 = vmul.f32 %v206, %v217
      %v227 = vmul.f32 %v207, %v217
      %v228 = vmul.f32 %v208, %v217
      %v229 = vmul.f32 %v209, %v217
      %v230 = vmul.f32 %v210, %v217
      %v231 = vmul.f32 %v211, %v217
      %v232 = vmul.f32 %v212, %v217
      %v233 = vmul.f32 %v213, %v217
      %v234 = vmul.f32 %v214, %v217
      %v235 = vld [vmem:[%s2] sm:$0x1]
      %v237 = vperm.slane %v235, 0
      %v239 = vadd.f32 %v219, %v237
      %v240 = vadd.f32 %v220, %v237
      %v241 = vadd.f32 %v221, %v237
      %v242 = vadd.f32 %v222, %v237
      %v243 = vadd.f32 %v223, %v237
      %v244 = vadd.f32 %v224, %v237
      %v245 = vadd.f32 %v225, %v237
      %v246 = vadd.f32 %v226, %v237
      %v247 = vadd.f32 %v227, %v237
      %v248 = vadd.f32 %v228, %v237
      %v249 = vadd.f32 %v229, %v237
      %v250 = vadd.f32 %v230, %v237
      %v251 = vadd.f32 %v231, %v237
      %v252 = vadd.f32 %v232, %v237
      %v253 = vadd.f32 %v233, %v237
      %v254 = vadd.f32 %v234, %v237
      %s255 = sld [smem:[#allocation2]]
      %vm256 = vcmp.ge.f32.partialorder %v239, 0.0
      %vm257 = vcmp.ge.f32.partialorder %v240, 0.0
      %vm258 = vcmp.ge.f32.partialorder %v241, 0.0
      %vm259 = vcmp.ge.f32.partialorder %v242, 0.0
      %vm260 = vcmp.ge.f32.partialorder %v243, 0.0
      %vm261 = vcmp.ge.f32.partialorder %v244, 0.0
      %vm262 = vcmp.ge.f32.partialorder %v245, 0.0
      %vm263 = vcmp.ge.f32.partialorder %v246, 0.0
      %vm264 = vcmp.ge.f32.partialorder %v247, 0.0
      %vm265 = vcmp.ge.f32.partialorder %v248, 0.0
      %vm266 = vcmp.ge.f32.partialorder %v249, 0.0
      %vm267 = vcmp.ge.f32.partialorder %v250, 0.0
      %vm268 = vcmp.ge.f32.partialorder %v251, 0.0
      %vm269 = vcmp.ge.f32.partialorder %v252, 0.0
      %vm270 = vcmp.ge.f32.partialorder %v253, 0.0
      %vm271 = vcmp.ge.f32.partialorder %v254, 0.0
      %v272 = vstv %s255
      %v273 = vmul.f32 %v272, %v239
      %v274 = vmul.f32 %v272, %v240
      %v275 = vmul.f32 %v272, %v241
      %v276 = vmul.f32 %v272, %v242
      %v277 = vmul.f32 %v272, %v243
      %v278 = vmul.f32 %v272, %v244
      %v279 = vmul.f32 %v272, %v245
      %v280 = vmul.f32 %v272, %v246
      %v281 = vmul.f32 %v272, %v247
      %v282 = vmul.f32 %v272, %v248
      %v283 = vmul.f32 %v272, %v249
      %v284 = vmul.f32 %v272, %v250
      %v285 = vmul.f32 %v272, %v251
      %v286 = vmul.f32 %v272, %v252
      %v287 = vmul.f32 %v272, %v253
      %v288 = vmul.f32 %v272, %v254
      %v289 = vsel %vm256, %v239, %v273
      %v290 = vsel %vm257, %v240, %v274
      %v291 = vsel %vm258, %v241, %v275
      %v292 = vsel %vm259, %v242, %v276
      %v293 = vsel %vm260, %v243, %v277
      %v294 = vsel %vm261, %v244, %v278
      %v295 = vsel %vm262, %v245, %v279
      %v296 = vsel %vm263, %v246, %v280
      %v297 = vsel %vm264, %v247, %v281
      %v298 = vsel %vm265, %v248, %v282
      %v299 = vsel %vm266, %v249, %v283
      %v300 = vsel %vm267, %v250, %v284
      %v301 = vsel %vm268, %v251, %v285
      %v302 = vsel %vm269, %v252, %v286
      %v303 = vsel %vm270, %v253, %v287
      %v304 = vsel %vm271, %v254, %v288
      %v305 = vpack.c.bf16 %v289, %v289
      %v306 = vpack.c.bf16 %v290, %v290
      %v307 = vpack.c.bf16 %v291, %v291
      %v308 = vpack.c.bf16 %v292, %v292
      %v309 = vpack.c.bf16 %v293, %v293
      %v310 = vpack.c.bf16 %v294, %v294
      %v311 = vpack.c.bf16 %v295, %v295
      %v312 = vpack.c.bf16 %v296, %v296
      %v313 = vpack.c.bf16 %v297, %v297
      %v314 = vpack.c.bf16 %v298, %v298
      %v315 = vpack.c.bf16 %v299, %v299
      %v316 = vpack.c.bf16 %v300, %v300
      %v317 = vpack.c.bf16 %v301, %v301
      %v318 = vpack.c.bf16 %v302, %v302
      %v319 = vpack.c.bf16 %v303, %v303
      %v320 = vpack.c.bf16 %v304, %v304
      %321 = vst [vmem:[%s198] sm:$0xf] %v305
      %322 = vst [vmem:[%s198 + $0x4] sm:$0xf] %v306
      %323 = vst [vmem:[%s198 + $0x8] sm:$0xf] %v307
      %324 = vst [vmem:[%s198 + $0xc] sm:$0xf] %v308
      %325 = vst [vmem:[%s198 + $0x10] sm:$0xf] %v309
      %326 = vst [vmem:[%s198 + $0x14] sm:$0xf] %v310
      %327 = vst [vmem:[%s198 + $0x18] sm:$0xf] %v311
      %328 = vst [vmem:[%s198 + $0x1c] sm:$0xf] %v312
      %329 = vst [vmem:[%s198 + $0x20] sm:$0xf] %v313
      %330 = vst [vmem:[%s198 + $0x24] sm:$0xf] %v314
      %331 = vst [vmem:[%s198 + $0x28] sm:$0xf] %v315
      %332 = vst [vmem:[%s198 + $0x2c] sm:$0xf] %v316
      %333 = vst [vmem:[%s198 + $0x30] sm:$0xf] %v317
      %334 = vst [vmem:[%s198 + $0x34] sm:$0xf] %v318
      %335 = vst [vmem:[%s198 + $0x38] sm:$0xf] %v319
      %336 = vst [vmem:[%s198 + $0x3c] sm:$0xf] %v320
      %p337 = scmp.lt.s32.totalorder %s16, 1
      %s338 = scalar_select %p337, %s16, 1
      %s339 = smul.addr %s338, 16
      %s340 = smul.addr %s339, 4
      %s341 = scalar_lea.vmem %s4, %s340
      // Predicated region
      $region37: #{residual_block_forward.5} parent=35 // pred_check
        %p342 = pneg %p123
      $region38: #{residual_block_forward.5} parent=35 // pred_check_branch
        %344 = sbr.rel (%p342) target = $region40
      $region39: #{residual_block_forward.5} parent=35 // pred_region
        _
      $region40: #{residual_block_forward.5} parent=35 // pred_fallthru
        _
    $region36: #{residual_block_forward.5} parent=5 // pred_fallthru
      _
    %p345 = scmp.le.s32.totalorder 2, %s11
    // Predicated region
    $region41: #{residual_block_forward.5} parent=5 // pred_check
      %p346 = pneg %p345
    $region42: #{residual_block_forward.5} parent=5 // pred_check_branch
      %348 = sbr.rel (%p346) target = $region44
    $region43: #{residual_block_forward.5} parent=5 // pred_region
      %s349 = ssub.s32 %s11, 2
      // Predicated region
      $region45: #{residual_block_forward.5} parent=43 // pred_check
        %p350 = pneg %p129
      $region46: #{residual_block_forward.5} parent=43 // pred_check_branch
        %352 = sbr.rel (%p350) target = $region48
      $region47: #{residual_block_forward.5} parent=43 // pred_region
        %p353 = scmp.lt.s32.totalorder %s17, 1
        %s354 = scalar_select %p353, %s17, 1
        %s355 = smul.addr %s354, 16
        %s356 = smul.addr %s355, 4
        %s357 = scalar_lea.vmem %s4, %s356
      $region48: #{residual_block_forward.5} parent=43 // pred_fallthru
        _
    $region44: #{residual_block_forward.5} parent=5 // pred_fallthru
      _
  $region6: #{residual_block_forward.5} parent=0 // loop_footer
    %s15 = sadd.s32 1, %s11
  $region7: #{residual_block_forward.5} parent=0 // loop_footer_branch
    %10 = sbr.rel target = $region3
  $region8: #{residual_block_forward.5} parent=0 // loop_exit
    _

// kernel: residual_block_forward.7
$region0: #{residual_block_forward.7}
  #allocation0 [shape = 'u32[]', space=smem, size = 0x4, offset = 0x4, fixed_abs, tag = 'smem constant byte address 0x4 - core index']
  #allocation1 [shape = 'u32[72,128]{1,0:T(1,128)}', space=vmem, size = 0x9000, scoped, tag = 'internal scratch']
  %s0 = inlined_call_operand.vmem [shape: f32[2,128,128], index: 0, kind: input, shape index: {}]
  %s1 = inlined_call_operand.vmem [shape: f32[2,128,128], index: 1, kind: input, shape index: {}]
  %s2 = inlined_call_operand.vmem [shape: f32[1,128], index: 2, kind: input, shape index: {}]
  %s3 = inlined_call_operand.vmem [shape: f32[1,128], index: 3, kind: input, shape index: {}]
  %s4 = inlined_call_operand.vmem [shape: f32[2,128,128], index: 4, kind: output, shape index: {}]
  %s5 = sld [smem:[#allocation0]]
  $region49: #{residual_block_forward.7} parent=0
    _
  %s7 = ssub.s32 1, %s5
  %s8 = scalar_select 0, %s7, %s5
  loop: start=0, step=1, limit=4
  $region2: #{residual_block_forward.7} parent=0 // loop_pre_header
    _
  $region3: #{residual_block_forward.7} parent=0 // loop_header
    %s10 = sphi 0, %s14
    %p11 = scmp.ge.s32.totalorder %s10, 4
    %s20 = sphi 0, %s22
    %s23 = sphi 0, %s20
    %s24 = sphi 0, %s23
    %s40 = sphi 0, %s24
    %s46 = sphi 0, %s48
    %s49 = sphi 0, %s46
    %s50 = sphi 0, %s49
    %s66 = sphi 0, %s50
    %s70 = sphi 0, %s70
    %s72 = sphi 0, %s70
    %s73 = sphi 0, %s72
    %s87 = sphi 0, %s73
    %s91 = sphi 0, %s91
    %s93 = sphi 0, %s91
    %s94 = sphi 0, %s93
    %s108 = sphi 0, %s94
    %s114 = sphi 0, %s116
    %s117 = sphi 0, %s114
    %s118 = sphi 0, %s117
    %s134 = sphi 0, %s118
  $region4: #{residual_block_forward.7} parent=0 // loop_header_branch
    %13 = sbr.rel (%p11) target = $region8
  $region5: #{residual_block_forward.7} parent=0 // loop_body
    %s15 = ssub.s32 %s10, 1
    %s16 = ssub.s32 %s10, 2
    %s17 = sadd.s32 %s10, 1
    %s18 = ssub.s32 %s10, %s17
    %p19 = scmp.eq.s32.totalorder %s18, 0
    %s21 = sadd.s32 %s20, 1
    %s22 = scalar_select %p19, %s20, %s21
    %p25 = pneg %p19
    %p26 = scmp.eq.s32.totalorder %s10, 1
    %p27 = por %p25, %p26
    %p28 = scmp.ne.s32.totalorder %s20, %s23
    %p29 = scmp.eq.s32.totalorder %s10, 0
    %p30 = por %p28, %p29
    %p31 = scmp.ne.s32.totalorder %s20, %s23
    %p32 = scmp.eq.s32.totalorder %s15, 1
    %p33 = por %p31, %p32
    %p34 = scmp.ne.s32.totalorder %s23, %s24
    %p35 = scmp.eq.s32.totalorder %s15, 0
    %p36 = por %p34, %p35
    %p37 = scmp.ne.s32.totalorder %s23, %s24
    %p38 = scmp.eq.s32.totalorder %s16, 1
    %p39 = por %p37, %p38
    %p41 = scmp.ne.s32.totalorder %s24, %s40
    %p42 = scmp.eq.s32.totalorder %s16, 0
    %p43 = por %p41, %p42
    %s44 = ssub.s32 %s10, %s17
    %p45 = scmp.eq.s32.totalorder %s44, 0
    %s47 = sadd.s32 %s46, 1
    %s48 = scalar_select %p45, %s46, %s47
    %p51 = pneg %p45
    %p52 = scmp.eq.s32.totalorder %s10, 1
    %p53 = por %p51, %p52
    %p54 = scmp.ne.s32.totalorder %s46, %s49
    %p55 = scmp.eq.s32.totalorder %s10, 0
    %p56 = por %p54, %p55
    %p57 = scmp.ne.s32.totalorder %s46, %s49
    %p58 = scmp.eq.s32.totalorder %s15, 1
    %p59 = por %p57, %p58
    %p60 = scmp.ne.s32.totalorder %s49, %s50
    %p61 = scmp.eq.s32.totalorder %s15, 0
    %p62 = por %p60, %p61
    %p63 = scmp.ne.s32.totalorder %s49, %s50
    %p64 = scmp.eq.s32.totalorder %s16, 1
    %p65 = por %p63, %p64
    %p67 = scmp.ne.s32.totalorder %s50, %s66
    %p68 = scmp.eq.s32.totalorder %s16, 0
    %p69 = por %p67, %p68
    %s71 = sadd.s32 %s70, 1
    %p74 = scmp.eq.s32.totalorder %s10, 1
    %p75 = scmp.ne.s32.totalorder %s70, %s72
    %p76 = scmp.eq.s32.totalorder %s10, 0
    %p77 = por %p75, %p76
    %p78 = scmp.ne.s32.totalorder %s70, %s72
    %p79 = scmp.eq.s32.totalorder %s15, 1
    %p80 = por %p78, %p79
    %p81 = scmp.ne.s32.totalorder %s72, %s73
    %p82 = scmp.eq.s32.totalorder %s15, 0
    %p83 = por %p81, %p82
    %p84 = scmp.ne.s32.totalorder %s72, %s73
    %p85 = scmp.eq.s32.totalorder %s16, 1
    %p86 = por %p84, %p85
    %p88 = scmp.ne.s32.totalorder %s73, %s87
    %p89 = scmp.eq.s32.totalorder %s16, 0
    %p90 = por %p88, %p89
    %s92 = sadd.s32 %s91, 1
    %p95 = scmp.eq.s32.totalorder %s10, 1
    %p96 = scmp.ne.s32.totalorder %s91, %s93
    %p97 = scmp.eq.s32.totalorder %s10, 0
    %p98 = por %p96, %p97
    %p99 = scmp.ne.s32.totalorder %s91, %s93
    %p100 = scmp.eq.s32.totalorder %s15, 1
    %p101 = por %p99, %p100
    %p102 = scmp.ne.s32.totalorder %s93, %s94
    %p103 = scmp.eq.s32.totalorder %s15, 0
    %p104 = por %p102, %p103
    %p105 = scmp.ne.s32.totalorder %s93, %s94
    %p106 = scmp.eq.s32.totalorder %s16, 1
    %p107 = por %p105, %p106
    %p109 = scmp.ne.s32.totalorder %s94, %s108
    %p110 = scmp.eq.s32.totalorder %s16, 0
    %p111 = por %p109, %p110
    %s112 = ssub.s32 %s10, %s17
    %p113 = scmp.eq.s32.totalorder %s112, 0
    %s115 = sadd.s32 %s114, 1
    %s116 = scalar_select %p113, %s114, %s115
    %p119 = pneg %p113
    %p120 = scmp.eq.s32.totalorder %s10, 1
    %p121 = por %p119, %p120
    %p122 = scmp.ne.s32.totalorder %s114, %s117
    %p123 = scmp.eq.s32.totalorder %s10, 0
    %p124 = por %p122, %p123
    %p125 = scmp.ne.s32.totalorder %s114, %s117
    %p126 = scmp.eq.s32.totalorder %s15, 1
    %p127 = por %p125, %p126
    %p128 = scmp.ne.s32.totalorder %s117, %s118
    %p129 = scmp.eq.s32.totalorder %s15, 0
    %p130 = por %p128, %p129
    %p131 = scmp.ne.s32.totalorder %s117, %s118
    %p132 = scmp.eq.s32.totalorder %s16, 1
    %p133 = por %p131, %p132
    %p135 = scmp.ne.s32.totalorder %s118, %s134
    %p136 = scmp.eq.s32.totalorder %s16, 0
    %p137 = por %p135, %p136
    %p138 = scmp.le.s32.totalorder 1, %s10
    %p139 = scmp.lt.s32.totalorder %s10, 3
    %p140 = pnand %p138, %p139
    %p141 = pneg %p140
    // Predicated region
    $region9: #{residual_block_forward.7} parent=5 // pred_check
      _
    $region10: #{residual_block_forward.7} parent=5 // pred_check_branch
      %143 = sbr.rel (%p140) target = $region12
    $region11: #{residual_block_forward.7} parent=5 // pred_region
      %s144 = ssub.s32 %s10, 1
      // Predicated region
      $region13: #{residual_block_forward.7} parent=11 // pred_check
        %p145 = pneg %p83
      $region14: #{residual_block_forward.7} parent=11 // pred_check_branch
        %147 = sbr.rel (%p145) target = $region16
      $region15: #{residual_block_forward.7} parent=11 // pred_region
        _
      $region16: #{residual_block_forward.7} parent=11 // pred_fallthru
        _
      // Predicated region
      $region17: #{residual_block_forward.7} parent=11 // pred_check
        %p148 = pneg %p104
      $region18: #{residual_block_forward.7} parent=11 // pred_check_branch
        %150 = sbr.rel (%p148) target = $region20
      $region19: #{residual_block_forward.7} parent=11 // pred_region
        _
      $region20: #{residual_block_forward.7} parent=11 // pred_fallthru
        _
    $region12: #{residual_block_forward.7} parent=5 // pred_fallthru
      _
    %p151 = scmp.lt.s32.totalorder %s10, 2
    // Predicated region
    $region21: #{residual_block_forward.7} parent=5 // pred_check
      %p152 = pneg %p151
    $region22: #{residual_block_forward.7} parent=5 // pred_check_branch
      %154 = sbr.rel (%p152) target = $region24
    $region23: #{residual_block_forward.7} parent=5 // pred_region
      // Predicated region
      $region25: #{residual_block_forward.7} parent=23 // pred_check
        %p155 = pneg %p30
      $region26: #{residual_block_forward.7} parent=23 // pred_check_branch
        %157 = sbr.rel (%p155) target = $region28
      $region27: #{residual_block_forward.7} parent=23 // pred_region
        %p158 = scmp.lt.s32.totalorder %s10, 1
        %s159 = scalar_select %p158, %s10, 1
        %s160 = smul.addr %s159, 16
        %s161 = smul.addr %s160, 8
        %s162 = scalar_lea.vmem %s0, %s161
      $region28: #{residual_block_forward.7} parent=23 // pred_fallthru
        _
      // Predicated region
      $region29: #{residual_block_forward.7} parent=23 // pred_check
        %p163 = pneg %p56
      $region30: #{residual_block_forward.7} parent=23 // pred_check_branch
        %165 = sbr.rel (%p163) target = $region32
      $region31: #{residual_block_forward.7} parent=23 // pred_region
        %p166 = scmp.lt.s32.totalorder %s10, 1
        %s167 = scalar_select %p166, %s10, 1
        %s168 = smul.addr %s167, 16
        %s169 = smul.addr %s168, 8
        %s170 = scalar_lea.vmem %s1, %s169
      $region32: #{residual_block_forward.7} parent=23 // pred_fallthru
        _
    $region24: #{residual_block_forward.7} parent=5 // pred_fallthru
      _
    %p171 = scmp.le.s32.totalorder 1, %s10
    %p172 = scmp.lt.s32.totalorder %s10, 3
    %p173 = pnand %p171, %p172
    %p174 = pneg %p173
    // Predicated region
    $region33: #{residual_block_forward.7} parent=5 // pred_check
      _
    $region34: #{residual_block_forward.7} parent=5 // pred_check_branch
      %176 = sbr.rel (%p173) target = $region36
    $region35: #{residual_block_forward.7} parent=5 // pred_region
      %s177 = ssub.s32 %s10, 1
      %p178 = scmp.lt.s32.totalorder %s15, 1
      %s179 = scalar_select %p178, %s15, 1
      %s180 = smul.addr %s179, 16
      %s181 = smul.addr %s180, 8
      %s182 = scalar_lea.vmem %s0, %s181
      %p183 = pneg %p36
      %p184 = pneg %p33
      %p185 = scmp.lt.s32.totalorder %s15, 1
      %s186 = scalar_select %p185, %s15, 1
      %s187 = smul.addr %s186, 16
      %s188 = smul.addr %s187, 8
      %s189 = scalar_lea.vmem %s1, %s188
      %p190 = pneg %p62
      %p191 = pneg %p59
      %p192 = pneg %p83
      %p193 = pneg %p80
      %p194 = pneg %p104
      %p195 = pneg %p101
      %p196 = pneg %p130
      %p197 = pneg %p127
      %p198 = scmp.lt.s32.totalorder %s15, 1
      %s199 = scalar_select %p198, %s15, 1
      %s200 = smul.addr %s199, 16
      %s201 = smul.addr %s200, 8
      %s202 = scalar_lea.vmem %s4, %s201
      %p203 = scmp.lt.s32.totalorder %s15, 1
      %s204 = scalar_select %p203, %s15, 1
      %s205 = smul.addr %s204, 16
      %s206 = smul.addr %s205, 8
      %s207 = scalar_lea.vmem %s0, %s206
      %p208 = scmp.lt.s32.totalorder %s15, 1
      %s209 = scalar_select %p208, %s15, 1
      %s210 = smul.addr %s209, 16
      %s211 = smul.addr %s210, 8
      %s212 = scalar_lea.vmem %s1, %s211
      %p213 = scmp.lt.s32.totalorder %s15, 1
      %s214 = scalar_select %p213, %s15, 1
      %s215 = smul.addr %s214, 16
      %s216 = smul.addr %s215, 8
      %s217 = scalar_lea.vmem %s4, %s216
      %v218 = vld [vmem:[%s207] sm:$0xff]
      %v219 = vld [vmem:[%s207 + $0x8] sm:$0xff]
      %v220 = vld [vmem:[%s207 + $0x10] sm:$0xff]
      %v221 = vld [vmem:[%s207 + $0x18] sm:$0xff]
      %v222 = vld [vmem:[%s207 + $0x20] sm:$0xff]
      %v223 = vld [vmem:[%s207 + $0x28] sm:$0xff]
      %v224 = vld [vmem:[%s207 + $0x30] sm:$0xff]
      %v225 = vld [vmem:[%s207 + $0x38] sm:$0xff]
      %v226 = vld [vmem:[%s207 + $0x40] sm:$0xff]
      %v227 = vld [vmem:[%s207 + $0x48] sm:$0xff]
      %v228 = vld [vmem:[%s207 + $0x50] sm:$0xff]
      %v229 = vld [vmem:[%s207 + $0x58] sm:$0xff]
      %v230 = vld [vmem:[%s207 + $0x60] sm:$0xff]
      %v231 = vld [vmem:[%s207 + $0x68] sm:$0xff]
      %v232 = vld [vmem:[%s207 + $0x70] sm:$0xff]
      %v233 = vld [vmem:[%s207 + $0x78] sm:$0xff]
      %v234 = vld [vmem:[%s2] sm:$0x1]
      %v236 = vperm.slane %v234, 0
      %v238 = vmul.f32 %v218, %v236
      %v239 = vmul.f32 %v219, %v236
      %v240 = vmul.f32 %v220, %v236
      %v241 = vmul.f32 %v221, %v236
      %v242 = vmul.f32 %v222, %v236
      %v243 = vmul.f32 %v223, %v236
      %v244 = vmul.f32 %v224, %v236
      %v245 = vmul.f32 %v225, %v236
      %v246 = vmul.f32 %v226, %v236
      %v247 = vmul.f32 %v227, %v236
      %v248 = vmul.f32 %v228, %v236
      %v249 = vmul.f32 %v229, %v236
      %v250 = vmul.f32 %v230, %v236
      %v251 = vmul.f32 %v231, %v236
      %v252 = vmul.f32 %v232, %v236
      %v253 = vmul.f32 %v233, %v236
      %v254 = vld [vmem:[%s3] sm:$0x1]
      %v256 = vperm.slane %v254, 0
      %v258 = vadd.f32 %v238, %v256
      %v259 = vadd.f32 %v239, %v256
      %v260 = vadd.f32 %v240, %v256
      %v261 = vadd.f32 %v241, %v256
      %v262 = vadd.f32 %v242, %v256
      %v263 = vadd.f32 %v243, %v256
      %v264 = vadd.f32 %v244, %v256
      %v265 = vadd.f32 %v245, %v256
      %v266 = vadd.f32 %v246, %v256
      %v267 = vadd.f32 %v247, %v256
      %v268 = vadd.f32 %v248, %v256
      %v269 = vadd.f32 %v249, %v256
      %v270 = vadd.f32 %v250, %v256
      %v271 = vadd.f32 %v251, %v256
      %v272 = vadd.f32 %v252, %v256
      %v273 = vadd.f32 %v253, %v256
      %v274 = vld [vmem:[%s212] sm:$0xff]
      %v275 = vld [vmem:[%s212 + $0x8] sm:$0xff]
      %v276 = vld [vmem:[%s212 + $0x10] sm:$0xff]
      %v277 = vld [vmem:[%s212 + $0x18] sm:$0xff]
      %v278 = vld [vmem:[%s212 + $0x20] sm:$0xff]
      %v279 = vld [vmem:[%s212 + $0x28] sm:$0xff]
      %v280 = vld [vmem:[%s212 + $0x30] sm:$0xff]
      %v281 = vld [vmem:[%s212 + $0x38] sm:$0xff]
      %v282 = vld [vmem:[%s212 + $0x40] sm:$0xff]
      %v283 = vld [vmem:[%s212 + $0x48] sm:$0xff]
      %v284 = vld [vmem:[%s212 + $0x50] sm:$0xff]
      %v285 = vld [vmem:[%s212 + $0x58] sm:$0xff]
      %v286 = vld [vmem:[%s212 + $0x60] sm:$0xff]
      %v287 = vld [vmem:[%s212 + $0x68] sm:$0xff]
      %v288 = vld [vmem:[%s212 + $0x70] sm:$0xff]
      %v289 = vld [vmem:[%s212 + $0x78] sm:$0xff]
      %v290 = vadd.f32 %v258, %v274
      %v291 = vadd.f32 %v259, %v275
      %v292 = vadd.f32 %v260, %v276
      %v293 = vadd.f32 %v261, %v277
      %v294 = vadd.f32 %v262, %v278
      %v295 = vadd.f32 %v263, %v279
      %v296 = vadd.f32 %v264, %v280
      %v297 = vadd.f32 %v265, %v281
      %v298 = vadd.f32 %v266, %v282
      %v299 = vadd.f32 %v267, %v283
      %v300 = vadd.f32 %v268, %v284
      %v301 = vadd.f32 %v269, %v285
      %v302 = vadd.f32 %v270, %v286
      %v303 = vadd.f32 %v271, %v287
      %v304 = vadd.f32 %v272, %v288
      %v305 = vadd.f32 %v273, %v289
      %306 = vst [vmem:[%s217] sm:$0xff] %v290
      %307 = vst [vmem:[%s217 + $0x8] sm:$0xff] %v291
      %308 = vst [vmem:[%s217 + $0x10] sm:$0xff] %v292
      %309 = vst [vmem:[%s217 + $0x18] sm:$0xff] %v293
      %310 = vst [vmem:[%s217 + $0x20] sm:$0xff] %v294
      %311 = vst [vmem:[%s217 + $0x28] sm:$0xff] %v295
      %312 = vst [vmem:[%s217 + $0x30] sm:$0xff] %v296
      %313 = vst [vmem:[%s217 + $0x38] sm:$0xff] %v297
      %314 = vst [vmem:[%s217 + $0x40] sm:$0xff] %v298
      %315 = vst [vmem:[%s217 + $0x48] sm:$0xff] %v299
      %316 = vst [vmem:[%s217 + $0x50] sm:$0xff] %v300
      %317 = vst [vmem:[%s217 + $0x58] sm:$0xff] %v301
      %318 = vst [vmem:[%s217 + $0x60] sm:$0xff] %v302
      %319 = vst [vmem:[%s217 + $0x68] sm:$0xff] %v303
      %320 = vst [vmem:[%s217 + $0x70] sm:$0xff] %v304
      %321 = vst [vmem:[%s217 + $0x78] sm:$0xff] %v305
      %p322 = scmp.lt.s32.totalorder %s15, 1
      %s323 = scalar_select %p322, %s15, 1
      %s324 = smul.addr %s323, 16
      %s325 = smul.addr %s324, 8
      %s326 = scalar_lea.vmem %s4, %s325
      // Predicated region
      $region37: #{residual_block_forward.7} parent=35 // pred_check
        %p327 = pneg %p127
      $region38: #{residual_block_forward.7} parent=35 // pred_check_branch
        %329 = sbr.rel (%p327) target = $region40
      $region39: #{residual_block_forward.7} parent=35 // pred_region
        _
      $region40: #{residual_block_forward.7} parent=35 // pred_fallthru
        _
    $region36: #{residual_block_forward.7} parent=5 // pred_fallthru
      _
    %p330 = scmp.le.s32.totalorder 2, %s10
    // Predicated region
    $region41: #{residual_block_forward.7} parent=5 // pred_check
      %p331 = pneg %p330
    $region42: #{residual_block_forward.7} parent=5 // pred_check_branch
      %333 = sbr.rel (%p331) target = $region44
    $region43: #{residual_block_forward.7} parent=5 // pred_region
      %s334 = ssub.s32 %s10, 2
      // Predicated region
      $region45: #{residual_block_forward.7} parent=43 // pred_check
        %p335 = pneg %p133
      $region46: #{residual_block_forward.7} parent=43 // pred_check_branch
        %337 = sbr.rel (%p335) target = $region48
      $region47: #{residual_block_forward.7} parent=43 // pred_region
        %p338 = scmp.lt.s32.totalorder %s16, 1
        %s339 = scalar_select %p338, %s16, 1
        %s340 = smul.addr %s339, 16
        %s341 = smul.addr %s340, 8
        %s342 = scalar_lea.vmem %s4, %s341
      $region48: #{residual_block_forward.7} parent=43 // pred_fallthru
        _
    $region44: #{residual_block_forward.7} parent=5 // pred_fallthru
      _
  $region6: #{residual_block_forward.7} parent=0 // loop_footer
    %s14 = sadd.s32 1, %s10
  $region7: #{residual_block_forward.7} parent=0 // loop_footer_branch
    %9 = sbr.rel target = $region3
  $region8: #{residual_block_forward.7} parent=0 // loop_exit
    _

// kernel: residual_block_forward.4
$region0: #{residual_block_forward.4}
  #allocation0 [shape = 'u32[]', space=smem, size = 0x4, offset = 0x4, fixed_abs, tag = 'smem constant byte address 0x4 - core index']
  #allocation1 [shape = 'u32[72,128]{1,0:T(1,128)}', space=vmem, size = 0x9000, scoped, tag = 'internal scratch']
  %s0 = inlined_call_operand.vmem [shape: bf16[2,18,18,64], index: 0, kind: input, shape index: {}]
  %s1 = inlined_call_operand.vmem [shape: bf16[576,64], index: 1, kind: input, shape index: {}]
  %s2 = inlined_call_operand.vmem [shape: f32[2,256,64], index: 2, kind: output, shape index: {0}]
  %s3 = inlined_call_operand.vmem [shape: f32[2,2,64], index: 3, kind: output, shape index: {1}]
  %4 = xla_tuple %s2, %s3
  %s5 = sld [smem:[#allocation0]]
  $region49: #{residual_block_forward.4} parent=0
    _
  %s7 = ssub.s32 1, %s5
  %s8 = scalar_select 0, %s7, %s5
  loop: start=0, step=1, limit=4
  $region2: #{residual_block_forward.4} parent=0 // loop_pre_header
    _
  $region3: #{residual_block_forward.4} parent=0 // loop_header
    %s10 = sphi 0, %s14
    %p11 = scmp.ge.s32.totalorder %s10, 4
    %s20 = sphi 0, %s22
    %s23 = sphi 0, %s20
    %s24 = sphi 0, %s23
    %s40 = sphi 0, %s24
    %s44 = sphi 0, %s44
    %s46 = sphi 0, %s44
    %s47 = sphi 0, %s46
    %s61 = sphi 0, %s47
    %s67 = sphi 0, %s69
    %s70 = sphi 0, %s67
    %s71 = sphi 0, %s70
    %s87 = sphi 0, %s71
    %s93 = sphi 0, %s95
    %s96 = sphi 0, %s93
    %s97 = sphi 0, %s96
    %s113 = sphi 0, %s97
  $region4: #{residual_block_forward.4} parent=0 // loop_header_branch
    %13 = sbr.rel (%p11) target = $region8
  $region5: #{residual_block_forward.4} parent=0 // loop_body
    %s15 = ssub.s32 %s10, 1
    %s16 = ssub.s32 %s10, 2
    %s17 = sadd.s32 %s10, 1
    %s18 = ssub.s32 %s10, %s17
    %p19 = scmp.eq.s32.totalorder %s18, 0
    %s21 = sadd.s32 %s20, 1
    %s22 = scalar_select %p19, %s20, %s21
    %p25 = pneg %p19
    %p26 = scmp.eq.s32.totalorder %s10, 1
    %p27 = por %p25, %p26
    %p28 = scmp.ne.s32.totalorder %s20, %s23
    %p29 = scmp.eq.s32.totalorder %s10, 0
    %p30 = por %p28, %p29
    %p31 = scmp.ne.s32.totalorder %s20, %s23
    %p32 = scmp.eq.s32.totalorder %s15, 1
    %p33 = por %p31, %p32
    %p34 = scmp.ne.s32.totalorder %s23, %s24
    %p35 = scmp.eq.s32.totalorder %s15, 0
    %p36 = por %p34, %p35
    %p37 = scmp.ne.s32.totalorder %s23, %s24
    %p38 = scmp.eq.s32.totalorder %s16, 1
    %p39 = por %p37, %p38
    %p41 = scmp.ne.s32.totalorder %s24, %s40
    %p42 = scmp.eq.s32.totalorder %s16, 0
    %p43 = por %p41, %p42
    %s45 = sadd.s32 %s44, 1
    %p48 = scmp.eq.s32.totalorder %s10, 1
    %p49 = scmp.ne.s32.totalorder %s44, %s46
    %p50 = scmp.eq.s32.totalorder %s10, 0
    %p51 = por %p49, %p50
    %p52 = scmp.ne.s32.totalorder %s44, %s46
    %p53 = scmp.eq.s32.totalorder %s15, 1
    %p54 = por %p52, %p53
    %p55 = scmp.ne.s32.totalorder %s46, %s47
    %p56 = scmp.eq.s32.totalorder %s15, 0
    %p57 = por %p55, %p56
    %p58 = scmp.ne.s32.totalorder %s46, %s47
    %p59 = scmp.eq.s32.totalorder %s16, 1
    %p60 = por %p58, %p59
    %p62 = scmp.ne.s32.totalorder %s47, %s61
    %p63 = scmp.eq.s32.totalorder %s16, 0
    %p64 = por %p62, %p63
    %s65 = ssub.s32 %s10, %s17
    %p66 = scmp.eq.s32.totalorder %s65, 0
    %s68 = sadd.s32 %s67, 1
    %s69 = scalar_select %p66, %s67, %s68
    %p72 = pneg %p66
    %p73 = scmp.eq.s32.totalorder %s10, 1
    %p74 = por %p72, %p73
    %p75 = scmp.ne.s32.totalorder %s67, %s70
    %p76 = scmp.eq.s32.totalorder %s10, 0
    %p77 = por %p75, %p76
    %p78 = scmp.ne.s32.totalorder %s67, %s70
    %p79 = scmp.eq.s32.totalorder %s15, 1
    %p80 = por %p78, %p79
    %p81 = scmp.ne.s32.totalorder %s70, %s71
    %p82 = scmp.eq.s32.totalorder %s15, 0
    %p83 = por %p81, %p82
    %p84 = scmp.ne.s32.totalorder %s70, %s71
    %p85 = scmp.eq.s32.totalorder %s16, 1
    %p86 = por %p84, %p85
    %p88 = scmp.ne.s32.totalorder %s71, %s87
    %p89 = scmp.eq.s32.totalorder %s16, 0
    %p90 = por %p88, %p89
    %s91 = ssub.s32 %s10, %s17
    %p92 = scmp.eq.s32.totalorder %s91, 0
    %s94 = sadd.s32 %s93, 1
    %s95 = scalar_select %p92, %s93, %s94
    %p98 = pneg %p92
    %p99 = scmp.eq.s32.totalorder %s10, 1
    %p100 = por %p98, %p99
    %p101 = scmp.ne.s32.totalorder %s93, %s96
    %p102 = scmp.eq.s32.totalorder %s10, 0
    %p103 = por %p101, %p102
    %p104 = scmp.ne.s32.totalorder %s93, %s96
    %p105 = scmp.eq.s32.totalorder %s15, 1
    %p106 = por %p104, %p105
    %p107 = scmp.ne.s32.totalorder %s96, %s97
    %p108 = scmp.eq.s32.totalorder %s15, 0
    %p109 = por %p107, %p108
    %p110 = scmp.ne.s32.totalorder %s96, %s97
    %p111 = scmp.eq.s32.totalorder %s16, 1
    %p112 = por %p110, %p111
    %p114 = scmp.ne.s32.totalorder %s97, %s113
    %p115 = scmp.eq.s32.totalorder %s16, 0
    %p116 = por %p114, %p115
    %p117 = scmp.le.s32.totalorder 1, %s10
    %p118 = scmp.lt.s32.totalorder %s10, 3
    %p119 = pnand %p117, %p118
    %p120 = pneg %p119
    // Predicated region
    $region9: #{residual_block_forward.4} parent=5 // pred_check
      _
    $region10: #{residual_block_forward.4} parent=5 // pred_check_branch
      %122 = sbr.rel (%p119) target = $region12
    $region11: #{residual_block_forward.4} parent=5 // pred_region
      %s123 = ssub.s32 %s10, 1
      // Predicated region
      $region13: #{residual_block_forward.4} parent=11 // pred_check
        %p124 = pneg %p57
      $region14: #{residual_block_forward.4} parent=11 // pred_check_branch
        %126 = sbr.rel (%p124) target = $region16
      $region15: #{residual_block_forward.4} parent=11 // pred_region
        _
      $region16: #{residual_block_forward.4} parent=11 // pred_fallthru
        _
    $region12: #{residual_block_forward.4} parent=5 // pred_fallthru
      _
    %p127 = scmp.lt.s32.totalorder %s10, 2
    // Predicated region
    $region17: #{residual_block_forward.4} parent=5 // pred_check
      %p128 = pneg %p127
    $region18: #{residual_block_forward.4} parent=5 // pred_check_branch
      %130 = sbr.rel (%p128) target = $region20
    $region19: #{residual_block_forward.4} parent=5 // pred_region
      // Predicated region
      $region21: #{residual_block_forward.4} parent=19 // pred_check
        %p131 = pneg %p30
      $region22: #{residual_block_forward.4} parent=19 // pred_check_branch
        %133 = sbr.rel (%p131) target = $region24
      $region23: #{residual_block_forward.4} parent=19 // pred_region
        %p134 = scmp.lt.s32.totalorder %s10, 1
        %s135 = scalar_select %p134, %s10, 1
        %s136 = smul.addr %s135, 54
        %s137 = smul.addr %s136, 4
        %s138 = scalar_lea.vmem %s0, %s137
      $region24: #{residual_block_forward.4} parent=19 // pred_fallthru
        _
    $region20: #{residual_block_forward.4} parent=5 // pred_fallthru
      _
    %p139 = scmp.le.s32.totalorder 1, %s10
    %p140 = scmp.lt.s32.totalorder %s10, 3
    %p141 = pnand %p139, %p140
    %p142 = pneg %p141
    // Predicated region
    $region25: #{residual_block_forward.4} parent=5 // pred_check
      _
    $region26: #{residual_block_forward.4} parent=5 // pred_check_branch
      %144 = sbr.rel (%p141) target = $region28
    $region27: #{residual_block_forward.4} parent=5 // pred_region
      %s145 = ssub.s32 %s10, 1
      %p146 = scmp.lt.s32.totalorder %s15, 1
      %s147 = scalar_select %p146, %s15, 1
      %s148 = smul.addr %s147, 54
      %s149 = smul.addr %s148, 4
      %s150 = scalar_lea.vmem %s0, %s149
      %p151 = pneg %p36
      %p152 = pneg %p33
      %p153 = pneg %p57
      %p154 = pneg %p54
      %p155 = pneg %p83
      %p156 = pneg %p80
      %p157 = scmp.lt.s32.totalorder %s15, 1
      %s158 = scalar_select %p157, %s15, 1
      %s159 = smul.addr %s158, 32
      %s160 = smul.addr %s159, 8
      %s161 = scalar_lea.vmem %s2, %s160
      %p162 = pneg %p109
      %p163 = pneg %p106
      %p164 = scmp.lt.s32.totalorder %s15, 1
      %s165 = scalar_select %p164, %s15, 1
      %s166 = smul.addr %s165, 2
      %s167 = scalar_lea.vmem %s3, %s166
      %p168 = scmp.lt.s32.totalorder %s15, 1
      %s169 = scalar_select %p168, %s15, 1
      %s170 = smul.addr %s169, 54
      %s171 = smul.addr %s170, 4
      %s172 = scalar_lea.vmem %s0, %s171
      %p173 = scmp.lt.s32.totalorder %s15, 1
      %s174 = scalar_select %p173, %s15, 1
      %s175 = smul.addr %s174, 32
      %s176 = smul.addr %s175, 8
      %s177 = scalar_lea.vmem %s2, %s176
      %p178 = scmp.lt.s32.totalorder %s15, 1
      %s179 = scalar_select %p178, %s15, 1
      %s180 = smul.addr %s179, 2
      %s181 = scalar_lea.vmem %s3, %s180
      %v183 = vld [vmem:[%s172] sm:$0xf]
      %v184 = vld [vmem:[%s172 + $0x4] sm:$0xf]
      %v185 = vld [vmem:[%s172 + $0xc] sm:$0xf]
      %v186 = vld [vmem:[%s172 + $0x10] sm:$0xf]
      %v187 = vld [vmem:[%s172 + $0x18] sm:$0xf]
      %v188 = vld [vmem:[%s172 + $0x1c] sm:$0xf]
      %v189 = vld [vmem:[%s172 + $0x24] sm:$0xf]
      %v190 = vld [vmem:[%s172 + $0x28] sm:$0xf]
      %v191 = vld [vmem:[%s172 + $0x30] sm:$0xf]
      %v192 = vld [vmem:[%s172 + $0x34] sm:$0xf]
      %v193 = vld [vmem:[%s172 + $0x3c] sm:$0xf]
      %v194 = vld [vmem:[%s172 + $0x40] sm:$0xf]
      %v195 = vld [vmem:[%s172 + $0x48] sm:$0xf]
      %v196 = vld [vmem:[%s172 + $0x4c] sm:$0xf]
      %v197 = vld [vmem:[%s172 + $0x54] sm:$0xf]
      %v198 = vld [vmem:[%s172 + $0x58] sm:$0xf]
      %v199 = vld [vmem:[%s172 + $0x60] sm:$0xf]
      %v200 = vld [vmem:[%s172 + $0x64] sm:$0xf]
      %v201 = vld [vmem:[%s172 + $0x6c] sm:$0xf]
      %v202 = vld [vmem:[%s172 + $0x70] sm:$0xf]
      %v203 = vld [vmem:[%s172 + $0x78] sm:$0xf]
      %v204 = vld [vmem:[%s172 + $0x7c] sm:$0xf]
      %v205 = vld [vmem:[%s172 + $0x84] sm:$0xf]
      %v206 = vld [vmem:[%s172 + $0x88] sm:$0xf]
      %v207 = vld [vmem:[%s172 + $0x90] sm:$0xf]
      %v208 = vld [vmem:[%s172 + $0x94] sm:$0xf]
      %v209 = vld [vmem:[%s172 + $0x9c] sm:$0xf]
      %v210 = vld [vmem:[%s172 + $0xa0] sm:$0xf]
      %v211 = vld [vmem:[%s172 + $0xa8] sm:$0xf]
      %v212 = vld [vmem:[%s172 + $0xac] sm:$0xf]
      %v213 = vld [vmem:[%s172 + $0xb4] sm:$0xf]
      %v214 = vld [vmem:[%s172 + $0xb8] sm:$0xf]
      %v215 = vld [vmem:[%s1] sm:$0xf]
      %v216 = vld [vmem:[%s1 + $0x4] sm:$0xf]
      %v217 = vld [vmem:[%s1 + $0x8] sm:$0xf]
      %v218 = vld [vmem:[%s1 + $0xc] sm:$0xf]
      %v219 = vld [vmem:[%s1 + $0x10] sm:$0xf]
      %v220 = vld [vmem:[%s1 + $0x14] sm:$0xf]
      %v221 = vld [vmem:[%s1 + $0x18] sm:$0xf]
      %v222 = vld [vmem:[%s1 + $0x1c] sm:$0xf]
      %v223 = vld [vmem:[%s172 + $0x8] sm:$0x1]
      %v224 = vld [vmem:[%s172 + $0x14] sm:$0x1]
      %v225 = vld [vmem:[%s172 + $0x20] sm:$0x1]
      %v226 = vld [vmem:[%s172 + $0x2c] sm:$0x1]
      %v227 = vld [vmem:[%s172 + $0x38] sm:$0x1]
      %v228 = vld [vmem:[%s172 + $0x44] sm:$0x1]
      %v229 = vld [vmem:[%s172 + $0x50] sm:$0x1]
      %v230 = vld [vmem:[%s172 + $0x5c] sm:$0x1]
      %v231 = vld [vmem:[%s172 + $0x68] sm:$0x1]
      %v232 = vld [vmem:[%s172 + $0x74] sm:$0x1]
      %v233 = vld [vmem:[%s172 + $0x80] sm:$0x1]
      %v234 = vld [vmem:[%s172 + $0x8c] sm:$0x1]
      %v235 = vld [vmem:[%s172 + $0x98] sm:$0x1]
      %v236 = vld [vmem:[%s172 + $0xa4] sm:$0x1]
      %v237 = vld [vmem:[%s172 + $0xb0] sm:$0x1]
      %v238 = vld [vmem:[%s172 + $0xbc] sm:$0x1]
      %vm239 = vsmask.f32 3328
      %vm240 = vsmask.f32 7440
      %vm241 = vmor %vm239, %vm240
      %v243 = vshrl.u32 %v183, 16
      %v245 = vrot.slane %v243, 4
      %v246 = vshll.u32 %v183, 16
      %v248 = vrot.slane %v246, 5
      %v249 = vor.u32 %v245, %v248
      %v250 = vrot.slane %v249, 4
      %v252 = vshll.u32 %v184, 16
      %v254 = vrot.slane %v252, 5
      %v255 = vsel %vm241, %v250, %v254
      %v256 = vshrl.u32 %v184, 16
      %v258 = vrot.slane %v256, 4
      %v259 = vor.u32 %v258, %v254
      %v260 = vrot.slane %v259, 4
      %v262 = vshll.u32 %v223, 16
      %v264 = vrot.slane %v262, 5
      %v265 = vsel %vm241, %v260, %v264
      %v267 = vshrl.u32 %v185, 16
      %v269 = vrot.slane %v267, 4
      %v270 = vshll.u32 %v185, 16
      %v272 = vrot.slane %v270, 5
      %v273 = vor.u32 %v269, %v272
      %v274 = vrot.slane %v273, 4
      %v276 = vshll.u32 %v186, 16
      %v278 = vrot.slane %v276, 5
      %v279 = vsel %vm241, %v274, %v278
      %v280 = vshrl.u32 %v186, 16
      %v282 = vrot.slane %v280, 4
      %v283 = vor.u32 %v282, %v278
      %v284 = vrot.slane %v283, 4
      %v286 = vshll.u32 %v224, 16
      %v288 = vrot.slane %v286, 5
      %v289 = vsel %vm241, %v284, %v288
      %v291 = vshrl.u32 %v187, 16
      %v293 = vrot.slane %v291, 4
      %v294 = vshll.u32 %v187, 16
      %v296 = vrot.slane %v294, 5
      %v297 = vor.u32 %v293, %v296
      %v298 = vrot.slane %v297, 4
      %v300 = vshll.u32 %v188, 16
      %v302 = vrot.slane %v300, 5
      %v303 = vsel %vm241, %v298, %v302
      %v304 = vshrl.u32 %v188, 16
      %v306 = vrot.slane %v304, 4
      %v307 = vor.u32 %v306, %v302
      %v308 = vrot.slane %v307, 4
      %v310 = vshll.u32 %v225, 16
      %v312 = vrot.slane %v310, 5
      %v313 = vsel %vm241, %v308, %v312
      %v315 = vshrl.u32 %v189, 16
      %v317 = vrot.slane %v315, 4
      %v318 = vshll.u32 %v189, 16
      %v320 = vrot.slane %v318, 5
      %v321 = vor.u32 %v317, %v320
      %v322 = vrot.slane %v321, 4
      %v324 = vshll.u32 %v190, 16
      %v326 = vrot.slane %v324, 5
      %v327 = vsel %vm241, %v322, %v326
      %v328 = vshrl.u32 %v190, 16
      %v330 = vrot.slane %v328, 4
      %v331 = vor.u32 %v330, %v326
      %v332 = vrot.slane %v331, 4
      %v334 = vshll.u32 %v226, 16
      %v336 = vrot.slane %v334, 5
      %v337 = vsel %vm241, %v332, %v336
      %v339 = vshrl.u32 %v191, 16
      %v341 = vrot.slane %v339, 4
      %v342 = vshll.u32 %v191, 16
      %v344 = vrot.slane %v342, 5
      %v345 = vor.u32 %v341, %v344
      %v346 = vrot.slane %v345, 4
      %v348 = vshll.u32 %v192, 16
      %v350 = vrot.slane %v348, 5
      %v351 = vsel %vm241, %v346, %v350
      %v352 = vshrl.u32 %v192, 16
      %v354 = vrot.slane %v352, 4
      %v355 = vor.u32 %v354, %v350
      %v356 = vrot.slane %v355, 4
      %v358 = vshll.u32 %v227, 16
      %v360 = vrot.slane %v358, 5
      %v361 = vsel %vm241, %v356, %v360
      %v363 = vshrl.u32 %v193, 16
      %v365 = vrot.slane %v363, 4
      %v366 = vshll.u32 %v193, 16
      %v368 = vrot.slane %v366, 5
      %v369 = vor.u32 %v365, %v368
      %v370 = vrot.slane %v369, 4
      %v372 = vshll.u32 %v194, 16
      %v374 = vrot.slane %v372, 5
      %v375 = vsel %vm241, %v370, %v374
      %v376 = vshrl.u32 %v194, 16
      %v378 = vrot.slane %v376, 4
      %v379 = vor.u32 %v378, %v374
      %v380 = vrot.slane %v379, 4
      %v382 = vshll.u32 %v228, 16
      %v384 = vrot.slane %v382, 5
      %v385 = vsel %vm241, %v380, %v384
      %v387 = vshrl.u32 %v195, 16
      %v389 = vrot.slane %v387, 4
      %v390 = vshll.u32 %v195, 16
      %v392 = vrot.slane %v390, 5
      %v393 = vor.u32 %v389, %v392
      %v394 = vrot.slane %v393, 4
      %v396 = vshll.u32 %v196, 16
      %v398 = vrot.slane %v396, 5
      %v399 = vsel %vm241, %v394, %v398
      %v400 = vshrl.u32 %v196, 16
      %v402 = vrot.slane %v400, 4
      %v403 = vor.u32 %v402, %v398
      %v404 = vrot.slane %v403, 4
      %v406 = vshll.u32 %v229, 16
      %v408 = vrot.slane %v406, 5
      %v409 = vsel %vm241, %v404, %v408
      %v411 = vshrl.u32 %v197, 16
      %v413 = vrot.slane %v411, 4
      %v414 = vshll.u32 %v197, 16
      %v416 = vrot.slane %v414, 5
      %v417 = vor.u32 %v413, %v416
      %v418 = vrot.slane %v417, 4
      %v420 = vshll.u32 %v198, 16
      %v422 = vrot.slane %v420, 5
      %v423 = vsel %vm241, %v418, %v422
      %v424 = vshrl.u32 %v198, 16
      %v426 = vrot.slane %v424, 4
      %v427 = vor.u32 %v426, %v422
      %v428 = vrot.slane %v427, 4
      %v430 = vshll.u32 %v230, 16
      %v432 = vrot.slane %v430, 5
      %v433 = vsel %vm241, %v428, %v432
      %v435 = vshrl.u32 %v199, 16
      %v437 = vrot.slane %v435, 4
      %v438 = vshll.u32 %v199, 16
      %v440 = vrot.slane %v438, 5
      %v441 = vor.u32 %v437, %v440
      %v442 = vrot.slane %v441, 4
      %v444 = vshll.u32 %v200, 16
      %v446 = vrot.slane %v444, 5
      %v447 = vsel %vm241, %v442, %v446
      %v448 = vshrl.u32 %v200, 16
      %v450 = vrot.slane %v448, 4
      %v451 = vor.u32 %v450, %v446
      %v452 = vrot.slane %v451, 4
      %v454 = vshll.u32 %v231, 16
      %v456 = vrot.slane %v454, 5
      %v457 = vsel %vm241, %v452, %v456
      %v459 = vshrl.u32 %v201, 16
      %v461 = vrot.slane %v459, 4
      %v462 = vshll.u32 %v201, 16
      %v464 = vrot.slane %v462, 5
      %v465 = vor.u32 %v461, %v464
      %v466 = vrot.slane %v465, 4
      %v468 = vshll.u32 %v202, 16
      %v470 = vrot.slane %v468, 5
      %v471 = vsel %vm241, %v466, %v470
      %v472 = vshrl.u32 %v202, 16
      %v474 = vrot.slane %v472, 4
      %v475 = vor.u32 %v474, %v470
      %v476 = vrot.slane %v475, 4
      %v478 = vshll.u32 %v232, 16
      %v480 = vrot.slane %v478, 5
      %v481 = vsel %vm241, %v476, %v480
      %v483 = vshrl.u32 %v203, 16
      %v485 = vrot.slane %v483, 4
      %v486 = vshll.u32 %v203, 16
      %v488 = vrot.slane %v486, 5
      %v489 = vor.u32 %v485, %v488
      %v490 = vrot.slane %v489, 4
      %v492 = vshll.u32 %v204, 16
      %v494 = vrot.slane %v492, 5
      %v495 = vsel %vm241, %v490, %v494
      %v496 = vshrl.u32 %v204, 16
      %v498 = vrot.slane %v496, 4
      %v499 = vor.u32 %v498, %v494
      %v500 = vrot.slane %v499, 4
      %v502 = vshll.u32 %v233, 16
      %v504 = vrot.slane %v502, 5
      %v505 = vsel %vm241, %v500, %v504
      %v507 = vshrl.u32 %v205, 16
      %v509 = vrot.slane %v507, 4
      %v510 = vshll.u32 %v205, 16
      %v512 = vrot.slane %v510, 5
      %v513 = vor.u32 %v509, %v512
      %v514 = vrot.slane %v513, 4
      %v516 = vshll.u32 %v206, 16
      %v518 = vrot.slane %v516, 5
      %v519 = vsel %vm241, %v514, %v518
      %v520 = vshrl.u32 %v206, 16
      %v522 = vrot.slane %v520, 4
      %v523 = vor.u32 %v522, %v518
      %v524 = vrot.slane %v523, 4
      %v526 = vshll.u32 %v234, 16
      %v528 = vrot.slane %v526, 5
      %v529 = vsel %vm241, %v524, %v528
      %v531 = vshrl.u32 %v207, 16
      %v533 = vrot.slane %v531, 4
      %v534 = vshll.u32 %v207, 16
      %v536 = vrot.slane %v534, 5
      %v537 = vor.u32 %v533, %v536
      %v538 = vrot.slane %v537, 4
      %v540 = vshll.u32 %v208, 16
      %v542 = vrot.slane %v540, 5
      %v543 = vsel %vm241, %v538, %v542
      %v544 = vshrl.u32 %v208, 16
      %v546 = vrot.slane %v544, 4
      %v547 = vor.u32 %v546, %v542
      %v548 = vrot.slane %v547, 4
      %v550 = vshll.u32 %v235, 16
      %v552 = vrot.slane %v550, 5
      %v553 = vsel %vm241, %v548, %v552
      %v555 = vshrl.u32 %v209, 16
      %v557 = vrot.slane %v555, 4
      %v558 = vshll.u32 %v209, 16
      %v560 = vrot.slane %v558, 5
      %v561 = vor.u32 %v557, %v560
      %v562 = vrot.slane %v561, 4
      %v564 = vshll.u32 %v210, 16
      %v566 = vrot.slane %v564, 5
      %v567 = vsel %vm241, %v562, %v566
      %v568 = vshrl.u32 %v210, 16
      %v570 = vrot.slane %v568, 4
      %v571 = vor.u32 %v570, %v566
      %v572 = vrot.slane %v571, 4
      %v574 = vshll.u32 %v236, 16
      %v576 = vrot.slane %v574, 5
      %v577 = vsel %vm241, %v572, %v576
      %v579 = vshrl.u32 %v211, 16
      %v581 = vrot.slane %v579, 4
      %v582 = vshll.u32 %v211, 16
      %v584 = vrot.slane %v582, 5
      %v585 = vor.u32 %v581, %v584
      %v586 = vrot.slane %v585, 4
      %v588 = vshll.u32 %v212, 16
      %v590 = vrot.slane %v588, 5
      %v591 = vsel %vm241, %v586, %v590
      %v592 = vshrl.u32 %v212, 16
      %v594 = vrot.slane %v592, 4
      %v595 = vor.u32 %v594, %v590
      %v596 = vrot.slane %v595, 4
      %v598 = vshll.u32 %v237, 16
      %v600 = vrot.slane %v598, 5
      %v601 = vsel %vm241, %v596, %v600
      %v603 = vshrl.u32 %v213, 16
      %v605 = vrot.slane %v603, 4
      %v606 = vshll.u32 %v213, 16
      %v608 = vrot.slane %v606, 5
      %v609 = vor.u32 %v605, %v608
      %v610 = vrot.slane %v609, 4
      %v612 = vshll.u32 %v214, 16
      %v614 = vrot.slane %v612, 5
      %v615 = vsel %vm241, %v610, %v614
      %v616 = vshrl.u32 %v214, 16
      %v618 = vrot.slane %v616, 4
      %v619 = vor.u32 %v618, %v614
      %v620 = vrot.slane %v619, 4
      %v622 = vshll.u32 %v238, 16
      %v624 = vrot.slane %v622, 5
      %v625 = vsel %vm241, %v620, %v624
      %v626 = vld [vmem:[%s1 + $0x20] sm:$0xf]
      %v627 = vld [vmem:[%s1 + $0x24] sm:$0xf]
      %v628 = vld [vmem:[%s1 + $0x28] sm:$0xf]
      %v629 = vld [vmem:[%s1 + $0x2c] sm:$0xf]
      %v630 = vld [vmem:[%s1 + $0x30] sm:$0xf]
      %v631 = vld [vmem:[%s1 + $0x34] sm:$0xf]
      %v632 = vld [vmem:[%s1 + $0x38] sm:$0xf]
      %v633 = vld [vmem:[%s1 + $0x3c] sm:$0xf]
      %v634 = vunpack.c.l.b16 %v255
      %v635 = vunpack.c.l.b16 %v265
      %v636 = vunpack.c.l.b16 %v279
      %v637 = vunpack.c.l.b16 %v289
      %v638 = vunpack.c.l.b16 %v303
      %v639 = vunpack.c.l.b16 %v313
      %v640 = vunpack.c.l.b16 %v327
      %v641 = vunpack.c.l.b16 %v337
      %v642 = vunpack.c.l.b16 %v351
      %v643 = vunpack.c.l.b16 %v361
      %v644 = vunpack.c.l.b16 %v375
      %v645 = vunpack.c.l.b16 %v385
      %v646 = vunpack.c.l.b16 %v399
      %v647 = vunpack.c.l.b16 %v409
      %v648 = vunpack.c.l.b16 %v423
      %v649 = vunpack.c.l.b16 %v433
      %v650 = vunpack.c.l.b16 %v447
      %v651 = vunpack.c.l.b16 %v457
      %v652 = vunpack.c.l.b16 %v471
      %v653 = vunpack.c.l.b16 %v481
      %v654 = vunpack.c.l.b16 %v495
      %v655 = vunpack.c.l.b16 %v505
      %v656 = vunpack.c.l.b16 %v519
      %v657 = vunpack.c.l.b16 %v529
      %v658 = vunpack.c.l.b16 %v543
      %v659 = vunpack.c.l.b16 %v553
      %v660 = vunpack.c.l.b16 %v567
      %v661 = vunpack.c.l.b16 %v577
      %v662 = vunpack.c.l.b16 %v591
      %v663 = vunpack.c.l.b16 %v601
      %v664 = vunpack.c.l.b16 %v615
      %v665 = vunpack.c.l.b16 %v625
      %v666 = vpack.c.b16 %v635, %v634
      %v667 = vpack.c.b16 %v637, %v636
      %v668 = vpack.c.b16 %v639, %v638
      %v669 = vpack.c.b16 %v641, %v640
      %v670 = vpack.c.b16 %v643, %v642
      %v671 = vpack.c.b16 %v645, %v644
      %v672 = vpack.c.b16 %v647, %v646
      %v673 = vpack.c.b16 %v649, %v648
      %v674 = vpack.c.b16 %v651, %v650
      %v675 = vpack.c.b16 %v653, %v652
      %v676 = vpack.c.b16 %v655, %v654
      %v677 = vpack.c.b16 %v657, %v656
      %v678 = vpack.c.b16 %v659, %v658
      %v679 = vpack.c.b16 %v661, %v660
      %v680 = vpack.c.b16 %v663, %v662
      %v681 = vpack.c.b16 %v665, %v664
      %v690 = vunpack.c.l.b16 %v626
      %v691 = vunpack.c.l.b16 %v627
      %v692 = vunpack.c.l.b16 %v628
      %v693 = vunpack.c.l.b16 %v629
      %v694 = vunpack.c.l.b16 %v630
      %v695 = vunpack.c.l.b16 %v631
      %v696 = vunpack.c.l.b16 %v632
      %v697 = vunpack.c.l.b16 %v633
      %v698 = vpack.c.b16 %v691, %v690
      %v699 = vpack.c.b16 %v693, %v692
      %v700 = vpack.c.b16 %v695, %v694
      %v701 = vpack.c.b16 %v697, %v696
      %vm706 = vcmask 523264
      %v708 = vsel %vm706, %v666, 0
      %v711 = vsel %vm706, %v667, 0
      %v714 = vsel %vm706, %v668, 0
      %v717 = vsel %vm706, %v669, 0
      %v720 = vsel %vm706, %v670, 0
      %v723 = vsel %vm706, %v671, 0
      %v726 = vsel %vm706, %v672, 0
      %v729 = vsel %vm706, %v673, 0
      %v732 = vsel %vm706, %v674, 0
      %v735 = vsel %vm706, %v675, 0
      %v738 = vsel %vm706, %v676, 0
      %v741 = vsel %vm706, %v677, 0
      %v744 = vsel %vm706, %v678, 0
      %v747 = vsel %vm706, %v679, 0
      %v750 = vsel %vm706, %v680, 0
      %v753 = vsel %vm706, %v681, 0
      %755 = vmatpush.bf16.msra.mxu0 0
      %756 = vmatpush.bf16.msra.mxu0 0
      %757 = vmatpush.bf16.msra.mxu0 0
      %758 = vmatpush.bf16.msra.mxu0 0
      %759 = vmatpush.bf16.msra.mxu0 %v701
      %760 = vmatpush.bf16.msra.mxu0 %v700
      %761 = vmatpush.bf16.msra.mxu0 %v699
      %762 = vmatpush.bf16.msra.mxu0 %v698
      %763 = vmatmul.bf16.gmra.mxu0 %v708
      %v764 = vpop.f32.mrf.mxu0
      %v765 = vadd.f32 0.0, %v764
      %v766 = vpop.f32.mrf.mxu0
      %v767 = vadd.f32 0.0, %v766
      %768 = vmatmul.bf16.gmra.mxu0 %v711
      %v769 = vpop.f32.mrf.mxu0
      %v770 = vadd.f32 0.0, %v769
      %v771 = vpop.f32.mrf.mxu0
      %v772 = vadd.f32 0.0, %v771
      %773 = vmatmul.bf16.gmra.mxu0 %v714
      %v774 = vpop.f32.mrf.mxu0
      %v775 = vadd.f32 0.0, %v774
      %v776 = vpop.f32.mrf.mxu0
      %v777 = vadd.f32 0.0, %v776
      %778 = vmatmul.bf16.gmra.mxu0 %v717
      %v779 = vpop.f32.mrf.mxu0
      %v780 = vadd.f32 0.0, %v779
      %v781 = vpop.f32.mrf.mxu0
      %v782 = vadd.f32 0.0, %v781
      %783 = vmatmul.bf16.gmra.mxu0 %v720
      %v784 = vpop.f32.mrf.mxu0
      %v785 = vadd.f32 0.0, %v784
      %v786 = vpop.f32.mrf.mxu0
      %v787 = vadd.f32 0.0, %v786
      %788 = vmatmul.bf16.gmra.mxu0 %v723
      %v789 = vpop.f32.mrf.mxu0
      %v790 = vadd.f32 0.0, %v789
      %v791 = vpop.f32.mrf.mxu0
      %v792 = vadd.f32 0.0, %v791
      %793 = vmatmul.bf16.gmra.mxu0 %v726
      %v794 = vpop.f32.mrf.mxu0
      %v795 = vadd.f32 0.0, %v794
      %v796 = vpop.f32.mrf.mxu0
      %v797 = vadd.f32 0.0, %v796
      %798 = vmatmul.bf16.gmra.mxu0 %v729
      %v799 = vpop.f32.mrf.mxu0
      %v800 = vadd.f32 0.0, %v799
      %v801 = vpop.f32.mrf.mxu0
      %v802 = vadd.f32 0.0, %v801
      %803 = vmatmul.bf16.gmra.mxu0 %v732
      %v804 = vpop.f32.mrf.mxu0
      %v805 = vadd.f32 0.0, %v804
      %v806 = vpop.f32.mrf.mxu0
      %v807 = vadd.f32 0.0, %v806
      %808 = vmatmul.bf16.gmra.mxu0 %v735
      %v809 = vpop.f32.mrf.mxu0
      %v810 = vadd.f32 0.0, %v809
      %v811 = vpop.f32.mrf.mxu0
      %v812 = vadd.f32 0.0, %v811
      %813 = vmatmul.bf16.gmra.mxu0 %v738
      %v814 = vpop.f32.mrf.mxu0
      %v815 = vadd.f32 0.0, %v814
      %v816 = vpop.f32.mrf.mxu0
      %v817 = vadd.f32 0.0, %v816
      %818 = vmatmul.bf16.gmra.mxu0 %v741
      %v819 = vpop.f32.mrf.mxu0
      %v820 = vadd.f32 0.0, %v819
      %v821 = vpop.f32.mrf.mxu0
      %v822 = vadd.f32 0.0, %v821
      %823 = vmatmul.bf16.gmra.mxu0 %v744
      %v824 = vpop.f32.mrf.mxu0
      %v825 = vadd.f32 0.0, %v824
      %v826 = vpop.f32.mrf.mxu0
      %v827 = vadd.f32 0.0, %v826
      %828 = vmatmul.bf16.gmra.mxu0 %v747
      %v829 = vpop.f32.mrf.mxu0
      %v830 = vadd.f32 0.0, %v829
      %v831 = vpop.f32.mrf.mxu0
      %v832 = vadd.f32 0.0, %v831
      %833 = vmatmul.bf16.gmra.mxu0 %v750
      %v834 = vpop.f32.mrf.mxu0
      %v835 = vadd.f32 0.0, %v834
      %v836 = vpop.f32.mrf.mxu0
      %v837 = vadd.f32 0.0, %v836
      %838 = vmatmul.bf16.gmra.mxu0 %v753
      %v839 = vpop.f32.mrf.mxu0
      %v840 = vadd.f32 0.0, %v839
      %v841 = vpop.f32.mrf.mxu0
      %v842 = vadd.f32 0.0, %v841
      %843 = vdwg.mxu0
      %v876 = vunpack.c.l.b16 %v183
      %v877 = vunpack.c.l.b16 %v184
      %v878 = vunpack.c.l.b16 %v185
      %v879 = vunpack.c.l.b16 %v186
      %v880 = vunpack.c.l.b16 %v187
      %v881 = vunpack.c.l.b16 %v188
      %v882 = vunpack.c.l.b16 %v189
      %v883 = vunpack.c.l.b16 %v190
      %v884 = vunpack.c.l.b16 %v191
      %v885 = vunpack.c.l.b16 %v192
      %v886 = vunpack.c.l.b16 %v193
      %v887 = vunpack.c.l.b16 %v194
      %v888 = vunpack.c.l.b16 %v195
      %v889 = vunpack.c.l.b16 %v196
      %v890 = vunpack.c.l.b16 %v197
      %v891 = vunpack.c.l.b16 %v198
      %v892 = vunpack.c.l.b16 %v199
      %v893 = vunpack.c.l.b16 %v200
      %v894 = vunpack.c.l.b16 %v201
      %v895 = vunpack.c.l.b16 %v202
      %v896 = vunpack.c.l.b16 %v203
      %v897 = vunpack.c.l.b16 %v204
      %v898 = vunpack.c.l.b16 %v205
      %v899 = vunpack.c.l.b16 %v206
      %v900 = vunpack.c.l.b16 %v207
      %v901 = vunpack.c.l.b16 %v208
      %v902 = vunpack.c.l.b16 %v209
      %v903 = vunpack.c.l.b16 %v210
      %v904 = vunpack.c.l.b16 %v211
      %v905 = vunpack.c.l.b16 %v212
      %v906 = vunpack.c.l.b16 %v213
      %v907 = vunpack.c.l.b16 %v214
      %v908 = vpack.c.b16 %v877, %v876
      %v909 = vpack.c.b16 %v879, %v878
      %v910 = vpack.c.b16 %v881, %v880
      %v911 = vpack.c.b16 %v883, %v882
      %v912 = vpack.c.b16 %v885, %v884
      %v913 = vpack.c.b16 %v887, %v886
      %v914 = vpack.c.b16 %v889, %v888
      %v915 = vpack.c.b16 %v891, %v890
      %v916 = vpack.c.b16 %v893, %v892
      %v917 = vpack.c.b16 %v895, %v894
      %v918 = vpack.c.b16 %v897, %v896
      %v919 = vpack.c.b16 %v899, %v898
      %v920 = vpack.c.b16 %v901, %v900
      %v921 = vpack.c.b16 %v903, %v902
      %v922 = vpack.c.b16 %v905, %v904
      %v923 = vpack.c.b16 %v907, %v906
      %v932 = vunpack.c.l.b16 %v215
      %v933 = vunpack.c.l.b16 %v216
      %v934 = vunpack.c.l.b16 %v217
      %v935 = vunpack.c.l.b16 %v218
      %v936 = vunpack.c.l.b16 %v219
      %v937 = vunpack.c.l.b16 %v220
      %v938 = vunpack.c.l.b16 %v221
      %v939 = vunpack.c.l.b16 %v222
      %v940 = vpack.c.b16 %v933, %v932
      %v941 = vpack.c.b16 %v935, %v934
      %v942 = vpack.c.b16 %v937, %v936
      %v943 = vpack.c.b16 %v939, %v938
      %v949 = vsel %vm706, %v908, 0
      %v952 = vsel %vm706, %v909, 0
      %v955 = vsel %vm706, %v910, 0
      %v958 = vsel %vm706, %v911, 0
      %v961 = vsel %vm706, %v912, 0
      %v964 = vsel %vm706, %v913, 0
      %v967 = vsel %vm706, %v914, 0
      %v970 = vsel %vm706, %v915, 0
      %v973 = vsel %vm706, %v916, 0
      %v976 = vsel %vm706, %v917, 0
      %v979 = vsel %vm706, %v918, 0
      %v982 = vsel %vm706, %v919, 0
      %v985 = vsel %vm706, %v920, 0
      %v988 = vsel %vm706, %v921, 0
      %v991 = vsel %vm706, %v922, 0
      %v994 = vsel %vm706, %v923, 0
      %996 = vmatpush.bf16.msra.mxu0 0
      %997 = vmatpush.bf16.msra.mxu0 0
      %998 = vmatpush.bf16.msra.mxu0 0
      %999 = vmatpush.bf16.msra.mxu0 0
      %1000 = vmatpush.bf16.msra.mxu0 %v943
      %1001 = vmatpush.bf16.msra.mxu0 %v942
      %1002 = vmatpush.bf16.msra.mxu0 %v941
      %1003 = vmatpush.bf16.msra.mxu0 %v940
      %1004 = vmatmul.bf16.gmra.mxu0 %v949
      %v1005 = vpop.f32.mrf.mxu0
      %v1006 = vadd.f32 %v765, %v1005
      %v1007 = vpop.f32.mrf.mxu0
      %v1008 = vadd.f32 %v767, %v1007
      %1009 = vmatmul.bf16.gmra.mxu0 %v952
      %v1010 = vpop.f32.mrf.mxu0
      %v1011 = vadd.f32 %v770, %v1010
      %v1012 = vpop.f32.mrf.mxu0
      %v1013 = vadd.f32 %v772, %v1012
      %1014 = vmatmul.bf16.gmra.mxu0 %v955
      %v1015 = vpop.f32.mrf.mxu0
      %v1016 = vadd.f32 %v775, %v1015
      %v1017 = vpop.f32.mrf.mxu0
      %v1018 = vadd.f32 %v777, %v1017
      %1019 = vmatmul.bf16.gmra.mxu0 %v958
      %v1020 = vpop.f32.mrf.mxu0
      %v1021 = vadd.f32 %v780, %v1020
      %v1022 = vpop.f32.mrf.mxu0
      %v1023 = vadd.f32 %v782, %v1022
      %1024 = vmatmul.bf16.gmra.mxu0 %v961
      %v1025 = vpop.f32.mrf.mxu0
      %v1026 = vadd.f32 %v785, %v1025
      %v1027 = vpop.f32.mrf.mxu0
      %v1028 = vadd.f32 %v787, %v1027
      %1029 = vmatmul.bf16.gmra.mxu0 %v964
      %v1030 = vpop.f32.mrf.mxu0
      %v1031 = vadd.f32 %v790, %v1030
      %v1032 = vpop.f32.mrf.mxu0
      %v1033 = vadd.f32 %v792, %v1032
      %1034 = vmatmul.bf16.gmra.mxu0 %v967
      %v1035 = vpop.f32.mrf.mxu0
      %v1036 = vadd.f32 %v795, %v1035
      %v1037 = vpop.f32.mrf.mxu0
      %v1038 = vadd.f32 %v797, %v1037
      %1039 = vmatmul.bf16.gmra.mxu0 %v970
      %v1040 = vpop.f32.mrf.mxu0
      %v1041 = vadd.f32 %v800, %v1040
      %v1042 = vpop.f32.mrf.mxu0
      %v1043 = vadd.f32 %v802, %v1042
      %1044 = vmatmul.bf16.gmra.mxu0 %v973
      %v1045 = vpop.f32.mrf.mxu0
      %v1046 = vadd.f32 %v805, %v1045
      %v1047 = vpop.f32.mrf.mxu0
      %v1048 = vadd.f32 %v807, %v1047
      %1049 = vmatmul.bf16.gmra.mxu0 %v976
      %v1050 = vpop.f32.mrf.mxu0
      %v1051 = vadd.f32 %v810, %v1050
      %v1052 = vpop.f32.mrf.mxu0
      %v1053 = vadd.f32 %v812, %v1052
      %1054 = vmatmul.bf16.gmra.mxu0 %v979
      %v1055 = vpop.f32.mrf.mxu0
      %v1056 = vadd.f32 %v815, %v1055
      %v1057 = vpop.f32.mrf.mxu0
      %v1058 = vadd.f32 %v817, %v1057
      %1059 = vmatmul.bf16.gmra.mxu0 %v982
      %v1060 = vpop.f32.mrf.mxu0
      %v1061 = vadd.f32 %v820, %v1060
      %v1062 = vpop.f32.mrf.mxu0
      %v1063 = vadd.f32 %v822, %v1062
      %1064 = vmatmul.bf16.gmra.mxu0 %v985
      %v1065 = vpop.f32.mrf.mxu0
      %v1066 = vadd.f32 %v825, %v1065
      %v1067 = vpop.f32.mrf.mxu0
      %v1068 = vadd.f32 %v827, %v1067
      %1069 = vmatmul.bf16.gmra.mxu0 %v988
      %v1070 = vpop.f32.mrf.mxu0
      %v1071 = vadd.f32 %v830, %v1070
      %v1072 = vpop.f32.mrf.mxu0
      %v1073 = vadd.f32 %v832, %v1072
      %1074 = vmatmul.bf16.gmra.mxu0 %v991
      %v1075 = vpop.f32.mrf.mxu0
      %v1076 = vadd.f32 %v835, %v1075
      %v1077 = vpop.f32.mrf.mxu0
      %v1078 = vadd.f32 %v837, %v1077
      %1079 = vmatmul.bf16.gmra.mxu0 %v994
      %v1080 = vpop.f32.mrf.mxu0
      %v1081 = vadd.f32 %v840, %v1080
      %v1082 = vpop.f32.mrf.mxu0
      %v1083 = vadd.f32 %v842, %v1082
      %1084 = vdwg.mxu0
      %v1085 = vld [vmem:[%s172] sm:$0xe]
      %v1086 = vld [vmem:[%s172 + $0xc] sm:$0xe]
      %v1087 = vld [vmem:[%s172 + $0x18] sm:$0xe]
      %v1088 = vld [vmem:[%s172 + $0x24] sm:$0xe]
      %v1089 = vld [vmem:[%s172 + $0x30] sm:$0xe]
      %v1090 = vld [vmem:[%s172 + $0x3c] sm:$0xe]
      %v1091 = vld [vmem:[%s172 + $0x48] sm:$0xe]
      %v1092 = vld [vmem:[%s172 + $0x54] sm:$0xe]
      %v1093 = vld [vmem:[%s172 + $0x60] sm:$0xe]
      %v1094 = vld [vmem:[%s172 + $0x6c] sm:$0xe]
      %v1095 = vld [vmem:[%s172 + $0x78] sm:$0xe]
      %v1096 = vld [vmem:[%s172 + $0x84] sm:$0xe]
      %v1097 = vld [vmem:[%s172 + $0x90] sm:$0xe]
      %v1098 = vld [vmem:[%s172 + $0x9c] sm:$0xe]
      %v1099 = vld [vmem:[%s172 + $0xa8] sm:$0xe]
      %v1100 = vld [vmem:[%s172 + $0xb4] sm:$0xe]
      %vm1133 = vcmask 1042432
      %vm1134 = vcmask 1046532
      %vm1135 = vmor %vm1133, %vm1134
      %v1136 = vrot.slane %v1085, 5
      %v1137 = vrot.slane %v1136, 4
      %v1138 = vrot.slane %v184, 5
      %v1139 = vsel %vm1135, %v1137, %v1138
      %v1140 = vrot.slane %v1138, 4
      %v1141 = vrot.slane %v223, 5
      %v1142 = vsel %vm1135, %v1140, %v1141
      %v1143 = vrot.slane %v1086, 5
      %v1144 = vrot.slane %v1143, 4
      %v1145 = vrot.slane %v186, 5
      %v1146 = vsel %vm1135, %v1144, %v1145
      %v1147 = vrot.slane %v1145, 4
      %v1148 = vrot.slane %v224, 5
      %v1149 = vsel %vm1135, %v1147, %v1148
      %v1150 = vrot.slane %v1087, 5
      %v1151 = vrot.slane %v1150, 4
      %v1152 = vrot.slane %v188, 5
      %v1153 = vsel %vm1135, %v1151, %v1152
      %v1154 = vrot.slane %v1152, 4
      %v1155 = vrot.slane %v225, 5
      %v1156 = vsel %vm1135, %v1154, %v1155
      %v1157 = vrot.slane %v1088, 5
      %v1158 = vrot.slane %v1157, 4
      %v1159 = vrot.slane %v190, 5
      %v1160 = vsel %vm1135, %v1158, %v1159
      %v1161 = vrot.slane %v1159, 4
      %v1162 = vrot.slane %v226, 5
      %v1163 = vsel %vm1135, %v1161, %v1162
      %v1164 = vrot.slane %v1089, 5
      %v1165 = vrot.slane %v1164, 4
      %v1166 = vrot.slane %v192, 5
      %v1167 = vsel %vm1135, %v1165, %v1166
      %v1168 = vrot.slane %v1166, 4
      %v1169 = vrot.slane %v227, 5
      %v1170 = vsel %vm1135, %v1168, %v1169
      %v1171 = vrot.slane %v1090, 5
      %v1172 = vrot.slane %v1171, 4
      %v1173 = vrot.slane %v194, 5
      %v1174 = vsel %vm1135, %v1172, %v1173
      %v1175 = vrot.slane %v1173, 4
      %v1176 = vrot.slane %v228, 5
      %v1177 = vsel %vm1135, %v1175, %v1176
      %v1178 = vrot.slane %v1091, 5
      %v1179 = vrot.slane %v1178, 4
      %v1180 = vrot.slane %v196, 5
      %v1181 = vsel %vm1135, %v1179, %v1180
      %v1182 = vrot.slane %v1180, 4
      %v1183 = vrot.slane %v229, 5
      %v1184 = vsel %vm1135, %v1182, %v1183
      %v1185 = vrot.slane %v1092, 5
      %v1186 = vrot.slane %v1185, 4
      %v1187 = vrot.slane %v198, 5
      %v1188 = vsel %vm1135, %v1186, %v1187
      %v1189 = vrot.slane %v1187, 4
      %v1190 = vrot.slane %v230, 5
      %v1191 = vsel %vm1135, %v1189, %v1190
      %v1192 = vrot.slane %v1093, 5
      %v1193 = vrot.slane %v1192, 4
      %v1194 = vrot.slane %v200, 5
      %v1195 = vsel %vm1135, %v1193, %v1194
      %v1196 = vrot.slane %v1194, 4
      %v1197 = vrot.slane %v231, 5
      %v1198 = vsel %vm1135, %v1196, %v1197
      %v1199 = vrot.slane %v1094, 5
      %v1200 = vrot.slane %v1199, 4
      %v1201 = vrot.slane %v202, 5
      %v1202 = vsel %vm1135, %v1200, %v1201
      %v1203 = vrot.slane %v1201, 4
      %v1204 = vrot.slane %v232, 5
      %v1205 = vsel %vm1135, %v1203, %v1204
      %v1206 = vrot.slane %v1095, 5
      %v1207 = vrot.slane %v1206, 4
      %v1208 = vrot.slane %v204, 5
      %v1209 = vsel %vm1135, %v1207, %v1208
      %v1210 = vrot.slane %v1208, 4
      %v1211 = vrot.slane %v233, 5
      %v1212 = vsel %vm1135, %v1210, %v1211
      %v1213 = vrot.slane %v1096, 5
      %v1214 = vrot.slane %v1213, 4
      %v1215 = vrot.slane %v206, 5
      %v1216 = vsel %vm1135, %v1214, %v1215
      %v1217 = vrot.slane %v1215, 4
      %v1218 = vrot.slane %v234, 5
      %v1219 = vsel %vm1135, %v1217, %v1218
      %v1220 = vrot.slane %v1097, 5
      %v1221 = vrot.slane %v1220, 4
      %v1222 = vrot.slane %v208, 5
      %v1223 = vsel %vm1135, %v1221, %v1222
      %v1224 = vrot.slane %v1222, 4
      %v1225 = vrot.slane %v235, 5
      %v1226 = vsel %vm1135, %v1224, %v1225
      %v1227 = vrot.slane %v1098, 5
      %v1228 = vrot.slane %v1227, 4
      %v1229 = vrot.slane %v210, 5
      %v1230 = vsel %vm1135, %v1228, %v1229
      %v1231 = vrot.slane %v1229, 4
      %v1232 = vrot.slane %v236, 5
      %v1233 = vsel %vm1135, %v1231, %v1232
      %v1234 = vrot.slane %v1099, 5
      %v1235 = vrot.slane %v1234, 4
      %v1236 = vrot.slane %v212, 5
      %v1237 = vsel %vm1135, %v1235, %v1236
      %v1238 = vrot.slane %v1236, 4
      %v1239 = vrot.slane %v237, 5
      %v1240 = vsel %vm1135, %v1238, %v1239
      %v1241 = vrot.slane %v1100, 5
      %v1242 = vrot.slane %v1241, 4
      %v1243 = vrot.slane %v214, 5
      %v1244 = vsel %vm1135, %v1242, %v1243
      %v1245 = vrot.slane %v1243, 4
      %v1246 = vrot.slane %v238, 5
      %v1247 = vsel %vm1135, %v1245, %v1246
      %v1248 = vld [vmem:[%s1 + $0x40] sm:$0xf]
      %v1249 = vld [vmem:[%s1 + $0x44] sm:$0xf]
      %v1250 = vld [vmem:[%s1 + $0x48] sm:$0xf]
      %v1251 = vld [vmem:[%s1 + $0x4c] sm:$0xf]
      %v1252 = vld [vmem:[%s1 + $0x50] sm:$0xf]
      %v1253 = vld [vmem:[%s1 + $0x54] sm:$0xf]
      %v1254 = vld [vmem:[%s1 + $0x58] sm:$0xf]
      %v1255 = vld [vmem:[%s1 + $0x5c] sm:$0xf]
      %v1256 = vunpack.c.l.b16 %v1139
      %v1257 = vunpack.c.l.b16 %v1142
      %v1258 = vunpack.c.l.b16 %v1146
      %v1259 = vunpack.c.l.b16 %v1149
      %v1260 = vunpack.c.l.b16 %v1153
      %v1261 = vunpack.c.l.b16 %v1156
      %v1262 = vunpack.c.l.b16 %v1160
      %v1263 = vunpack.c.l.b16 %v1163
      %v1264 = vunpack.c.l.b16 %v1167
      %v1265 = vunpack.c.l.b16 %v1170
      %v1266 = vunpack.c.l.b16 %v1174
      %v1267 = vunpack.c.l.b16 %v1177
      %v1268 = vunpack.c.l.b16 %v1181
      %v1269 = vunpack.c.l.b16 %v1184
      %v1270 = vunpack.c.l.b16 %v1188
      %v1271 = vunpack.c.l.b16 %v1191
      %v1272 = vunpack.c.l.b16 %v1195
      %v1273 = vunpack.c.l.b16 %v1198
      %v1274 = vunpack.c.l.b16 %v1202
      %v1275 = vunpack.c.l.b16 %v1205
      %v1276 = vunpack.c.l.b16 %v1209
      %v1277 = vunpack.c.l.b16 %v1212
      %v1278 = vunpack.c.l.b16 %v1216
      %v1279 = vunpack.c.l.b16 %v1219
      %v1280 = vunpack.c.l.b16 %v1223
      %v1281 = vunpack.c.l.b16 %v1226
      %v1282 = vunpack.c.l.b16 %v1230
      %v1283 = vunpack.c.l.b16 %v1233
      %v1284 = vunpack.c.l.b16 %v1237
      %v1285 = vunpack.c.l.b16 %v1240
      %v1286 = vunpack.c.l.b16 %v1244
      %v1287 = vunpack.c.l.b16 %v1247
      %v1288 = vpack.c.b16 %v1257, %v1256
      %v1289 = vpack.c.b16 %v1259, %v1258
      %v1290 = vpack.c.b16 %v1261, %v1260
      %v1291 = vpack.c.b16 %v1263, %v1262
      %v1292 = vpack.c.b16 %v1265, %v1264
      %v1293 = vpack.c.b16 %v1267, %v1266
      %v1294 = vpack.c.b16 %v1269, %v1268
      %v1295 = vpack.c.b16 %v1271, %v1270
      %v1296 = vpack.c.b16 %v1273, %v1272
      %v1297 = vpack.c.b16 %v1275, %v1274
      %v1298 = vpack.c.b16 %v1277, %v1276
      %v1299 = vpack.c.b16 %v1279, %v1278
      %v1300 = vpack.c.b16 %v1281, %v1280
      %v1301 = vpack.c.b16 %v1283, %v1282
      %v1302 = vpack.c.b16 %v1285, %v1284
      %v1303 = vpack.c.b16 %v1287, %v1286
      %v1312 = vunpack.c.l.b16 %v1248
      %v1313 = vunpack.c.l.b16 %v1249
      %v1314 = vunpack.c.l.b16 %v1250
      %v1315 = vunpack.c.l.b16 %v1251
      %v1316 = vunpack.c.l.b16 %v1252
      %v1317 = vunpack.c.l.b16 %v1253
      %v1318 = vunpack.c.l.b16 %v1254
      %v1319 = vunpack.c.l.b16 %v1255
      %v1320 = vpack.c.b16 %v1313, %v1312
      %v1321 = vpack.c.b16 %v1315, %v1314
      %v1322 = vpack.c.b16 %v1317, %v1316
      %v1323 = vpack.c.b16 %v1319, %v1318
      %v1329 = vsel %vm706, %v1288, 0
      %v1332 = vsel %vm706, %v1289, 0
      %v1335 = vsel %vm706, %v1290, 0
      %v1338 = vsel %vm706, %v1291, 0
      %v1341 = vsel %vm706, %v1292, 0
      %v1344 = vsel %vm706, %v1293, 0
      %v1347 = vsel %vm706, %v1294, 0
      %v1350 = vsel %vm706, %v1295, 0
      %v1353 = vsel %vm706, %v1296, 0
      %v1356 = vsel %vm706, %v1297, 0
      %v1359 = vsel %vm706, %v1298, 0
      %v1362 = vsel %vm706, %v1299, 0
      %v1365 = vsel %vm706, %v1300, 0
      %v1368 = vsel %vm706, %v1301, 0
      %v1371 = vsel %vm706, %v1302, 0
      %v1374 = vsel %vm706, %v1303, 0
      %1376 = vmatpush.bf16.msra.mxu0 0
      %1377 = vmatpush.bf16.msra.mxu0 0
      %1378 = vmatpush.bf16.msra.mxu0 0
      %1379 = vmatpush.bf16.msra.mxu0 0
      %1380 = vmatpush.bf16.msra.mxu0 %v1323
      %1381 = vmatpush.bf16.msra.mxu0 %v1322
      %1382 = vmatpush.bf16.msra.mxu0 %v1321
      %1383 = vmatpush.bf16.msra.mxu0 %v1320
      %1384 = vmatmul.bf16.gmra.mxu0 %v1329
      %v1385 = vpop.f32.mrf.mxu0
      %v1386 = vadd.f32 0.0, %v1385
      %v1387 = vpop.f32.mrf.mxu0
      %v1388 = vadd.f32 0.0, %v1387
      %1389 = vmatmul.bf16.gmra.mxu0 %v1332
      %v1390 = vpop.f32.mrf.mxu0
      %v1391 = vadd.f32 0.0, %v1390
      %v1392 = vpop.f32.mrf.mxu0
      %v1393 = vadd.f32 0.0, %v1392
      %1394 = vmatmul.bf16.gmra.mxu0 %v1335
      %v1395 = vpop.f32.mrf.mxu0
      %v1396 = vadd.f32 0.0, %v1395
      %v1397 = vpop.f32.mrf.mxu0
      %v1398 = vadd.f32 0.0, %v1397
      %1399 = vmatmul.bf16.gmra.mxu0 %v1338
      %v1400 = vpop.f32.mrf.mxu0
      %v1401 = vadd.f32 0.0, %v1400
      %v1402 = vpop.f32.mrf.mxu0
      %v1403 = vadd.f32 0.0, %v1402
      %1404 = vmatmul.bf16.gmra.mxu0 %v1341
      %v1405 = vpop.f32.mrf.mxu0
      %v1406 = vadd.f32 0.0, %v1405
      %v1407 = vpop.f32.mrf.mxu0
      %v1408 = vadd.f32 0.0, %v1407
      %1409 = vmatmul.bf16.gmra.mxu0 %v1344
      %v1410 = vpop.f32.mrf.mxu0
      %v1411 = vadd.f32 0.0, %v1410
      %v1412 = vpop.f32.mrf.mxu0
      %v1413 = vadd.f32 0.0, %v1412
      %1414 = vmatmul.bf16.gmra.mxu0 %v1347
      %v1415 = vpop.f32.mrf.mxu0
      %v1416 = vadd.f32 0.0, %v1415
      %v1417 = vpop.f32.mrf.mxu0
      %v1418 = vadd.f32 0.0, %v1417
      %1419 = vmatmul.bf16.gmra.mxu0 %v1350
      %v1420 = vpop.f32.mrf.mxu0
      %v1421 = vadd.f32 0.0, %v1420
      %v1422 = vpop.f32.mrf.mxu0
      %v1423 = vadd.f32 0.0, %v1422
      %1424 = vmatmul.bf16.gmra.mxu0 %v1353
      %v1425 = vpop.f32.mrf.mxu0
      %v1426 = vadd.f32 0.0, %v1425
      %v1427 = vpop.f32.mrf.mxu0
      %v1428 = vadd.f32 0.0, %v1427
      %1429 = vmatmul.bf16.gmra.mxu0 %v1356
      %v1430 = vpop.f32.mrf.mxu0
      %v1431 = vadd.f32 0.0, %v1430
      %v1432 = vpop.f32.mrf.mxu0
      %v1433 = vadd.f32 0.0, %v1432
      %1434 = vmatmul.bf16.gmra.mxu0 %v1359
      %v1435 = vpop.f32.mrf.mxu0
      %v1436 = vadd.f32 0.0, %v1435
      %v1437 = vpop.f32.mrf.mxu0
      %v1438 = vadd.f32 0.0, %v1437
      %1439 = vmatmul.bf16.gmra.mxu0 %v1362
      %v1440 = vpop.f32.mrf.mxu0
      %v1441 = vadd.f32 0.0, %v1440
      %v1442 = vpop.f32.mrf.mxu0
      %v1443 = vadd.f32 0.0, %v1442
      %1444 = vmatmul.bf16.gmra.mxu0 %v1365
      %v1445 = vpop.f32.mrf.mxu0
      %v1446 = vadd.f32 0.0, %v1445
      %v1447 = vpop.f32.mrf.mxu0
      %v1448 = vadd.f32 0.0, %v1447
      %1449 = vmatmul.bf16.gmra.mxu0 %v1368
      %v1450 = vpop.f32.mrf.mxu0
      %v1451 = vadd.f32 0.0, %v1450
      %v1452 = vpop.f32.mrf.mxu0
      %v1453 = vadd.f32 0.0, %v1452
      %1454 = vmatmul.bf16.gmra.mxu0 %v1371
      %v1455 = vpop.f32.mrf.mxu0
      %v1456 = vadd.f32 0.0, %v1455
      %v1457 = vpop.f32.mrf.mxu0
      %v1458 = vadd.f32 0.0, %v1457
      %1459 = vmatmul.bf16.gmra.mxu0 %v1374
      %v1460 = vpop.f32.mrf.mxu0
      %v1461 = vadd.f32 0.0, %v1460
      %v1462 = vpop.f32.mrf.mxu0
      %v1463 = vadd.f32 0.0, %v1462
      %1464 = vdwg.mxu0
      %v1465 = vadd.f32 %v1006, %v1386
      %v1466 = vadd.f32 %v1008, %v1388
      %v1467 = vadd.f32 %v1011, %v1391
      %v1468 = vadd.f32 %v1013, %v1393
      %v1469 = vadd.f32 %v1016, %v1396
      %v1470 = vadd.f32 %v1018, %v1398
      %v1471 = vadd.f32 %v1021, %v1401
      %v1472 = vadd.f32 %v1023, %v1403
      %v1473 = vadd.f32 %v1026, %v1406
      %v1474 = vadd.f32 %v1028, %v1408
      %v1475 = vadd.f32 %v1031, %v1411
      %v1476 = vadd.f32 %v1033, %v1413
      %v1477 = vadd.f32 %v1036, %v1416
      %v1478 = vadd.f32 %v1038, %v1418
      %v1479 = vadd.f32 %v1041, %v1421
      %v1480 = vadd.f32 %v1043, %v1423
      %v1481 = vadd.f32 %v1046, %v1426
      %v1482 = vadd.f32 %v1048, %v1428
      %v1483 = vadd.f32 %v1051, %v1431
      %v1484 = vadd.f32 %v1053, %v1433
      %v1485 = vadd.f32 %v1056, %v1436
      %v1486 = vadd.f32 %v1058, %v1438
      %v1487 = vadd.f32 %v1061, %v1441
      %v1488 = vadd.f32 %v1063, %v1443
      %v1489 = vadd.f32 %v1066, %v1446
      %v1490 = vadd.f32 %v1068, %v1448
      %v1491 = vadd.f32 %v1071, %v1451
      %v1492 = vadd.f32 %v1073, %v1453
      %v1493 = vadd.f32 %v1076, %v1456
      %v1494 = vadd.f32 %v1078, %v1458
      %v1495 = vadd.f32 %v1081, %v1461
      %v1496 = vadd.f32 %v1083, %v1463
      %s1497 = scalar_lea.vmem %s172, 12
      %v1498 = vld [vmem:[%s1497] sm:$0xf]
      %v1499 = vld [vmem:[%s1497 + $0x4] sm:$0xf]
      %v1500 = vld [vmem:[%s1497 + $0xc] sm:$0xf]
      %v1501 = vld [vmem:[%s1497 + $0x10] sm:$0xf]
      %v1502 = vld [vmem:[%s1497 + $0x18] sm:$0xf]
      %v1503 = vld [vmem:[%s1497 + $0x1c] sm:$0xf]
      %v1504 = vld [vmem:[%s1497 + $0x24] sm:$0xf]
      %v1505 = vld [vmem:[%s1497 + $0x28] sm:$0xf]
      %v1506 = vld [vmem:[%s1497 + $0x30] sm:$0xf]
      %v1507 = vld [vmem:[%s1497 + $0x34] sm:$0xf]
      %v1508 = vld [vmem:[%s1497 + $0x3c] sm:$0xf]
      %v1509 = vld [vmem:[%s1497 + $0x40] sm:$0xf]
      %v1510 = vld [vmem:[%s1497 + $0x48] sm:$0xf]
      %v1511 = vld [vmem:[%s1497 + $0x4c] sm:$0xf]
      %v1512 = vld [vmem:[%s1497 + $0x54] sm:$0xf]
      %v1513 = vld [vmem:[%s1497 + $0x58] sm:$0xf]
      %v1514 = vld [vmem:[%s1497 + $0x60] sm:$0xf]
      %v1515 = vld [vmem:[%s1497 + $0x64] sm:$0xf]
      %v1516 = vld [vmem:[%s1497 + $0x6c] sm:$0xf]
      %v1517 = vld [vmem:[%s1497 + $0x70] sm:$0xf]
      %v1518 = vld [vmem:[%s1497 + $0x78] sm:$0xf]
      %v1519 = vld [vmem:[%s1497 + $0x7c] sm:$0xf]
      %v1520 = vld [vmem:[%s1497 + $0x84] sm:$0xf]
      %v1521 = vld [vmem:[%s1497 + $0x88] sm:$0xf]
      %v1522 = vld [vmem:[%s1497 + $0x90] sm:$0xf]
      %v1523 = vld [vmem:[%s1497 + $0x94] sm:$0xf]
      %v1524 = vld [vmem:[%s1497 + $0x9c] sm:$0xf]
      %v1525 = vld [vmem:[%s1497 + $0xa0] sm:$0xf]
      %v1526 = vld [vmem:[%s1497 + $0xa8] sm:$0xf]
      %v1527 = vld [vmem:[%s1497 + $0xac] sm:$0xf]
      %v1528 = vld [vmem:[%s1497 + $0xb4] sm:$0xf]
      %v1529 = vld [vmem:[%s1497 + $0xb8] sm:$0xf]
      %v1530 = vld [vmem:[%s1 + $0x60] sm:$0xf]
      %v1531 = vld [vmem:[%s1 + $0x64] sm:$0xf]
      %v1532 = vld [vmem:[%s1 + $0x68] sm:$0xf]
      %v1533 = vld [vmem:[%s1 + $0x6c] sm:$0xf]
      %v1534 = vld [vmem:[%s1 + $0x70] sm:$0xf]
      %v1535 = vld [vmem:[%s1 + $0x74] sm:$0xf]
      %v1536 = vld [vmem:[%s1 + $0x78] sm:$0xf]
      %v1537 = vld [vmem:[%s1 + $0x7c] sm:$0xf]
      %v1570 = vunpack.c.l.b16 %v1498
      %v1571 = vunpack.c.l.b16 %v1499
      %v1572 = vunpack.c.l.b16 %v1500
      %v1573 = vunpack.c.l.b16 %v1501
      %v1574 = vunpack.c.l.b16 %v1502
      %v1575 = vunpack.c.l.b16 %v1503
      %v1576 = vunpack.c.l.b16 %v1504
      %v1577 = vunpack.c.l.b16 %v1505
      %v1578 = vunpack.c.l.b16 %v1506
      %v1579 = vunpack.c.l.b16 %v1507
      %v1580 = vunpack.c.l.b16 %v1508
      %v1581 = vunpack.c.l.b16 %v1509
      %v1582 = vunpack.c.l.b16 %v1510
      %v1583 = vunpack.c.l.b16 %v1511
      %v1584 = vunpack.c.l.b16 %v1512
      %v1585 = vunpack.c.l.b16 %v1513
      %v1586 = vunpack.c.l.b16 %v1514
      %v1587 = vunpack.c.l.b16 %v1515
      %v1588 = vunpack.c.l.b16 %v1516
      %v1589 = vunpack.c.l.b16 %v1517
      %v1590 = vunpack.c.l.b16 %v1518
      %v1591 = vunpack.c.l.b16 %v1519
      %v1592 = vunpack.c.l.b16 %v1520
      %v1593 = vunpack.c.l.b16 %v1521
      %v1594 = vunpack.c.l.b16 %v1522
      %v1595 = vunpack.c.l.b16 %v1523
      %v1596 = vunpack.c.l.b16 %v1524
      %v1597 = vunpack.c.l.b16 %v1525
      %v1598 = vunpack.c.l.b16 %v1526
      %v1599 = vunpack.c.l.b16 %v1527
      %v1600 = vunpack.c.l.b16 %v1528
      %v1601 = vunpack.c.l.b16 %v1529
      %v1602 = vpack.c.b16 %v1571, %v1570
      %v1603 = vpack.c.b16 %v1573, %v1572
      %v1604 = vpack.c.b16 %v1575, %v1574
      %v1605 = vpack.c.b16 %v1577, %v1576
      %v1606 = vpack.c.b16 %v1579, %v1578
      %v1607 = vpack.c.b16 %v1581, %v1580
      %v1608 = vpack.c.b16 %v1583, %v1582
      %v1609 = vpack.c.b16 %v1585, %v1584
      %v1610 = vpack.c.b16 %v1587, %v1586
      %v1611 = vpack.c.b16 %v1589, %v1588
      %v1612 = vpack.c.b16 %v1591, %v1590
      %v1613 = vpack.c.b16 %v1593, %v1592
      %v1614 = vpack.c.b16 %v1595, %v1594
      %v1615 = vpack.c.b16 %v1597, %v1596
      %v1616 = vpack.c.b16 %v1599, %v1598
      %v1617 = vpack.c.b16 %v1601, %v1600
      %v1626 = vunpack.c.l.b16 %v1530
      %v1627 = vunpack.c.l.b16 %v1531
      %v1628 = vunpack.c.l.b16 %v1532
      %v1629 = vunpack.c.l.b16 %v1533
      %v1630 = vunpack.c.l.b16 %v1534
      %v1631 = vunpack.c.l.b16 %v1535
      %v1632 = vunpack.c.l.b16 %v1536
      %v1633 = vunpack.c.l.b16 %v1537
      %v1634 = vpack.c.b16 %v1627, %v1626
      %v1635 = vpack.c.b16 %v1629, %v1628
      %v1636 = vpack.c.b16 %v1631, %v1630
      %v1637 = vpack.c.b16 %v1633, %v1632
      %v1643 = vsel %vm706, %v1602, 0
      %v1646 = vsel %vm706, %v1603, 0
      %v1649 = vsel %vm706, %v1604, 0
      %v1652 = vsel %vm706, %v1605, 0
      %v1655 = vsel %vm706, %v1606, 0
      %v1658 = vsel %vm706, %v1607, 0
      %v1661 = vsel %vm706, %v1608, 0
      %v1664 = vsel %vm706, %v1609, 0
      %v1667 = vsel %vm706, %v1610, 0
      %v1670 = vsel %vm706, %v1611, 0
      %v1673 = vsel %vm706, %v1612, 0
      %v1676 = vsel %vm706, %v1613, 0
      %v1679 = vsel %vm706, %v1614, 0
      %v1682 = vsel %vm706, %v1615, 0
      %v1685 = vsel %vm706, %v1616, 0
      %v1688 = vsel %vm706, %v1617, 0
      %1690 = vmatpush.bf16.msra.mxu0 0
      %1691 = vmatpush.bf16.msra.mxu0 0
      %1692 = vmatpush.bf16.msra.mxu0 0
      %1693 = vmatpush.bf16.msra.mxu0 0
      %1694 = vmatpush.bf16.msra.mxu0 %v1637
      %1695 = vmatpush.bf16.msra.mxu0 %v1636
      %1696 = vmatpush.bf16.msra.mxu0 %v1635
      %1697 = vmatpush.bf16.msra.mxu0 %v1634
      %1698 = vmatmul.bf16.gmra.mxu0 %v1643
      %v1699 = vpop.f32.mrf.mxu0
      %v1700 = vadd.f32 0.0, %v1699
      %v1701 = vpop.f32.mrf.mxu0
      %v1702 = vadd.f32 0.0, %v1701
      %1703 = vmatmul.bf16.gmra.mxu0 %v1646
      %v1704 = vpop.f32.mrf.mxu0
      %v1705 = vadd.f32 0.0, %v1704
      %v1706 = vpop.f32.mrf.mxu0
      %v1707 = vadd.f32 0.0, %v1706
      %1708 = vmatmul.bf16.gmra.mxu0 %v1649
      %v1709 = vpop.f32.mrf.mxu0
      %v1710 = vadd.f32 0.0, %v1709
      %v1711 = vpop.f32.mrf.mxu0
      %v1712 = vadd.f32 0.0, %v1711
      %1713 = vmatmul.bf16.gmra.mxu0 %v1652
      %v1714 = vpop.f32.mrf.mxu0
      %v1715 = vadd.f32 0.0, %v1714
      %v1716 = vpop.f32.mrf.mxu0
      %v1717 = vadd.f32 0.0, %v1716
      %1718 = vmatmul.bf16.gmra.mxu0 %v1655
      %v1719 = vpop.f32.mrf.mxu0
      %v1720 = vadd.f32 0.0, %v1719
      %v1721 = vpop.f32.mrf.mxu0
      %v1722 = vadd.f32 0.0, %v1721
      %1723 = vmatmul.bf16.gmra.mxu0 %v1658
      %v1724 = vpop.f32.mrf.mxu0
      %v1725 = vadd.f32 0.0, %v1724
      %v1726 = vpop.f32.mrf.mxu0
      %v1727 = vadd.f32 0.0, %v1726
      %1728 = vmatmul.bf16.gmra.mxu0 %v1661
      %v1729 = vpop.f32.mrf.mxu0
      %v1730 = vadd.f32 0.0, %v1729
      %v1731 = vpop.f32.mrf.mxu0
      %v1732 = vadd.f32 0.0, %v1731
      %1733 = vmatmul.bf16.gmra.mxu0 %v1664
      %v1734 = vpop.f32.mrf.mxu0
      %v1735 = vadd.f32 0.0, %v1734
      %v1736 = vpop.f32.mrf.mxu0
      %v1737 = vadd.f32 0.0, %v1736
      %1738 = vmatmul.bf16.gmra.mxu0 %v1667
      %v1739 = vpop.f32.mrf.mxu0
      %v1740 = vadd.f32 0.0, %v1739
      %v1741 = vpop.f32.mrf.mxu0
      %v1742 = vadd.f32 0.0, %v1741
      %1743 = vmatmul.bf16.gmra.mxu0 %v1670
      %v1744 = vpop.f32.mrf.mxu0
      %v1745 = vadd.f32 0.0, %v1744
      %v1746 = vpop.f32.mrf.mxu0
      %v1747 = vadd.f32 0.0, %v1746
      %1748 = vmatmul.bf16.gmra.mxu0 %v1673
      %v1749 = vpop.f32.mrf.mxu0
      %v1750 = vadd.f32 0.0, %v1749
      %v1751 = vpop.f32.mrf.mxu0
      %v1752 = vadd.f32 0.0, %v1751
      %1753 = vmatmul.bf16.gmra.mxu0 %v1676
      %v1754 = vpop.f32.mrf.mxu0
      %v1755 = vadd.f32 0.0, %v1754
      %v1756 = vpop.f32.mrf.mxu0
      %v1757 = vadd.f32 0.0, %v1756
      %1758 = vmatmul.bf16.gmra.mxu0 %v1679
      %v1759 = vpop.f32.mrf.mxu0
      %v1760 = vadd.f32 0.0, %v1759
      %v1761 = vpop.f32.mrf.mxu0
      %v1762 = vadd.f32 0.0, %v1761
      %1763 = vmatmul.bf16.gmra.mxu0 %v1682
      %v1764 = vpop.f32.mrf.mxu0
      %v1765 = vadd.f32 0.0, %v1764
      %v1766 = vpop.f32.mrf.mxu0
      %v1767 = vadd.f32 0.0, %v1766
      %1768 = vmatmul.bf16.gmra.mxu0 %v1685
      %v1769 = vpop.f32.mrf.mxu0
      %v1770 = vadd.f32 0.0, %v1769
      %v1771 = vpop.f32.mrf.mxu0
      %v1772 = vadd.f32 0.0, %v1771
      %1773 = vmatmul.bf16.gmra.mxu0 %v1688
      %v1774 = vpop.f32.mrf.mxu0
      %v1775 = vadd.f32 0.0, %v1774
      %v1776 = vpop.f32.mrf.mxu0
      %v1777 = vadd.f32 0.0, %v1776
      %1778 = vdwg.mxu0
      %v1779 = vadd.f32 %v1465, %v1700
      %v1780 = vadd.f32 %v1466, %v1702
      %v1781 = vadd.f32 %v1467, %v1705
      %v1782 = vadd.f32 %v1468, %v1707
      %v1783 = vadd.f32 %v1469, %v1710
      %v1784 = vadd.f32 %v1470, %v1712
      %v1785 = vadd.f32 %v1471, %v1715
      %v1786 = vadd.f32 %v1472, %v1717
      %v1787 = vadd.f32 %v1473, %v1720
      %v1788 = vadd.f32 %v1474, %v1722
      %v1789 = vadd.f32 %v1475, %v1725
      %v1790 = vadd.f32 %v1476, %v1727
      %v1791 = vadd.f32 %v1477, %v1730
      %v1792 = vadd.f32 %v1478, %v1732
      %v1793 = vadd.f32 %v1479, %v1735
      %v1794 = vadd.f32 %v1480, %v1737
      %v1795 = vadd.f32 %v1481, %v1740
      %v1796 = vadd.f32 %v1482, %v1742
      %v1797 = vadd.f32 %v1483, %v1745
      %v1798 = vadd.f32 %v1484, %v1747
      %v1799 = vadd.f32 %v1485, %v1750
      %v1800 = vadd.f32 %v1486, %v1752
      %v1801 = vadd.f32 %v1487, %v1755
      %v1802 = vadd.f32 %v1488, %v1757
      %v1803 = vadd.f32 %v1489, %v1760
      %v1804 = vadd.f32 %v1490, %v1762
      %v1805 = vadd.f32 %v1491, %v1765
      %v1806 = vadd.f32 %v1492, %v1767
      %v1807 = vadd.f32 %v1493, %v1770
      %v1808 = vadd.f32 %v1494, %v1772
      %v1809 = vadd.f32 %v1495, %v1775
      %v1810 = vadd.f32 %v1496, %v1777
      %v1811 = vld [vmem:[%s1497] sm:$0xf]
      %v1812 = vld [vmem:[%s1497 + $0x4] sm:$0xf]
      %v1813 = vld [vmem:[%s1497 + $0x8] sm:$0x1]
      %v1814 = vld [vmem:[%s1497 + $0xc] sm:$0xf]
      %v1815 = vld [vmem:[%s1497 + $0x10] sm:$0xf]
      %v1816 = vld [vmem:[%s1497 + $0x14] sm:$0x1]
      %v1817 = vld [vmem:[%s1497 + $0x18] sm:$0xf]
      %v1818 = vld [vmem:[%s1497 + $0x1c] sm:$0xf]
      %v1819 = vld [vmem:[%s1497 + $0x20] sm:$0x1]
      %v1820 = vld [vmem:[%s1497 + $0x24] sm:$0xf]
      %v1821 = vld [vmem:[%s1497 + $0x28] sm:$0xf]
      %v1822 = vld [vmem:[%s1497 + $0x2c] sm:$0x1]
      %v1823 = vld [vmem:[%s1497 + $0x30] sm:$0xf]
      %v1824 = vld [vmem:[%s1497 + $0x34] sm:$0xf]
      %v1825 = vld [vmem:[%s1497 + $0x38] sm:$0x1]
      %v1826 = vld [vmem:[%s1497 + $0x3c] sm:$0xf]
      %v1827 = vld [vmem:[%s1497 + $0x40] sm:$0xf]
      %v1828 = vld [vmem:[%s1497 + $0x44] sm:$0x1]
      %v1829 = vld [vmem:[%s1497 + $0x48] sm:$0xf]
      %v1830 = vld [vmem:[%s1497 + $0x4c] sm:$0xf]
      %v1831 = vld [vmem:[%s1497 + $0x50] sm:$0x1]
      %v1832 = vld [vmem:[%s1497 + $0x54] sm:$0xf]
      %v1833 = vld [vmem:[%s1497 + $0x58] sm:$0xf]
      %v1834 = vld [vmem:[%s1497 + $0x5c] sm:$0x1]
      %v1835 = vld [vmem:[%s1497 + $0x60] sm:$0xf]
      %v1836 = vld [vmem:[%s1497 + $0x64] sm:$0xf]
      %v1837 = vld [vmem:[%s1497 + $0x68] sm:$0x1]
      %v1838 = vld [vmem:[%s1497 + $0x6c] sm:$0xf]
      %v1839 = vld [vmem:[%s1497 + $0x70] sm:$0xf]
      %v1840 = vld [vmem:[%s1497 + $0x74] sm:$0x1]
      %v1841 = vld [vmem:[%s1497 + $0x78] sm:$0xf]
      %v1842 = vld [vmem:[%s1497 + $0x7c] sm:$0xf]
      %v1843 = vld [vmem:[%s1497 + $0x80] sm:$0x1]
      %v1844 = vld [vmem:[%s1497 + $0x84] sm:$0xf]
      %v1845 = vld [vmem:[%s1497 + $0x88] sm:$0xf]
      %v1846 = vld [vmem:[%s1497 + $0x8c] sm:$0x1]
      %v1847 = vld [vmem:[%s1497 + $0x90] sm:$0xf]
      %v1848 = vld [vmem:[%s1497 + $0x94] sm:$0xf]
      %v1849 = vld [vmem:[%s1497 + $0x98] sm:$0x1]
      %v1850 = vld [vmem:[%s1497 + $0x9c] sm:$0xf]
      %v1851 = vld [vmem:[%s1497 + $0xa0] sm:$0xf]
      %v1852 = vld [vmem:[%s1497 + $0xa4] sm:$0x1]
      %v1853 = vld [vmem:[%s1497 + $0xa8] sm:$0xf]
      %v1854 = vld [vmem:[%s1497 + $0xac] sm:$0xf]
      %v1855 = vld [vmem:[%s1497 + $0xb0] sm:$0x1]
      %v1856 = vld [vmem:[%s1497 + $0xb4] sm:$0xf]
      %v1857 = vld [vmem:[%s1497 + $0xb8] sm:$0xf]
      %v1858 = vld [vmem:[%s1497 + $0xbc] sm:$0x1]
      %v1860 = vshrl.u32 %v1811, 16
      %v1862 = vrot.slane %v1860, 4
      %v1863 = vshll.u32 %v1811, 16
      %v1865 = vrot.slane %v1863, 5
      %v1866 = vor.u32 %v1862, %v1865
      %v1867 = vrot.slane %v1866, 4
      %v1869 = vshll.u32 %v1812, 16
      %v1871 = vrot.slane %v1869, 5
      %v1872 = vsel %vm241, %v1867, %v1871
      %v1873 = vshrl.u32 %v1812, 16
      %v1875 = vrot.slane %v1873, 4
      %v1876 = vor.u32 %v1875, %v1871
      %v1877 = vrot.slane %v1876, 4
      %v1879 = vshll.u32 %v1813, 16
      %v1881 = vrot.slane %v1879, 5
      %v1882 = vsel %vm241, %v1877, %v1881
      %v1884 = vshrl.u32 %v1814, 16
      %v1886 = vrot.slane %v1884, 4
      %v1887 = vshll.u32 %v1814, 16
      %v1889 = vrot.slane %v1887, 5
      %v1890 = vor.u32 %v1886, %v1889
      %v1891 = vrot.slane %v1890, 4
      %v1893 = vshll.u32 %v1815, 16
      %v1895 = vrot.slane %v1893, 5
      %v1896 = vsel %vm241, %v1891, %v1895
      %v1897 = vshrl.u32 %v1815, 16
      %v1899 = vrot.slane %v1897, 4
      %v1900 = vor.u32 %v1899, %v1895
      %v1901 = vrot.slane %v1900, 4
      %v1903 = vshll.u32 %v1816, 16
      %v1905 = vrot.slane %v1903, 5
      %v1906 = vsel %vm241, %v1901, %v1905
      %v1908 = vshrl.u32 %v1817, 16
      %v1910 = vrot.slane %v1908, 4
      %v1911 = vshll.u32 %v1817, 16
      %v1913 = vrot.slane %v1911, 5
      %v1914 = vor.u32 %v1910, %v1913
      %v1915 = vrot.slane %v1914, 4
      %v1917 = vshll.u32 %v1818, 16
      %v1919 = vrot.slane %v1917, 5
      %v1920 = vsel %vm241, %v1915, %v1919
      %v1921 = vshrl.u32 %v1818, 16
      %v1923 = vrot.slane %v1921, 4
      %v1924 = vor.u32 %v1923, %v1919
      %v1925 = vrot.slane %v1924, 4
      %v1927 = vshll.u32 %v1819, 16
      %v1929 = vrot.slane %v1927, 5
      %v1930 = vsel %vm241, %v1925, %v1929
      %v1932 = vshrl.u32 %v1820, 16
      %v1934 = vrot.slane %v1932, 4
      %v1935 = vshll.u32 %v1820, 16
      %v1937 = vrot.slane %v1935, 5
      %v1938 = vor.u32 %v1934, %v1937
      %v1939 = vrot.slane %v1938, 4
      %v1941 = vshll.u32 %v1821, 16
      %v1943 = vrot.slane %v1941, 5
      %v1944 = vsel %vm241, %v1939, %v1943
      %v1945 = vshrl.u32 %v1821, 16
      %v1947 = vrot.slane %v1945, 4
      %v1948 = vor.u32 %v1947, %v1943
      %v1949 = vrot.slane %v1948, 4
      %v1951 = vshll.u32 %v1822, 16
      %v1953 = vrot.slane %v1951, 5
      %v1954 = vsel %vm241, %v1949, %v1953
      %v1956 = vshrl.u32 %v1823, 16
      %v1958 = vrot.slane %v1956, 4
      %v1959 = vshll.u32 %v1823, 16
      %v1961 = vrot.slane %v1959, 5
      %v1962 = vor.u32 %v1958, %v1961
      %v1963 = vrot.slane %v1962, 4
      %v1965 = vshll.u32 %v1824, 16
      %v1967 = vrot.slane %v1965, 5
      %v1968 = vsel %vm241, %v1963, %v1967
      %v1969 = vshrl.u32 %v1824, 16
      %v1971 = vrot.slane %v1969, 4
      %v1972 = vor.u32 %v1971, %v1967
      %v1973 = vrot.slane %v1972, 4
      %v1975 = vshll.u32 %v1825, 16
      %v1977 = vrot.slane %v1975, 5
      %v1978 = vsel %vm241, %v1973, %v1977
      %v1980 = vshrl.u32 %v1826, 16
      %v1982 = vrot.slane %v1980, 4
      %v1983 = vshll.u32 %v1826, 16
      %v1985 = vrot.slane %v1983, 5
      %v1986 = vor.u32 %v1982, %v1985
      %v1987 = vrot.slane %v1986, 4
      %v1989 = vshll.u32 %v1827, 16
      %v1991 = vrot.slane %v1989, 5
      %v1992 = vsel %vm241, %v1987, %v1991
      %v1993 = vshrl.u32 %v1827, 16
      %v1995 = vrot.slane %v1993, 4
      %v1996 = vor.u32 %v1995, %v1991
      %v1997 = vrot.slane %v1996, 4
      %v1999 = vshll.u32 %v1828, 16
      %v2001 = vrot.slane %v1999, 5
      %v2002 = vsel %vm241, %v1997, %v2001
      %v2004 = vshrl.u32 %v1829, 16
      %v2006 = vrot.slane %v2004, 4
      %v2007 = vshll.u32 %v1829, 16
      %v2009 = vrot.slane %v2007, 5
      %v2010 = vor.u32 %v2006, %v2009
      %v2011 = vrot.slane %v2010, 4
      %v2013 = vshll.u32 %v1830, 16
      %v2015 = vrot.slane %v2013, 5
      %v2016 = vsel %vm241, %v2011, %v2015
      %v2017 = vshrl.u32 %v1830, 16
      %v2019 = vrot.slane %v2017, 4
      %v2020 = vor.u32 %v2019, %v2015
      %v2021 = vrot.slane %v2020, 4
      %v2023 = vshll.u32 %v1831, 16
      %v2025 = vrot.slane %v2023, 5
      %v2026 = vsel %vm241, %v2021, %v2025
      %v2028 = vshrl.u32 %v1832, 16
      %v2030 = vrot.slane %v2028, 4
      %v2031 = vshll.u32 %v1832, 16
      %v2033 = vrot.slane %v2031, 5
      %v2034 = vor.u32 %v2030, %v2033
      %v2035 = vrot.slane %v2034, 4
      %v2037 = vshll.u32 %v1833, 16
      %v2039 = vrot.slane %v2037, 5
      %v2040 = vsel %vm241, %v2035, %v2039
      %v2041 = vshrl.u32 %v1833, 16
      %v2043 = vrot.slane %v2041, 4
      %v2044 = vor.u32 %v2043, %v2039
      %v2045 = vrot.slane %v2044, 4
      %v2047 = vshll.u32 %v1834, 16
      %v2049 = vrot.slane %v2047, 5
      %v2050 = vsel %vm241, %v2045, %v2049
      %v2052 = vshrl.u32 %v1835, 16
      %v2054 = vrot.slane %v2052, 4
      %v2055 = vshll.u32 %v1835, 16
      %v2057 = vrot.slane %v2055, 5
      %v2058 = vor.u32 %v2054, %v2057
      %v2059 = vrot.slane %v2058, 4
      %v2061 = vshll.u32 %v1836, 16
      %v2063 = vrot.slane %v2061, 5
      %v2064 = vsel %vm241, %v2059, %v2063
      %v2065 = vshrl.u32 %v1836, 16
      %v2067 = vrot.slane %v2065, 4
      %v2068 = vor.u32 %v2067, %v2063
      %v2069 = vrot.slane %v2068, 4
      %v2071 = vshll.u32 %v1837, 16
      %v2073 = vrot.slane %v2071, 5
      %v2074 = vsel %vm241, %v2069, %v2073
      %v2076 = vshrl.u32 %v1838, 16
      %v2078 = vrot.slane %v2076, 4
      %v2079 = vshll.u32 %v1838, 16
      %v2081 = vrot.slane %v2079, 5
      %v2082 = vor.u32 %v2078, %v2081
      %v2083 = vrot.slane %v2082, 4
      %v2085 = vshll.u32 %v1839, 16
      %v2087 = vrot.slane %v2085, 5
      %v2088 = vsel %vm241, %v2083, %v2087
      %v2089 = vshrl.u32 %v1839, 16
      %v2091 = vrot.slane %v2089, 4
      %v2092 = vor.u32 %v2091, %v2087
      %v2093 = vrot.slane %v2092, 4
      %v2095 = vshll.u32 %v1840, 16
      %v2097 = vrot.slane %v2095, 5
      %v2098 = vsel %vm241, %v2093, %v2097
      %v2100 = vshrl.u32 %v1841, 16
      %v2102 = vrot.slane %v2100, 4
      %v2103 = vshll.u32 %v1841, 16
      %v2105 = vrot.slane %v2103, 5
      %v2106 = vor.u32 %v2102, %v2105
      %v2107 = vrot.slane %v2106, 4
      %v2109 = vshll.u32 %v1842, 16
      %v2111 = vrot.slane %v2109, 5
      %v2112 = vsel %vm241, %v2107, %v2111
      %v2113 = vshrl.u32 %v1842, 16
      %v2115 = vrot.slane %v2113, 4
      %v2116 = vor.u32 %v2115, %v2111
      %v2117 = vrot.slane %v2116, 4
      %v2119 = vshll.u32 %v1843, 16
      %v2121 = vrot.slane %v2119, 5
      %v2122 = vsel %vm241, %v2117, %v2121
      %v2124 = vshrl.u32 %v1844, 16
      %v2126 = vrot.slane %v2124, 4
      %v2127 = vshll.u32 %v1844, 16
      %v2129 = vrot.slane %v2127, 5
      %v2130 = vor.u32 %v2126, %v2129
      %v2131 = vrot.slane %v2130, 4
      %v2133 = vshll.u32 %v1845, 16
      %v2135 = vrot.slane %v2133, 5
      %v2136 = vsel %vm241, %v2131, %v2135
      %v2137 = vshrl.u32 %v1845, 16
      %v2139 = vrot.slane %v2137, 4
      %v2140 = vor.u32 %v2139, %v2135
      %v2141 = vrot.slane %v2140, 4
      %v2143 = vshll.u32 %v1846, 16
      %v2145 = vrot.slane %v2143, 5
      %v2146 = vsel %vm241, %v2141, %v2145
      %v2148 = vshrl.u32 %v1847, 16
      %v2150 = vrot.slane %v2148, 4
      %v2151 = vshll.u32 %v1847, 16
      %v2153 = vrot.slane %v2151, 5
      %v2154 = vor.u32 %v2150, %v2153
      %v2155 = vrot.slane %v2154, 4
      %v2157 = vshll.u32 %v1848, 16
      %v2159 = vrot.slane %v2157, 5
      %v2160 = vsel %vm241, %v2155, %v2159
      %v2161 = vshrl.u32 %v1848, 16
      %v2163 = vrot.slane %v2161, 4
      %v2164 = vor.u32 %v2163, %v2159
      %v2165 = vrot.slane %v2164, 4
      %v2167 = vshll.u32 %v1849, 16
      %v2169 = vrot.slane %v2167, 5
      %v2170 = vsel %vm241, %v2165, %v2169
      %v2172 = vshrl.u32 %v1850, 16
      %v2174 = vrot.slane %v2172, 4
      %v2175 = vshll.u32 %v1850, 16
      %v2177 = vrot.slane %v2175, 5
      %v2178 = vor.u32 %v2174, %v2177
      %v2179 = vrot.slane %v2178, 4
      %v2181 = vshll.u32 %v1851, 16
      %v2183 = vrot.slane %v2181, 5
      %v2184 = vsel %vm241, %v2179, %v2183
      %v2185 = vshrl.u32 %v1851, 16
      %v2187 = vrot.slane %v2185, 4
      %v2188 = vor.u32 %v2187, %v2183
      %v2189 = vrot.slane %v2188, 4
      %v2191 = vshll.u32 %v1852, 16
      %v2193 = vrot.slane %v2191, 5
      %v2194 = vsel %vm241, %v2189, %v2193
      %v2196 = vshrl.u32 %v1853, 16
      %v2198 = vrot.slane %v2196, 4
      %v2199 = vshll.u32 %v1853, 16
      %v2201 = vrot.slane %v2199, 5
      %v2202 = vor.u32 %v2198, %v2201
      %v2203 = vrot.slane %v2202, 4
      %v2205 = vshll.u32 %v1854, 16
      %v2207 = vrot.slane %v2205, 5
      %v2208 = vsel %vm241, %v2203, %v2207
      %v2209 = vshrl.u32 %v1854, 16
      %v2211 = vrot.slane %v2209, 4
      %v2212 = vor.u32 %v2211, %v2207
      %v2213 = vrot.slane %v2212, 4
      %v2215 = vshll.u32 %v1855, 16
      %v2217 = vrot.slane %v2215, 5
      %v2218 = vsel %vm241, %v2213, %v2217
      %v2220 = vshrl.u32 %v1856, 16
      %v2222 = vrot.slane %v2220, 4
      %v2223 = vshll.u32 %v1856, 16
      %v2225 = vrot.slane %v2223, 5
      %v2226 = vor.u32 %v2222, %v2225
      %v2227 = vrot.slane %v2226, 4
      %v2229 = vshll.u32 %v1857, 16
      %v2231 = vrot.slane %v2229, 5
      %v2232 = vsel %vm241, %v2227, %v2231
      %v2233 = vshrl.u32 %v1857, 16
      %v2235 = vrot.slane %v2233, 4
      %v2236 = vor.u32 %v2235, %v2231
      %v2237 = vrot.slane %v2236, 4
      %v2239 = vshll.u32 %v1858, 16
      %v2241 = vrot.slane %v2239, 5
      %v2242 = vsel %vm241, %v2237, %v2241
      %v2243 = vld [vmem:[%s1 + $0x80] sm:$0xf]
      %v2244 = vld [vmem:[%s1 + $0x84] sm:$0xf]
      %v2245 = vld [vmem:[%s1 + $0x88] sm:$0xf]
      %v2246 = vld [vmem:[%s1 + $0x8c] sm:$0xf]
      %v2247 = vld [vmem:[%s1 + $0x90] sm:$0xf]
      %v2248 = vld [vmem:[%s1 + $0x94] sm:$0xf]
      %v2249 = vld [vmem:[%s1 + $0x98] sm:$0xf]
      %v2250 = vld [vmem:[%s1 + $0x9c] sm:$0xf]
      %v2251 = vunpack.c.l.b16 %v1872
      %v2252 = vunpack.c.l.b16 %v1882
      %v2253 = vunpack.c.l.b16 %v1896
      %v2254 = vunpack.c.l.b16 %v1906
      %v2255 = vunpack.c.l.b16 %v1920
      %v2256 = vunpack.c.l.b16 %v1930
      %v2257 = vunpack.c.l.b16 %v1944
      %v2258 = vunpack.c.l.b16 %v1954
      %v2259 = vunpack.c.l.b16 %v1968
      %v2260 = vunpack.c.l.b16 %v1978
      %v2261 = vunpack.c.l.b16 %v1992
      %v2262 = vunpack.c.l.b16 %v2002
      %v2263 = vunpack.c.l.b16 %v2016
      %v2264 = vunpack.c.l.b16 %v2026
      %v2265 = vunpack.c.l.b16 %v2040
      %v2266 = vunpack.c.l.b16 %v2050
      %v2267 = vunpack.c.l.b16 %v2064
      %v2268 = vunpack.c.l.b16 %v2074
      %v2269 = vunpack.c.l.b16 %v2088
      %v2270 = vunpack.c.l.b16 %v2098
      %v2271 = vunpack.c.l.b16 %v2112
      %v2272 = vunpack.c.l.b16 %v2122
      %v2273 = vunpack.c.l.b16 %v2136
      %v2274 = vunpack.c.l.b16 %v2146
      %v2275 = vunpack.c.l.b16 %v2160
      %v2276 = vunpack.c.l.b16 %v2170
      %v2277 = vunpack.c.l.b16 %v2184
      %v2278 = vunpack.c.l.b16 %v2194
      %v2279 = vunpack.c.l.b16 %v2208
      %v2280 = vunpack.c.l.b16 %v2218
      %v2281 = vunpack.c.l.b16 %v2232
      %v2282 = vunpack.c.l.b16 %v2242
      %v2283 = vpack.c.b16 %v2252, %v2251
      %v2284 = vpack.c.b16 %v2254, %v2253
      %v2285 = vpack.c.b16 %v2256, %v2255
      %v2286 = vpack.c.b16 %v2258, %v2257
      %v2287 = vpack.c.b16 %v2260, %v2259
      %v2288 = vpack.c.b16 %v2262, %v2261
      %v2289 = vpack.c.b16 %v2264, %v2263
      %v2290 = vpack.c.b16 %v2266, %v2265
      %v2291 = vpack.c.b16 %v2268, %v2267
      %v2292 = vpack.c.b16 %v2270, %v2269
      %v2293 = vpack.c.b16 %v2272, %v2271
      %v2294 = vpack.c.b16 %v2274, %v2273
      %v2295 = vpack.c.b16 %v2276, %v2275
      %v2296 = vpack.c.b16 %v2278, %v2277
      %v2297 = vpack.c.b16 %v2280, %v2279
      %v2298 = vpack.c.b16 %v2282, %v2281
      %v2307 = vunpack.c.l.b16 %v2243
      %v2308 = vunpack.c.l.b16 %v2244
      %v2309 = vunpack.c.l.b16 %v2245
      %v2310 = vunpack.c.l.b16 %v2246
      %v2311 = vunpack.c.l.b16 %v2247
      %v2312 = vunpack.c.l.b16 %v2248
      %v2313 = vunpack.c.l.b16 %v2249
      %v2314 = vunpack.c.l.b16 %v2250
      %v2315 = vpack.c.b16 %v2308, %v2307
      %v2316 = vpack.c.b16 %v2310, %v2309
      %v2317 = vpack.c.b16 %v2312, %v2311
      %v2318 = vpack.c.b16 %v2314, %v2313
      %v2324 = vsel %vm706, %v2283, 0
      %v2327 = vsel %vm706, %v2284, 0
      %v2330 = vsel %vm706, %v2285, 0
      %v2333 = vsel %vm706, %v2286, 0
      %v2336 = vsel %vm706, %v2287, 0
      %v2339 = vsel %vm706, %v2288, 0
      %v2342 = vsel %vm706, %v2289, 0
      %v2345 = vsel %vm706, %v2290, 0
      %v2348 = vsel %vm706, %v2291, 0
      %v2351 = vsel %vm706, %v2292, 0
      %v2354 = vsel %vm706, %v2293, 0
      %v2357 = vsel %vm706, %v2294, 0
      %v2360 = vsel %vm706, %v2295, 0
      %v2363 = vsel %vm706, %v2296, 0
      %v2366 = vsel %vm706, %v2297, 0
      %v2369 = vsel %vm706, %v2298, 0
      %2371 = vmatpush.bf16.msra.mxu0 0
      %2372 = vmatpush.bf16.msra.mxu0 0
      %2373 = vmatpush.bf16.msra.mxu0 0
      %2374 = vmatpush.bf16.msra.mxu0 0
      %2375 = vmatpush.bf16.msra.mxu0 %v2318
      %2376 = vmatpush.bf16.msra.mxu0 %v2317
      %2377 = vmatpush.bf16.msra.mxu0 %v2316
      %2378 = vmatpush.bf16.msra.mxu0 %v2315
      %2379 = vmatmul.bf16.gmra.mxu0 %v2324
      %v2380 = vpop.f32.mrf.mxu0
      %v2381 = vadd.f32 0.0, %v2380
      %v2382 = vpop.f32.mrf.mxu0
      %v2383 = vadd.f32 0.0, %v2382
      %2384 = vmatmul.bf16.gmra.mxu0 %v2327
      %v2385 = vpop.f32.mrf.mxu0
      %v2386 = vadd.f32 0.0, %v2385
      %v2387 = vpop.f32.mrf.mxu0
      %v2388 = vadd.f32 0.0, %v2387
      %2389 = vmatmul.bf16.gmra.mxu0 %v2330
      %v2390 = vpop.f32.mrf.mxu0
      %v2391 = vadd.f32 0.0, %v2390
      %v2392 = vpop.f32.mrf.mxu0
      %v2393 = vadd.f32 0.0, %v2392
      %2394 = vmatmul.bf16.gmra.mxu0 %v2333
      %v2395 = vpop.f32.mrf.mxu0
      %v2396 = vadd.f32 0.0, %v2395
      %v2397 = vpop.f32.mrf.mxu0
      %v2398 = vadd.f32 0.0, %v2397
      %2399 = vmatmul.bf16.gmra.mxu0 %v2336
      %v2400 = vpop.f32.mrf.mxu0
      %v2401 = vadd.f32 0.0, %v2400
      %v2402 = vpop.f32.mrf.mxu0
      %v2403 = vadd.f32 0.0, %v2402
      %2404 = vmatmul.bf16.gmra.mxu0 %v2339
      %v2405 = vpop.f32.mrf.mxu0
      %v2406 = vadd.f32 0.0, %v2405
      %v2407 = vpop.f32.mrf.mxu0
      %v2408 = vadd.f32 0.0, %v2407
      %2409 = vmatmul.bf16.gmra.mxu0 %v2342
      %v2410 = vpop.f32.mrf.mxu0
      %v2411 = vadd.f32 0.0, %v2410
      %v2412 = vpop.f32.mrf.mxu0
      %v2413 = vadd.f32 0.0, %v2412
      %2414 = vmatmul.bf16.gmra.mxu0 %v2345
      %v2415 = vpop.f32.mrf.mxu0
      %v2416 = vadd.f32 0.0, %v2415
      %v2417 = vpop.f32.mrf.mxu0
      %v2418 = vadd.f32 0.0, %v2417
      %2419 = vmatmul.bf16.gmra.mxu0 %v2348
      %v2420 = vpop.f32.mrf.mxu0
      %v2421 = vadd.f32 0.0, %v2420
      %v2422 = vpop.f32.mrf.mxu0
      %v2423 = vadd.f32 0.0, %v2422
      %2424 = vmatmul.bf16.gmra.mxu0 %v2351
      %v2425 = vpop.f32.mrf.mxu0
      %v2426 = vadd.f32 0.0, %v2425
      %v2427 = vpop.f32.mrf.mxu0
      %v2428 = vadd.f32 0.0, %v2427
      %2429 = vmatmul.bf16.gmra.mxu0 %v2354
      %v2430 = vpop.f32.mrf.mxu0
      %v2431 = vadd.f32 0.0, %v2430
      %v2432 = vpop.f32.mrf.mxu0
      %v2433 = vadd.f32 0.0, %v2432
      %2434 = vmatmul.bf16.gmra.mxu0 %v2357
      %v2435 = vpop.f32.mrf.mxu0
      %v2436 = vadd.f32 0.0, %v2435
      %v2437 = vpop.f32.mrf.mxu0
      %v2438 = vadd.f32 0.0, %v2437
      %2439 = vmatmul.bf16.gmra.mxu0 %v2360
      %v2440 = vpop.f32.mrf.mxu0
      %v2441 = vadd.f32 0.0, %v2440
      %v2442 = vpop.f32.mrf.mxu0
      %v2443 = vadd.f32 0.0, %v2442
      %2444 = vmatmul.bf16.gmra.mxu0 %v2363
      %v2445 = vpop.f32.mrf.mxu0
      %v2446 = vadd.f32 0.0, %v2445
      %v2447 = vpop.f32.mrf.mxu0
      %v2448 = vadd.f32 0.0, %v2447
      %2449 = vmatmul.bf16.gmra.mxu0 %v2366
      %v2450 = vpop.f32.mrf.mxu0
      %v2451 = vadd.f32 0.0, %v2450
      %v2452 = vpop.f32.mrf.mxu0
      %v2453 = vadd.f32 0.0, %v2452
      %2454 = vmatmul.bf16.gmra.mxu0 %v2369
      %v2455 = vpop.f32.mrf.mxu0
      %v2456 = vadd.f32 0.0, %v2455
      %v2457 = vpop.f32.mrf.mxu0
      %v2458 = vadd.f32 0.0, %v2457
      %2459 = vdwg.mxu0
      %v2460 = vadd.f32 %v1779, %v2381
      %v2461 = vadd.f32 %v1780, %v2383
      %v2462 = vadd.f32 %v1781, %v2386
      %v2463 = vadd.f32 %v1782, %v2388
      %v2464 = vadd.f32 %v1783, %v2391
      %v2465 = vadd.f32 %v1784, %v2393
      %v2466 = vadd.f32 %v1785, %v2396
      %v2467 = vadd.f32 %v1786, %v2398
      %v2468 = vadd.f32 %v1787, %v2401
      %v2469 = vadd.f32 %v1788, %v2403
      %v2470 = vadd.f32 %v1789, %v2406
      %v2471 = vadd.f32 %v1790, %v2408
      %v2472 = vadd.f32 %v1791, %v2411
      %v2473 = vadd.f32 %v1792, %v2413
      %v2474 = vadd.f32 %v1793, %v2416
      %v2475 = vadd.f32 %v1794, %v2418
      %v2476 = vadd.f32 %v1795, %v2421
      %v2477 = vadd.f32 %v1796, %v2423
      %v2478 = vadd.f32 %v1797, %v2426
      %v2479 = vadd.f32 %v1798, %v2428
      %v2480 = vadd.f32 %v1799, %v2431
      %v2481 = vadd.f32 %v1800, %v2433
      %v2482 = vadd.f32 %v1801, %v2436
      %v2483 = vadd.f32 %v1802, %v2438
      %v2484 = vadd.f32 %v1803, %v2441
      %v2485 = vadd.f32 %v1804, %v2443
      %v2486 = vadd.f32 %v1805, %v2446
      %v2487 = vadd.f32 %v1806, %v2448
      %v2488 = vadd.f32 %v1807, %v2451
      %v2489 = vadd.f32 %v1808, %v2453
      %v2490 = vadd.f32 %v1809, %v2456
      %v2491 = vadd.f32 %v1810, %v2458
      %v2492 = vld [vmem:[%s1497] sm:$0xe]
      %v2493 = vld [vmem:[%s1497 + $0xc] sm:$0xe]
      %v2494 = vld [vmem:[%s1497 + $0x18] sm:$0xe]
      %v2495 = vld [vmem:[%s1497 + $0x24] sm:$0xe]
      %v2496 = vld [vmem:[%s1497 + $0x30] sm:$0xe]
      %v2497 = vld [vmem:[%s1497 + $0x3c] sm:$0xe]
      %v2498 = vld [vmem:[%s1497 + $0x48] sm:$0xe]
      %v2499 = vld [vmem:[%s1497 + $0x54] sm:$0xe]
      %v2500 = vld [vmem:[%s1497 + $0x60] sm:$0xe]
      %v2501 = vld [vmem:[%s1497 + $0x6c] sm:$0xe]
      %v2502 = vld [vmem:[%s1497 + $0x78] sm:$0xe]
      %v2503 = vld [vmem:[%s1497 + $0x84] sm:$0xe]
      %v2504 = vld [vmem:[%s1497 + $0x90] sm:$0xe]
      %v2505 = vld [vmem:[%s1497 + $0x9c] sm:$0xe]
      %v2506 = vld [vmem:[%s1497 + $0xa8] sm:$0xe]
      %v2507 = vld [vmem:[%s1497 + $0xb4] sm:$0xe]
      %v2556 = vrot.slane %v2492, 5
      %v2557 = vrot.slane %v2556, 4
      %v2558 = vrot.slane %v1812, 5
      %v2559 = vsel %vm1135, %v2557, %v2558
      %v2560 = vrot.slane %v2558, 4
      %v2561 = vrot.slane %v1813, 5
      %v2562 = vsel %vm1135, %v2560, %v2561
      %v2563 = vrot.slane %v2493, 5
      %v2564 = vrot.slane %v2563, 4
      %v2565 = vrot.slane %v1815, 5
      %v2566 = vsel %vm1135, %v2564, %v2565
      %v2567 = vrot.slane %v2565, 4
      %v2568 = vrot.slane %v1816, 5
      %v2569 = vsel %vm1135, %v2567, %v2568
      %v2570 = vrot.slane %v2494, 5
      %v2571 = vrot.slane %v2570, 4
      %v2572 = vrot.slane %v1818, 5
      %v2573 = vsel %vm1135, %v2571, %v2572
      %v2574 = vrot.slane %v2572, 4
      %v2575 = vrot.slane %v1819, 5
      %v2576 = vsel %vm1135, %v2574, %v2575
      %v2577 = vrot.slane %v2495, 5
      %v2578 = vrot.slane %v2577, 4
      %v2579 = vrot.slane %v1821, 5
      %v2580 = vsel %vm1135, %v2578, %v2579
      %v2581 = vrot.slane %v2579, 4
      %v2582 = vrot.slane %v1822, 5
      %v2583 = vsel %vm1135, %v2581, %v2582
      %v2584 = vrot.slane %v2496, 5
      %v2585 = vrot.slane %v2584, 4
      %v2586 = vrot.slane %v1824, 5
      %v2587 = vsel %vm1135, %v2585, %v2586
      %v2588 = vrot.slane %v2586, 4
      %v2589 = vrot.slane %v1825, 5
      %v2590 = vsel %vm1135, %v2588, %v2589
      %v2591 = vrot.slane %v2497, 5
      %v2592 = vrot.slane %v2591, 4
      %v2593 = vrot.slane %v1827, 5
      %v2594 = vsel %vm1135, %v2592, %v2593
      %v2595 = vrot.slane %v2593, 4
      %v2596 = vrot.slane %v1828, 5
      %v2597 = vsel %vm1135, %v2595, %v2596
      %v2598 = vrot.slane %v2498, 5
      %v2599 = vrot.slane %v2598, 4
      %v2600 = vrot.slane %v1830, 5
      %v2601 = vsel %vm1135, %v2599, %v2600
      %v2602 = vrot.slane %v2600, 4
      %v2603 = vrot.slane %v1831, 5
      %v2604 = vsel %vm1135, %v2602, %v2603
      %v2605 = vrot.slane %v2499, 5
      %v2606 = vrot.slane %v2605, 4
      %v2607 = vrot.slane %v1833, 5
      %v2608 = vsel %vm1135, %v2606, %v2607
      %v2609 = vrot.slane %v2607, 4
      %v2610 = vrot.slane %v1834, 5
      %v2611 = vsel %vm1135, %v2609, %v2610
      %v2612 = vrot.slane %v2500, 5
      %v2613 = vrot.slane %v2612, 4
      %v2614 = vrot.slane %v1836, 5
      %v2615 = vsel %vm1135, %v2613, %v2614
      %v2616 = vrot.slane %v2614, 4
      %v2617 = vrot.slane %v1837, 5
      %v2618 = vsel %vm1135, %v2616, %v2617
      %v2619 = vrot.slane %v2501, 5
      %v2620 = vrot.slane %v2619, 4
      %v2621 = vrot.slane %v1839, 5
      %v2622 = vsel %vm1135, %v2620, %v2621
      %v2623 = vrot.slane %v2621, 4
      %v2624 = vrot.slane %v1840, 5
      %v2625 = vsel %vm1135, %v2623, %v2624
      %v2626 = vrot.slane %v2502, 5
      %v2627 = vrot.slane %v2626, 4
      %v2628 = vrot.slane %v1842, 5
      %v2629 = vsel %vm1135, %v2627, %v2628
      %v2630 = vrot.slane %v2628, 4
      %v2631 = vrot.slane %v1843, 5
      %v2632 = vsel %vm1135, %v2630, %v2631
      %v2633 = vrot.slane %v2503, 5
      %v2634 = vrot.slane %v2633, 4
      %v2635 = vrot.slane %v1845, 5
      %v2636 = vsel %vm1135, %v2634, %v2635
      %v2637 = vrot.slane %v2635, 4
      %v2638 = vrot.slane %v1846, 5
      %v2639 = vsel %vm1135, %v2637, %v2638
      %v2640 = vrot.slane %v2504, 5
      %v2641 = vrot.slane %v2640, 4
      %v2642 = vrot.slane %v1848, 5
      %v2643 = vsel %vm1135, %v2641, %v2642
      %v2644 = vrot.slane %v2642, 4
      %v2645 = vrot.slane %v1849, 5
      %v2646 = vsel %vm1135, %v2644, %v2645
      %v2647 = vrot.slane %v2505, 5
      %v2648 = vrot.slane %v2647, 4
      %v2649 = vrot.slane %v1851, 5
      %v2650 = vsel %vm1135, %v2648, %v2649
      %v2651 = vrot.slane %v2649, 4
      %v2652 = vrot.slane %v1852, 5
      %v2653 = vsel %vm1135, %v2651, %v2652
      %v2654 = vrot.slane %v2506, 5
      %v2655 = vrot.slane %v2654, 4
      %v2656 = vrot.slane %v1854, 5
      %v2657 = vsel %vm1135, %v2655, %v2656
      %v2658 = vrot.slane %v2656, 4
      %v2659 = vrot.slane %v1855, 5
      %v2660 = vsel %vm1135, %v2658, %v2659
      %v2661 = vrot.slane %v2507, 5
      %v2662 = vrot.slane %v2661, 4
      %v2663 = vrot.slane %v1857, 5
      %v2664 = vsel %vm1135, %v2662, %v2663
      %v2665 = vrot.slane %v2663, 4
      %v2666 = vrot.slane %v1858, 5
      %v2667 = vsel %vm1135, %v2665, %v2666
      %v2668 = vld [vmem:[%s1 + $0xa0] sm:$0xf]
      %v2669 = vld [vmem:[%s1 + $0xa4] sm:$0xf]
      %v2670 = vld [vmem:[%s1 + $0xa8] sm:$0xf]
      %v2671 = vld [vmem:[%s1 + $0xac] sm:$0xf]
      %v2672 = vld [vmem:[%s1 + $0xb0] sm:$0xf]
      %v2673 = vld [vmem:[%s1 + $0xb4] sm:$0xf]
      %v2674 = vld [vmem:[%s1 + $0xb8] sm:$0xf]
      %v2675 = vld [vmem:[%s1 + $0xbc] sm:$0xf]
      %v2676 = vunpack.c.l.b16 %v2559
      %v2677 = vunpack.c.l.b16 %v2562
      %v2678 = vunpack.c.l.b16 %v2566
      %v2679 = vunpack.c.l.b16 %v2569
      %v2680 = vunpack.c.l.b16 %v2573
      %v2681 = vunpack.c.l.b16 %v2576
      %v2682 = vunpack.c.l.b16 %v2580
      %v2683 = vunpack.c.l.b16 %v2583
      %v2684 = vunpack.c.l.b16 %v2587
      %v2685 = vunpack.c.l.b16 %v2590
      %v2686 = vunpack.c.l.b16 %v2594
      %v2687 = vunpack.c.l.b16 %v2597
      %v2688 = vunpack.c.l.b16 %v2601
      %v2689 = vunpack.c.l.b16 %v2604
      %v2690 = vunpack.c.l.b16 %v2608
      %v2691 = vunpack.c.l.b16 %v2611
      %v2692 = vunpack.c.l.b16 %v2615
      %v2693 = vunpack.c.l.b16 %v2618
      %v2694 = vunpack.c.l.b16 %v2622
      %v2695 = vunpack.c.l.b16 %v2625
      %v2696 = vunpack.c.l.b16 %v2629
      %v2697 = vunpack.c.l.b16 %v2632
      %v2698 = vunpack.c.l.b16 %v2636
      %v2699 = vunpack.c.l.b16 %v2639
      %v2700 = vunpack.c.l.b16 %v2643
      %v2701 = vunpack.c.l.b16 %v2646
      %v2702 = vunpack.c.l.b16 %v2650
      %v2703 = vunpack.c.l.b16 %v2653
      %v2704 = vunpack.c.l.b16 %v2657
      %v2705 = vunpack.c.l.b16 %v2660
      %v2706 = vunpack.c.l.b16 %v2664
      %v2707 = vunpack.c.l.b16 %v2667
      %v2708 = vpack.c.b16 %v2677, %v2676
      %v2709 = vpack.c.b16 %v2679, %v2678
      %v2710 = vpack.c.b16 %v2681, %v2680
      %v2711 = vpack.c.b16 %v2683, %v2682
      %v2712 = vpack.c.b16 %v2685, %v2684
      %v2713 = vpack.c.b16 %v2687, %v2686
      %v2714 = vpack.c.b16 %v2689, %v2688
      %v2715 = vpack.c.b16 %v2691, %v2690
      %v2716 = vpack.c.b16 %v2693, %v2692
      %v2717 = vpack.c.b16 %v2695, %v2694
      %v2718 = vpack.c.b16 %v2697, %v2696
      %v2719 = vpack.c.b16 %v2699, %v2698
      %v2720 = vpack.c.b16 %v2701, %v2700
      %v2721 = vpack.c.b16 %v2703, %v2702
      %v2722 = vpack.c.b16 %v2705, %v2704
      %v2723 = vpack.c.b16 %v2707, %v2706
      %v2732 = vunpack.c.l.b16 %v2668
      %v2733 = vunpack.c.l.b16 %v2669
      %v2734 = vunpack.c.l.b16 %v2670
      %v2735 = vunpack.c.l.b16 %v2671
      %v2736 = vunpack.c.l.b16 %v2672
      %v2737 = vunpack.c.l.b16 %v2673
      %v2738 = vunpack.c.l.b16 %v2674
      %v2739 = vunpack.c.l.b16 %v2675
      %v2740 = vpack.c.b16 %v2733, %v2732
      %v2741 = vpack.c.b16 %v2735, %v2734
      %v2742 = vpack.c.b16 %v2737, %v2736
      %v2743 = vpack.c.b16 %v2739, %v2738
      %v2749 = vsel %vm706, %v2708, 0
      %v2752 = vsel %vm706, %v2709, 0
      %v2755 = vsel %vm706, %v2710, 0
      %v2758 = vsel %vm706, %v2711, 0
      %v2761 = vsel %vm706, %v2712, 0
      %v2764 = vsel %vm706, %v2713, 0
      %v2767 = vsel %vm706, %v2714, 0
      %v2770 = vsel %vm706, %v2715, 0
      %v2773 = vsel %vm706, %v2716, 0
      %v2776 = vsel %vm706, %v2717, 0
      %v2779 = vsel %vm706, %v2718, 0
      %v2782 = vsel %vm706, %v2719, 0
      %v2785 = vsel %vm706, %v2720, 0
      %v2788 = vsel %vm706, %v2721, 0
      %v2791 = vsel %vm706, %v2722, 0
      %v2794 = vsel %vm706, %v2723, 0
      %2796 = vmatpush.bf16.msra.mxu0 0
      %2797 = vmatpush.bf16.msra.mxu0 0
      %2798 = vmatpush.bf16.msra.mxu0 0
      %2799 = vmatpush.bf16.msra.mxu0 0
      %2800 = vmatpush.bf16.msra.mxu0 %v2743
      %2801 = vmatpush.bf16.msra.mxu0 %v2742
      %2802 = vmatpush.bf16.msra.mxu0 %v2741
      %2803 = vmatpush.bf16.msra.mxu0 %v2740
      %2804 = vmatmul.bf16.gmra.mxu0 %v2749
      %v2805 = vpop.f32.mrf.mxu0
      %v2806 = vadd.f32 0.0, %v2805
      %v2807 = vpop.f32.mrf.mxu0
      %v2808 = vadd.f32 0.0, %v2807
      %2809 = vmatmul.bf16.gmra.mxu0 %v2752
      %v2810 = vpop.f32.mrf.mxu0
      %v2811 = vadd.f32 0.0, %v2810
      %v2812 = vpop.f32.mrf.mxu0
      %v2813 = vadd.f32 0.0, %v2812
      %2814 = vmatmul.bf16.gmra.mxu0 %v2755
      %v2815 = vpop.f32.mrf.mxu0
      %v2816 = vadd.f32 0.0, %v2815
      %v2817 = vpop.f32.mrf.mxu0
      %v2818 = vadd.f32 0.0, %v2817
      %2819 = vmatmul.bf16.gmra.mxu0 %v2758
      %v2820 = vpop.f32.mrf.mxu0
      %v2821 = vadd.f32 0.0, %v2820
      %v2822 = vpop.f32.mrf.mxu0
      %v2823 = vadd.f32 0.0, %v2822
      %2824 = vmatmul.bf16.gmra.mxu0 %v2761
      %v2825 = vpop.f32.mrf.mxu0
      %v2826 = vadd.f32 0.0, %v2825
      %v2827 = vpop.f32.mrf.mxu0
      %v2828 = vadd.f32 0.0, %v2827
      %2829 = vmatmul.bf16.gmra.mxu0 %v2764
      %v2830 = vpop.f32.mrf.mxu0
      %v2831 = vadd.f32 0.0, %v2830
      %v2832 = vpop.f32.mrf.mxu0
      %v2833 = vadd.f32 0.0, %v2832
      %2834 = vmatmul.bf16.gmra.mxu0 %v2767
      %v2835 = vpop.f32.mrf.mxu0
      %v2836 = vadd.f32 0.0, %v2835
      %v2837 = vpop.f32.mrf.mxu0
      %v2838 = vadd.f32 0.0, %v2837
      %2839 = vmatmul.bf16.gmra.mxu0 %v2770
      %v2840 = vpop.f32.mrf.mxu0
      %v2841 = vadd.f32 0.0, %v2840
      %v2842 = vpop.f32.mrf.mxu0
      %v2843 = vadd.f32 0.0, %v2842
      %2844 = vmatmul.bf16.gmra.mxu0 %v2773
      %v2845 = vpop.f32.mrf.mxu0
      %v2846 = vadd.f32 0.0, %v2845
      %v2847 = vpop.f32.mrf.mxu0
      %v2848 = vadd.f32 0.0, %v2847
      %2849 = vmatmul.bf16.gmra.mxu0 %v2776
      %v2850 = vpop.f32.mrf.mxu0
      %v2851 = vadd.f32 0.0, %v2850
      %v2852 = vpop.f32.mrf.mxu0
      %v2853 = vadd.f32 0.0, %v2852
      %2854 = vmatmul.bf16.gmra.mxu0 %v2779
      %v2855 = vpop.f32.mrf.mxu0
      %v2856 = vadd.f32 0.0, %v2855
      %v2857 = vpop.f32.mrf.mxu0
      %v2858 = vadd.f32 0.0, %v2857
      %2859 = vmatmul.bf16.gmra.mxu0 %v2782
      %v2860 = vpop.f32.mrf.mxu0
      %v2861 = vadd.f32 0.0, %v2860
      %v2862 = vpop.f32.mrf.mxu0
      %v2863 = vadd.f32 0.0, %v2862
      %2864 = vmatmul.bf16.gmra.mxu0 %v2785
      %v2865 = vpop.f32.mrf.mxu0
      %v2866 = vadd.f32 0.0, %v2865
      %v2867 = vpop.f32.mrf.mxu0
      %v2868 = vadd.f32 0.0, %v2867
      %2869 = vmatmul.bf16.gmra.mxu0 %v2788
      %v2870 = vpop.f32.mrf.mxu0
      %v2871 = vadd.f32 0.0, %v2870
      %v2872 = vpop.f32.mrf.mxu0
      %v2873 = vadd.f32 0.0, %v2872
      %2874 = vmatmul.bf16.gmra.mxu0 %v2791
      %v2875 = vpop.f32.mrf.mxu0
      %v2876 = vadd.f32 0.0, %v2875
      %v2877 = vpop.f32.mrf.mxu0
      %v2878 = vadd.f32 0.0, %v2877
      %2879 = vmatmul.bf16.gmra.mxu0 %v2794
      %v2880 = vpop.f32.mrf.mxu0
      %v2881 = vadd.f32 0.0, %v2880
      %v2882 = vpop.f32.mrf.mxu0
      %v2883 = vadd.f32 0.0, %v2882
      %2884 = vdwg.mxu0
      %v2885 = vadd.f32 %v2460, %v2806
      %v2886 = vadd.f32 %v2461, %v2808
      %v2887 = vadd.f32 %v2462, %v2811
      %v2888 = vadd.f32 %v2463, %v2813
      %v2889 = vadd.f32 %v2464, %v2816
      %v2890 = vadd.f32 %v2465, %v2818
      %v2891 = vadd.f32 %v2466, %v2821
      %v2892 = vadd.f32 %v2467, %v2823
      %v2893 = vadd.f32 %v2468, %v2826
      %v2894 = vadd.f32 %v2469, %v2828
      %v2895 = vadd.f32 %v2470, %v2831
      %v2896 = vadd.f32 %v2471, %v2833
      %v2897 = vadd.f32 %v2472, %v2836
      %v2898 = vadd.f32 %v2473, %v2838
      %v2899 = vadd.f32 %v2474, %v2841
      %v2900 = vadd.f32 %v2475, %v2843
      %v2901 = vadd.f32 %v2476, %v2846
      %v2902 = vadd.f32 %v2477, %v2848
      %v2903 = vadd.f32 %v2478, %v2851
      %v2904 = vadd.f32 %v2479, %v2853
      %v2905 = vadd.f32 %v2480, %v2856
      %v2906 = vadd.f32 %v2481, %v2858
      %v2907 = vadd.f32 %v2482, %v2861
      %v2908 = vadd.f32 %v2483, %v2863
      %v2909 = vadd.f32 %v2484, %v2866
      %v2910 = vadd.f32 %v2485, %v2868
      %v2911 = vadd.f32 %v2486, %v2871
      %v2912 = vadd.f32 %v2487, %v2873
      %v2913 = vadd.f32 %v2488, %v2876
      %v2914 = vadd.f32 %v2489, %v2878
      %v2915 = vadd.f32 %v2490, %v2881
      %v2916 = vadd.f32 %v2491, %v2883
      %s2917 = scalar_lea.vmem %s172, 24
      %v2918 = vld [vmem:[%s2917] sm:$0xf]
      %v2919 = vld [vmem:[%s2917 + $0x4] sm:$0xf]
      %v2920 = vld [vmem:[%s2917 + $0xc] sm:$0xf]
      %v2921 = vld [vmem:[%s2917 + $0x10] sm:$0xf]
      %v2922 = vld [vmem:[%s2917 + $0x18] sm:$0xf]
      %v2923 = vld [vmem:[%s2917 + $0x1c] sm:$0xf]
      %v2924 = vld [vmem:[%s2917 + $0x24] sm:$0xf]
      %v2925 = vld [vmem:[%s2917 + $0x28] sm:$0xf]
      %v2926 = vld [vmem:[%s2917 + $0x30] sm:$0xf]
      %v2927 = vld [vmem:[%s2917 + $0x34] sm:$0xf]
      %v2928 = vld [vmem:[%s2917 + $0x3c] sm:$0xf]
      %v2929 = vld [vmem:[%s2917 + $0x40] sm:$0xf]
      %v2930 = vld [vmem:[%s2917 + $0x48] sm:$0xf]
      %v2931 = vld [vmem:[%s2917 + $0x4c] sm:$0xf]
      %v2932 = vld [vmem:[%s2917 + $0x54] sm:$0xf]
      %v2933 = vld [vmem:[%s2917 + $0x58] sm:$0xf]
      %v2934 = vld [vmem:[%s2917 + $0x60] sm:$0xf]
      %v2935 = vld [vmem:[%s2917 + $0x64] sm:$0xf]
      %v2936 = vld [vmem:[%s2917 + $0x6c] sm:$0xf]
      %v2937 = vld [vmem:[%s2917 + $0x70] sm:$0xf]
      %v2938 = vld [vmem:[%s2917 + $0x78] sm:$0xf]
      %v2939 = vld [vmem:[%s2917 + $0x7c] sm:$0xf]
      %v2940 = vld [vmem:[%s2917 + $0x84] sm:$0xf]
      %v2941 = vld [vmem:[%s2917 + $0x88] sm:$0xf]
      %v2942 = vld [vmem:[%s2917 + $0x90] sm:$0xf]
      %v2943 = vld [vmem:[%s2917 + $0x94] sm:$0xf]
      %v2944 = vld [vmem:[%s2917 + $0x9c] sm:$0xf]
      %v2945 = vld [vmem:[%s2917 + $0xa0] sm:$0xf]
      %v2946 = vld [vmem:[%s2917 + $0xa8] sm:$0xf]
      %v2947 = vld [vmem:[%s2917 + $0xac] sm:$0xf]
      %v2948 = vld [vmem:[%s2917 + $0xb4] sm:$0xf]
      %v2949 = vld [vmem:[%s2917 + $0xb8] sm:$0xf]
      %v2950 = vld [vmem:[%s1 + $0xc0] sm:$0xf]
      %v2951 = vld [vmem:[%s1 + $0xc4] sm:$0xf]
      %v2952 = vld [vmem:[%s1 + $0xc8] sm:$0xf]
      %v2953 = vld [vmem:[%s1 + $0xcc] sm:$0xf]
      %v2954 = vld [vmem:[%s1 + $0xd0] sm:$0xf]
      %v2955 = vld [vmem:[%s1 + $0xd4] sm:$0xf]
      %v2956 = vld [vmem:[%s1 + $0xd8] sm:$0xf]
      %v2957 = vld [vmem:[%s1 + $0xdc] sm:$0xf]
      %v2990 = vunpack.c.l.b16 %v2918
      %v2991 = vunpack.c.l.b16 %v2919
      %v2992 = vunpack.c.l.b16 %v2920
      %v2993 = vunpack.c.l.b16 %v2921
      %v2994 = vunpack.c.l.b16 %v2922
      %v2995 = vunpack.c.l.b16 %v2923
      %v2996 = vunpack.c.l.b16 %v2924
      %v2997 = vunpack.c.l.b16 %v2925
      %v2998 = vunpack.c.l.b16 %v2926
      %v2999 = vunpack.c.l.b16 %v2927
      %v3000 = vunpack.c.l.b16 %v2928
      %v3001 = vunpack.c.l.b16 %v2929
      %v3002 = vunpack.c.l.b16 %v2930
      %v3003 = vunpack.c.l.b16 %v2931
      %v3004 = vunpack.c.l.b16 %v2932
      %v3005 = vunpack.c.l.b16 %v2933
      %v3006 = vunpack.c.l.b16 %v2934
      %v3007 = vunpack.c.l.b16 %v2935
      %v3008 = vunpack.c.l.b16 %v2936
      %v3009 = vunpack.c.l.b16 %v2937
      %v3010 = vunpack.c.l.b16 %v2938
      %v3011 = vunpack.c.l.b16 %v2939
      %v3012 = vunpack.c.l.b16 %v2940
      %v3013 = vunpack.c.l.b16 %v2941
      %v3014 = vunpack.c.l.b16 %v2942
      %v3015 = vunpack.c.l.b16 %v2943
      %v3016 = vunpack.c.l.b16 %v2944
      %v3017 = vunpack.c.l.b16 %v2945
      %v3018 = vunpack.c.l.b16 %v2946
      %v3019 = vunpack.c.l.b16 %v2947
      %v3020 = vunpack.c.l.b16 %v2948
      %v3021 = vunpack.c.l.b16 %v2949
      %v3022 = vpack.c.b16 %v2991, %v2990
      %v3023 = vpack.c.b16 %v2993, %v2992
      %v3024 = vpack.c.b16 %v2995, %v2994
      %v3025 = vpack.c.b16 %v2997, %v2996
      %v3026 = vpack.c.b16 %v2999, %v2998
      %v3027 = vpack.c.b16 %v3001, %v3000
      %v3028 = vpack.c.b16 %v3003, %v3002
      %v3029 = vpack.c.b16 %v3005, %v3004
      %v3030 = vpack.c.b16 %v3007, %v3006
      %v3031 = vpack.c.b16 %v3009, %v3008
      %v3032 = vpack.c.b16 %v3011, %v3010
      %v3033 = vpack.c.b16 %v3013, %v3012
      %v3034 = vpack.c.b16 %v3015, %v3014
      %v3035 = vpack.c.b16 %v3017, %v3016
      %v3036 = vpack.c.b16 %v3019, %v3018
      %v3037 = vpack.c.b16 %v3021, %v3020
      %v3046 = vunpack.c.l.b16 %v2950
      %v3047 = vunpack.c.l.b16 %v2951
      %v3048 = vunpack.c.l.b16 %v2952
      %v3049 = vunpack.c.l.b16 %v2953
      %v3050 = vunpack.c.l.b16 %v2954
      %v3051 = vunpack.c.l.b16 %v2955
      %v3052 = vunpack.c.l.b16 %v2956
      %v3053 = vunpack.c.l.b16 %v2957
      %v3054 = vpack.c.b16 %v3047, %v3046
      %v3055 = vpack.c.b16 %v3049, %v3048
      %v3056 = vpack.c.b16 %v3051, %v3050
      %v3057 = vpack.c.b16 %v3053, %v3052
      %v3063 = vsel %vm706, %v3022, 0
      %v3066 = vsel %vm706, %v3023, 0
      %v3069 = vsel %vm706, %v3024, 0
      %v3072 = vsel %vm706, %v3025, 0
      %v3075 = vsel %vm706, %v3026, 0
      %v3078 = vsel %vm706, %v3027, 0
      %v3081 = vsel %vm706, %v3028, 0
      %v3084 = vsel %vm706, %v3029, 0
      %v3087 = vsel %vm706, %v3030, 0
      %v3090 = vsel %vm706, %v3031, 0
      %v3093 = vsel %vm706, %v3032, 0
      %v3096 = vsel %vm706, %v3033, 0
      %v3099 = vsel %vm706, %v3034, 0
      %v3102 = vsel %vm706, %v3035, 0
      %v3105 = vsel %vm706, %v3036, 0
      %v3108 = vsel %vm706, %v3037, 0
      %3110 = vmatpush.bf16.msra.mxu0 0
      %3111 = vmatpush.bf16.msra.mxu0 0
      %3112 = vmatpush.bf16.msra.mxu0 0
      %3113 = vmatpush.bf16.msra.mxu0 0
      %3114 = vmatpush.bf16.msra.mxu0 %v3057
      %3115 = vmatpush.bf16.msra.mxu0 %v3056
      %3116 = vmatpush.bf16.msra.mxu0 %v3055
      %3117 = vmatpush.bf16.msra.mxu0 %v3054
      %3118 = vmatmul.bf16.gmra.mxu0 %v3063
      %v3119 = vpop.f32.mrf.mxu0
      %v3120 = vadd.f32 0.0, %v3119
      %v3121 = vpop.f32.mrf.mxu0
      %v3122 = vadd.f32 0.0, %v3121
      %3123 = vmatmul.bf16.gmra.mxu0 %v3066
      %v3124 = vpop.f32.mrf.mxu0
      %v3125 = vadd.f32 0.0, %v3124
      %v3126 = vpop.f32.mrf.mxu0
      %v3127 = vadd.f32 0.0, %v3126
      %3128 = vmatmul.bf16.gmra.mxu0 %v3069
      %v3129 = vpop.f32.mrf.mxu0
      %v3130 = vadd.f32 0.0, %v3129
      %v3131 = vpop.f32.mrf.mxu0
      %v3132 = vadd.f32 0.0, %v3131
      %3133 = vmatmul.bf16.gmra.mxu0 %v3072
      %v3134 = vpop.f32.mrf.mxu0
      %v3135 = vadd.f32 0.0, %v3134
      %v3136 = vpop.f32.mrf.mxu0
      %v3137 = vadd.f32 0.0, %v3136
      %3138 = vmatmul.bf16.gmra.mxu0 %v3075
      %v3139 = vpop.f32.mrf.mxu0
      %v3140 = vadd.f32 0.0, %v3139
      %v3141 = vpop.f32.mrf.mxu0
      %v3142 = vadd.f32 0.0, %v3141
      %3143 = vmatmul.bf16.gmra.mxu0 %v3078
      %v3144 = vpop.f32.mrf.mxu0
      %v3145 = vadd.f32 0.0, %v3144
      %v3146 = vpop.f32.mrf.mxu0
      %v3147 = vadd.f32 0.0, %v3146
      %3148 = vmatmul.bf16.gmra.mxu0 %v3081
      %v3149 = vpop.f32.mrf.mxu0
      %v3150 = vadd.f32 0.0, %v3149
      %v3151 = vpop.f32.mrf.mxu0
      %v3152 = vadd.f32 0.0, %v3151
      %3153 = vmatmul.bf16.gmra.mxu0 %v3084
      %v3154 = vpop.f32.mrf.mxu0
      %v3155 = vadd.f32 0.0, %v3154
      %v3156 = vpop.f32.mrf.mxu0
      %v3157 = vadd.f32 0.0, %v3156
      %3158 = vmatmul.bf16.gmra.mxu0 %v3087
      %v3159 = vpop.f32.mrf.mxu0
      %v3160 = vadd.f32 0.0, %v3159
      %v3161 = vpop.f32.mrf.mxu0
      %v3162 = vadd.f32 0.0, %v3161
      %3163 = vmatmul.bf16.gmra.mxu0 %v3090
      %v3164 = vpop.f32.mrf.mxu0
      %v3165 = vadd.f32 0.0, %v3164
      %v3166 = vpop.f32.mrf.mxu0
      %v3167 = vadd.f32 0.0, %v3166
      %3168 = vmatmul.bf16.gmra.mxu0 %v3093
      %v3169 = vpop.f32.mrf.mxu0
      %v3170 = vadd.f32 0.0, %v3169
      %v3171 = vpop.f32.mrf.mxu0
      %v3172 = vadd.f32 0.0, %v3171
      %3173 = vmatmul.bf16.gmra.mxu0 %v3096
      %v3174 = vpop.f32.mrf.mxu0
      %v3175 = vadd.f32 0.0, %v3174
      %v3176 = vpop.f32.mrf.mxu0
      %v3177 = vadd.f32 0.0, %v3176
      %3178 = vmatmul.bf16.gmra.mxu0 %v3099
      %v3179 = vpop.f32.mrf.mxu0
      %v3180 = vadd.f32 0.0, %v3179
      %v3181 = vpop.f32.mrf.mxu0
      %v3182 = vadd.f32 0.0, %v3181
      %3183 = vmatmul.bf16.gmra.mxu0 %v3102
      %v3184 = vpop.f32.mrf.mxu0
      %v3185 = vadd.f32 0.0, %v3184
      %v3186 = vpop.f32.mrf.mxu0
      %v3187 = vadd.f32 0.0, %v3186
      %3188 = vmatmul.bf16.gmra.mxu0 %v3105
      %v3189 = vpop.f32.mrf.mxu0
      %v3190 = vadd.f32 0.0, %v3189
      %v3191 = vpop.f32.mrf.mxu0
      %v3192 = vadd.f32 0.0, %v3191
      %3193 = vmatmul.bf16.gmra.mxu0 %v3108
      %v3194 = vpop.f32.mrf.mxu0
      %v3195 = vadd.f32 0.0, %v3194
      %v3196 = vpop.f32.mrf.mxu0
      %v3197 = vadd.f32 0.0, %v3196
      %3198 = vdwg.mxu0
      %v3199 = vadd.f32 %v2885, %v3120
      %v3200 = vadd.f32 %v2886, %v3122
      %v3201 = vadd.f32 %v2887, %v3125
      %v3202 = vadd.f32 %v2888, %v3127
      %v3203 = vadd.f32 %v2889, %v3130
      %v3204 = vadd.f32 %v2890, %v3132
      %v3205 = vadd.f32 %v2891, %v3135
      %v3206 = vadd.f32 %v2892, %v3137
      %v3207 = vadd.f32 %v2893, %v3140
      %v3208 = vadd.f32 %v2894, %v3142
      %v3209 = vadd.f32 %v2895, %v3145
      %v3210 = vadd.f32 %v2896, %v3147
      %v3211 = vadd.f32 %v2897, %v3150
      %v3212 = vadd.f32 %v2898, %v3152
      %v3213 = vadd.f32 %v2899, %v3155
      %v3214 = vadd.f32 %v2900, %v3157
      %v3215 = vadd.f32 %v2901, %v3160
      %v3216 = vadd.f32 %v2902, %v3162
      %v3217 = vadd.f32 %v2903, %v3165
      %v3218 = vadd.f32 %v2904, %v3167
      %v3219 = vadd.f32 %v2905, %v3170
      %v3220 = vadd.f32 %v2906, %v3172
      %v3221 = vadd.f32 %v2907, %v3175
      %v3222 = vadd.f32 %v2908, %v3177
      %v3223 = vadd.f32 %v2909, %v3180
      %v3224 = vadd.f32 %v2910, %v3182
      %v3225 = vadd.f32 %v2911, %v3185
      %v3226 = vadd.f32 %v2912, %v3187
      %v3227 = vadd.f32 %v2913, %v3190
      %v3228 = vadd.f32 %v2914, %v3192
      %v3229 = vadd.f32 %v2915, %v3195
      %v3230 = vadd.f32 %v2916, %v3197
      %v3231 = vld [vmem:[%s2917] sm:$0xf]
      %v3232 = vld [vmem:[%s2917 + $0x4] sm:$0xf]
      %v3233 = vld [vmem:[%s2917 + $0x8] sm:$0x1]
      %v3234 = vld [vmem:[%s2917 + $0xc] sm:$0xf]
      %v3235 = vld [vmem:[%s2917 + $0x10] sm:$0xf]
      %v3236 = vld [vmem:[%s2917 + $0x14] sm:$0x1]
      %v3237 = vld [vmem:[%s2917 + $0x18] sm:$0xf]
      %v3238 = vld [vmem:[%s2917 + $0x1c] sm:$0xf]
      %v3239 = vld [vmem:[%s2917 + $0x20] sm:$0x1]
      %v3240 = vld [vmem:[%s2917 + $0x24] sm:$0xf]
      %v3241 = vld [vmem:[%s2917 + $0x28] sm:$0xf]
      %v3242 = vld [vmem:[%s2917 + $0x2c] sm:$0x1]
      %v3243 = vld [vmem:[%s2917 + $0x30] sm:$0xf]
      %v3244 = vld [vmem:[%s2917 + $0x34] sm:$0xf]
      %v3245 = vld [vmem:[%s2917 + $0x38] sm:$0x1]
      %v3246 = vld [vmem:[%s2917 + $0x3c] sm:$0xf]
      %v3247 = vld [vmem:[%s2917 + $0x40] sm:$0xf]
      %v3248 = vld [vmem:[%s2917 + $0x44] sm:$0x1]
      %v3249 = vld [vmem:[%s2917 + $0x48] sm:$0xf]
      %v3250 = vld [vmem:[%s2917 + $0x4c] sm:$0xf]
      %v3251 = vld [vmem:[%s2917 + $0x50] sm:$0x1]
      %v3252 = vld [vmem:[%s2917 + $0x54] sm:$0xf]
      %v3253 = vld [vmem:[%s2917 + $0x58] sm:$0xf]
      %v3254 = vld [vmem:[%s2917 + $0x5c] sm:$0x1]
      %v3255 = vld [vmem:[%s2917 + $0x60] sm:$0xf]
      %v3256 = vld [vmem:[%s2917 + $0x64] sm:$0xf]
      %v3257 = vld [vmem:[%s2917 + $0x68] sm:$0x1]
      %v3258 = vld [vmem:[%s2917 + $0x6c] sm:$0xf]
      %v3259 = vld [vmem:[%s2917 + $0x70] sm:$0xf]
      %v3260 = vld [vmem:[%s2917 + $0x74] sm:$0x1]
      %v3261 = vld [vmem:[%s2917 + $0x78] sm:$0xf]
      %v3262 = vld [vmem:[%s2917 + $0x7c] sm:$0xf]
      %v3263 = vld [vmem:[%s2917 + $0x80] sm:$0x1]
      %v3264 = vld [vmem:[%s2917 + $0x84] sm:$0xf]
      %v3265 = vld [vmem:[%s2917 + $0x88] sm:$0xf]
      %v3266 = vld [vmem:[%s2917 + $0x8c] sm:$0x1]
      %v3267 = vld [vmem:[%s2917 + $0x90] sm:$0xf]
      %v3268 = vld [vmem:[%s2917 + $0x94] sm:$0xf]
      %v3269 = vld [vmem:[%s2917 + $0x98] sm:$0x1]
      %v3270 = vld [vmem:[%s2917 + $0x9c] sm:$0xf]
      %v3271 = vld [vmem:[%s2917 + $0xa0] sm:$0xf]
      %v3272 = vld [vmem:[%s2917 + $0xa4] sm:$0x1]
      %v3273 = vld [vmem:[%s2917 + $0xa8] sm:$0xf]
      %v3274 = vld [vmem:[%s2917 + $0xac] sm:$0xf]
      %v3275 = vld [vmem:[%s2917 + $0xb0] sm:$0x1]
      %v3276 = vld [vmem:[%s2917 + $0xb4] sm:$0xf]
      %v3277 = vld [vmem:[%s2917 + $0xb8] sm:$0xf]
      %v3278 = vld [vmem:[%s2917 + $0xbc] sm:$0x1]
      %v3280 = vshrl.u32 %v3231, 16
      %v3282 = vrot.slane %v3280, 4
      %v3283 = vshll.u32 %v3231, 16
      %v3285 = vrot.slane %v3283, 5
      %v3286 = vor.u32 %v3282, %v3285
      %v3287 = vrot.slane %v3286, 4
      %v3289 = vshll.u32 %v3232, 16
      %v3291 = vrot.slane %v3289, 5
      %v3292 = vsel %vm241, %v3287, %v3291
      %v3293 = vshrl.u32 %v3232, 16
      %v3295 = vrot.slane %v3293, 4
      %v3296 = vor.u32 %v3295, %v3291
      %v3297 = vrot.slane %v3296, 4
      %v3299 = vshll.u32 %v3233, 16
      %v3301 = vrot.slane %v3299, 5
      %v3302 = vsel %vm241, %v3297, %v3301
      %v3304 = vshrl.u32 %v3234, 16
      %v3306 = vrot.slane %v3304, 4
      %v3307 = vshll.u32 %v3234, 16
      %v3309 = vrot.slane %v3307, 5
      %v3310 = vor.u32 %v3306, %v3309
      %v3311 = vrot.slane %v3310, 4
      %v3313 = vshll.u32 %v3235, 16
      %v3315 = vrot.slane %v3313, 5
      %v3316 = vsel %vm241, %v3311, %v3315
      %v3317 = vshrl.u32 %v3235, 16
      %v3319 = vrot.slane %v3317, 4
      %v3320 = vor.u32 %v3319, %v3315
      %v3321 = vrot.slane %v3320, 4
      %v3323 = vshll.u32 %v3236, 16
      %v3325 = vrot.slane %v3323, 5
      %v3326 = vsel %vm241, %v3321, %v3325
      %v3328 = vshrl.u32 %v3237, 16
      %v3330 = vrot.slane %v3328, 4
      %v3331 = vshll.u32 %v3237, 16
      %v3333 = vrot.slane %v3331, 5
      %v3334 = vor.u32 %v3330, %v3333
      %v3335 = vrot.slane %v3334, 4
      %v3337 = vshll.u32 %v3238, 16
      %v3339 = vrot.slane %v3337, 5
      %v3340 = vsel %vm241, %v3335, %v3339
      %v3341 = vshrl.u32 %v3238, 16
      %v3343 = vrot.slane %v3341, 4
      %v3344 = vor.u32 %v3343, %v3339
      %v3345 = vrot.slane %v3344, 4
      %v3347 = vshll.u32 %v3239, 16
      %v3349 = vrot.slane %v3347, 5
      %v3350 = vsel %vm241, %v3345, %v3349
      %v3352 = vshrl.u32 %v3240, 16
      %v3354 = vrot.slane %v3352, 4
      %v3355 = vshll.u32 %v3240, 16
      %v3357 = vrot.slane %v3355, 5
      %v3358 = vor.u32 %v3354, %v3357
      %v3359 = vrot.slane %v3358, 4
      %v3361 = vshll.u32 %v3241, 16
      %v3363 = vrot.slane %v3361, 5
      %v3364 = vsel %vm241, %v3359, %v3363
      %v3365 = vshrl.u32 %v3241, 16
      %v3367 = vrot.slane %v3365, 4
      %v3368 = vor.u32 %v3367, %v3363
      %v3369 = vrot.slane %v3368, 4
      %v3371 = vshll.u32 %v3242, 16
      %v3373 = vrot.slane %v3371, 5
      %v3374 = vsel %vm241, %v3369, %v3373
      %v3376 = vshrl.u32 %v3243, 16
      %v3378 = vrot.slane %v3376, 4
      %v3379 = vshll.u32 %v3243, 16
      %v3381 = vrot.slane %v3379, 5
      %v3382 = vor.u32 %v3378, %v3381
      %v3383 = vrot.slane %v3382, 4
      %v3385 = vshll.u32 %v3244, 16
      %v3387 = vrot.slane %v3385, 5
      %v3388 = vsel %vm241, %v3383, %v3387
      %v3389 = vshrl.u32 %v3244, 16
      %v3391 = vrot.slane %v3389, 4
      %v3392 = vor.u32 %v3391, %v3387
      %v3393 = vrot.slane %v3392, 4
      %v3395 = vshll.u32 %v3245, 16
      %v3397 = vrot.slane %v3395, 5
      %v3398 = vsel %vm241, %v3393, %v3397
      %v3400 = vshrl.u32 %v3246, 16
      %v3402 = vrot.slane %v3400, 4
      %v3403 = vshll.u32 %v3246, 16
      %v3405 = vrot.slane %v3403, 5
      %v3406 = vor.u32 %v3402, %v3405
      %v3407 = vrot.slane %v3406, 4
      %v3409 = vshll.u32 %v3247, 16
      %v3411 = vrot.slane %v3409, 5
      %v3412 = vsel %vm241, %v3407, %v3411
      %v3413 = vshrl.u32 %v3247, 16
      %v3415 = vrot.slane %v3413, 4
      %v3416 = vor.u32 %v3415, %v3411
      %v3417 = vrot.slane %v3416, 4
      %v3419 = vshll.u32 %v3248, 16
      %v3421 = vrot.slane %v3419, 5
      %v3422 = vsel %vm241, %v3417, %v3421
      %v3424 = vshrl.u32 %v3249, 16
      %v3426 = vrot.slane %v3424, 4
      %v3427 = vshll.u32 %v3249, 16
      %v3429 = vrot.slane %v3427, 5
      %v3430 = vor.u32 %v3426, %v3429
      %v3431 = vrot.slane %v3430, 4
      %v3433 = vshll.u32 %v3250, 16
      %v3435 = vrot.slane %v3433, 5
      %v3436 = vsel %vm241, %v3431, %v3435
      %v3437 = vshrl.u32 %v3250, 16
      %v3439 = vrot.slane %v3437, 4
      %v3440 = vor.u32 %v3439, %v3435
      %v3441 = vrot.slane %v3440, 4
      %v3443 = vshll.u32 %v3251, 16
      %v3445 = vrot.slane %v3443, 5
      %v3446 = vsel %vm241, %v3441, %v3445
      %v3448 = vshrl.u32 %v3252, 16
      %v3450 = vrot.slane %v3448, 4
      %v3451 = vshll.u32 %v3252, 16
      %v3453 = vrot.slane %v3451, 5
      %v3454 = vor.u32 %v3450, %v3453
      %v3455 = vrot.slane %v3454, 4
      %v3457 = vshll.u32 %v3253, 16
      %v3459 = vrot.slane %v3457, 5
      %v3460 = vsel %vm241, %v3455, %v3459
      %v3461 = vshrl.u32 %v3253, 16
      %v3463 = vrot.slane %v3461, 4
      %v3464 = vor.u32 %v3463, %v3459
      %v3465 = vrot.slane %v3464, 4
      %v3467 = vshll.u32 %v3254, 16
      %v3469 = vrot.slane %v3467, 5
      %v3470 = vsel %vm241, %v3465, %v3469
      %v3472 = vshrl.u32 %v3255, 16
      %v3474 = vrot.slane %v3472, 4
      %v3475 = vshll.u32 %v3255, 16
      %v3477 = vrot.slane %v3475, 5
      %v3478 = vor.u32 %v3474, %v3477
      %v3479 = vrot.slane %v3478, 4
      %v3481 = vshll.u32 %v3256, 16
      %v3483 = vrot.slane %v3481, 5
      %v3484 = vsel %vm241, %v3479, %v3483
      %v3485 = vshrl.u32 %v3256, 16
      %v3487 = vrot.slane %v3485, 4
      %v3488 = vor.u32 %v3487, %v3483
      %v3489 = vrot.slane %v3488, 4
      %v3491 = vshll.u32 %v3257, 16
      %v3493 = vrot.slane %v3491, 5
      %v3494 = vsel %vm241, %v3489, %v3493
      %v3496 = vshrl.u32 %v3258, 16
      %v3498 = vrot.slane %v3496, 4
      %v3499 = vshll.u32 %v3258, 16
      %v3501 = vrot.slane %v3499, 5
      %v3502 = vor.u32 %v3498, %v3501
      %v3503 = vrot.slane %v3502, 4
      %v3505 = vshll.u32 %v3259, 16
      %v3507 = vrot.slane %v3505, 5
      %v3508 = vsel %vm241, %v3503, %v3507
      %v3509 = vshrl.u32 %v3259, 16
      %v3511 = vrot.slane %v3509, 4
      %v3512 = vor.u32 %v3511, %v3507
      %v3513 = vrot.slane %v3512, 4
      %v3515 = vshll.u32 %v3260, 16
      %v3517 = vrot.slane %v3515, 5
      %v3518 = vsel %vm241, %v3513, %v3517
      %v3520 = vshrl.u32 %v3261, 16
      %v3522 = vrot.slane %v3520, 4
      %v3523 = vshll.u32 %v3261, 16
      %v3525 = vrot.slane %v3523, 5
      %v3526 = vor.u32 %v3522, %v3525
      %v3527 = vrot.slane %v3526, 4
      %v3529 = vshll.u32 %v3262, 16
      %v3531 = vrot.slane %v3529, 5
      %v3532 = vsel %vm241, %v3527, %v3531
      %v3533 = vshrl.u32 %v3262, 16
      %v3535 = vrot.slane %v3533, 4
      %v3536 = vor.u32 %v3535, %v3531
      %v3537 = vrot.slane %v3536, 4
      %v3539 = vshll.u32 %v3263, 16
      %v3541 = vrot.slane %v3539, 5
      %v3542 = vsel %vm241, %v3537, %v3541
      %v3544 = vshrl.u32 %v3264, 16
      %v3546 = vrot.slane %v3544, 4
      %v3547 = vshll.u32 %v3264, 16
      %v3549 = vrot.slane %v3547, 5
      %v3550 = vor.u32 %v3546, %v3549
      %v3551 = vrot.slane %v3550, 4
      %v3553 = vshll.u32 %v3265, 16
      %v3555 = vrot.slane %v3553, 5
      %v3556 = vsel %vm241, %v3551, %v3555
      %v3557 = vshrl.u32 %v3265, 16
      %v3559 = vrot.slane %v3557, 4
      %v3560 = vor.u32 %v3559, %v3555
      %v3561 = vrot.slane %v3560, 4
      %v3563 = vshll.u32 %v3266, 16
      %v3565 = vrot.slane %v3563, 5
      %v3566 = vsel %vm241, %v3561, %v3565
      %v3568 = vshrl.u32 %v3267, 16
      %v3570 = vrot.slane %v3568, 4
      %v3571 = vshll.u32 %v3267, 16
      %v3573 = vrot.slane %v3571, 5
      %v3574 = vor.u32 %v3570, %v3573
      %v3575 = vrot.slane %v3574, 4
      %v3577 = vshll.u32 %v3268, 16
      %v3579 = vrot.slane %v3577, 5
      %v3580 = vsel %vm241, %v3575, %v3579
      %v3581 = vshrl.u32 %v3268, 16
      %v3583 = vrot.slane %v3581, 4
      %v3584 = vor.u32 %v3583, %v3579
      %v3585 = vrot.slane %v3584, 4
      %v3587 = vshll.u32 %v3269, 16
      %v3589 = vrot.slane %v3587, 5
      %v3590 = vsel %vm241, %v3585, %v3589
      %v3592 = vshrl.u32 %v3270, 16
      %v3594 = vrot.slane %v3592, 4
      %v3595 = vshll.u32 %v3270, 16
      %v3597 = vrot.slane %v3595, 5
      %v3598 = vor.u32 %v3594, %v3597
      %v3599 = vrot.slane %v3598, 4
      %v3601 = vshll.u32 %v3271, 16
      %v3603 = vrot.slane %v3601, 5
      %v3604 = vsel %vm241, %v3599, %v3603
      %v3605 = vshrl.u32 %v3271, 16
      %v3607 = vrot.slane %v3605, 4
      %v3608 = vor.u32 %v3607, %v3603
      %v3609 = vrot.slane %v3608, 4
      %v3611 = vshll.u32 %v3272, 16
      %v3613 = vrot.slane %v3611, 5
      %v3614 = vsel %vm241, %v3609, %v3613
      %v3616 = vshrl.u32 %v3273, 16
      %v3618 = vrot.slane %v3616, 4
      %v3619 = vshll.u32 %v3273, 16
      %v3621 = vrot.slane %v3619, 5
      %v3622 = vor.u32 %v3618, %v3621
      %v3623 = vrot.slane %v3622, 4
      %v3625 = vshll.u32 %v3274, 16
      %v3627 = vrot.slane %v3625, 5
      %v3628 = vsel %vm241, %v3623, %v3627
      %v3629 = vshrl.u32 %v3274, 16
      %v3631 = vrot.slane %v3629, 4
      %v3632 = vor.u32 %v3631, %v3627
      %v3633 = vrot.slane %v3632, 4
      %v3635 = vshll.u32 %v3275, 16
      %v3637 = vrot.slane %v3635, 5
      %v3638 = vsel %vm241, %v3633, %v3637
      %v3640 = vshrl.u32 %v3276, 16
      %v3642 = vrot.slane %v3640, 4
      %v3643 = vshll.u32 %v3276, 16
      %v3645 = vrot.slane %v3643, 5
      %v3646 = vor.u32 %v3642, %v3645
      %v3647 = vrot.slane %v3646, 4
      %v3649 = vshll.u32 %v3277, 16
      %v3651 = vrot.slane %v3649, 5
      %v3652 = vsel %vm241, %v3647, %v3651
      %v3653 = vshrl.u32 %v3277, 16
      %v3655 = vrot.slane %v3653, 4
      %v3656 = vor.u32 %v3655, %v3651
      %v3657 = vrot.slane %v3656, 4
      %v3659 = vshll.u32 %v3278, 16
      %v3661 = vrot.slane %v3659, 5
      %v3662 = vsel %vm241, %v3657, %v3661
      %v3663 = vld [vmem:[%s1 + $0xe0] sm:$0xf]
      %v3664 = vld [vmem:[%s1 + $0xe4] sm:$0xf]
      %v3665 = vld [vmem:[%s1 + $0xe8] sm:$0xf]
      %v3666 = vld [vmem:[%s1 + $0xec] sm:$0xf]
      %v3667 = vld [vmem:[%s1 + $0xf0] sm:$0xf]
      %v3668 = vld [vmem:[%s1 + $0xf4] sm:$0xf]
      %v3669 = vld [vmem:[%s1 + $0xf8] sm:$0xf]
      %v3670 = vld [vmem:[%s1 + $0xfc] sm:$0xf]
      %v3671 = vunpack.c.l.b16 %v3292
      %v3672 = vunpack.c.l.b16 %v3302
      %v3673 = vunpack.c.l.b16 %v3316
      %v3674 = vunpack.c.l.b16 %v3326
      %v3675 = vunpack.c.l.b16 %v3340
      %v3676 = vunpack.c.l.b16 %v3350
      %v3677 = vunpack.c.l.b16 %v3364
      %v3678 = vunpack.c.l.b16 %v3374
      %v3679 = vunpack.c.l.b16 %v3388
      %v3680 = vunpack.c.l.b16 %v3398
      %v3681 = vunpack.c.l.b16 %v3412
      %v3682 = vunpack.c.l.b16 %v3422
      %v3683 = vunpack.c.l.b16 %v3436
      %v3684 = vunpack.c.l.b16 %v3446
      %v3685 = vunpack.c.l.b16 %v3460
      %v3686 = vunpack.c.l.b16 %v3470
      %v3687 = vunpack.c.l.b16 %v3484
      %v3688 = vunpack.c.l.b16 %v3494
      %v3689 = vunpack.c.l.b16 %v3508
      %v3690 = vunpack.c.l.b16 %v3518
      %v3691 = vunpack.c.l.b16 %v3532
      %v3692 = vunpack.c.l.b16 %v3542
      %v3693 = vunpack.c.l.b16 %v3556
      %v3694 = vunpack.c.l.b16 %v3566
      %v3695 = vunpack.c.l.b16 %v3580
      %v3696 = vunpack.c.l.b16 %v3590
      %v3697 = vunpack.c.l.b16 %v3604
      %v3698 = vunpack.c.l.b16 %v3614
      %v3699 = vunpack.c.l.b16 %v3628
      %v3700 = vunpack.c.l.b16 %v3638
      %v3701 = vunpack.c.l.b16 %v3652
      %v3702 = vunpack.c.l.b16 %v3662
      %v3703 = vpack.c.b16 %v3672, %v3671
      %v3704 = vpack.c.b16 %v3674, %v3673
      %v3705 = vpack.c.b16 %v3676, %v3675
      %v3706 = vpack.c.b16 %v3678, %v3677
      %v3707 = vpack.c.b16 %v3680, %v3679
      %v3708 = vpack.c.b16 %v3682, %v3681
      %v3709 = vpack.c.b16 %v3684, %v3683
      %v3710 = vpack.c.b16 %v3686, %v3685
      %v3711 = vpack.c.b16 %v3688, %v3687
      %v3712 = vpack.c.b16 %v3690, %v3689
      %v3713 = vpack.c.b16 %v3692, %v3691
      %v3714 = vpack.c.b16 %v3694, %v3693
      %v3715 = vpack.c.b16 %v3696, %v3695
      %v3716 = vpack.c.b16 %v3698, %v3697
      %v3717 = vpack.c.b16 %v3700, %v3699
      %v3718 = vpack.c.b16 %v3702, %v3701
      %v3727 = vunpack.c.l.b16 %v3663
      %v3728 = vunpack.c.l.b16 %v3664
      %v3729 = vunpack.c.l.b16 %v3665
      %v3730 = vunpack.c.l.b16 %v3666
      %v3731 = vunpack.c.l.b16 %v3667
      %v3732 = vunpack.c.l.b16 %v3668
      %v3733 = vunpack.c.l.b16 %v3669
      %v3734 = vunpack.c.l.b16 %v3670
      %v3735 = vpack.c.b16 %v3728, %v3727
      %v3736 = vpack.c.b16 %v3730, %v3729
      %v3737 = vpack.c.b16 %v3732, %v3731
      %v3738 = vpack.c.b16 %v3734, %v3733
      %v3744 = vsel %vm706, %v3703, 0
      %v3747 = vsel %vm706, %v3704, 0
      %v3750 = vsel %vm706, %v3705, 0
      %v3753 = vsel %vm706, %v3706, 0
      %v3756 = vsel %vm706, %v3707, 0
      %v3759 = vsel %vm706, %v3708, 0
      %v3762 = vsel %vm706, %v3709, 0
      %v3765 = vsel %vm706, %v3710, 0
      %v3768 = vsel %vm706, %v3711, 0
      %v3771 = vsel %vm706, %v3712, 0
      %v3774 = vsel %vm706, %v3713, 0
      %v3777 = vsel %vm706, %v3714, 0
      %v3780 = vsel %vm706, %v3715, 0
      %v3783 = vsel %vm706, %v3716, 0
      %v3786 = vsel %vm706, %v3717, 0
      %v3789 = vsel %vm706, %v3718, 0
      %3791 = vmatpush.bf16.msra.mxu0 0
      %3792 = vmatpush.bf16.msra.mxu0 0
      %3793 = vmatpush.bf16.msra.mxu0 0
      %3794 = vmatpush.bf16.msra.mxu0 0
      %3795 = vmatpush.bf16.msra.mxu0 %v3738
      %3796 = vmatpush.bf16.msra.mxu0 %v3737
      %3797 = vmatpush.bf16.msra.mxu0 %v3736
      %3798 = vmatpush.bf16.msra.mxu0 %v3735
      %3799 = vmatmul.bf16.gmra.mxu0 %v3744
      %v3800 = vpop.f32.mrf.mxu0
      %v3801 = vadd.f32 0.0, %v3800
      %v3802 = vpop.f32.mrf.mxu0
      %v3803 = vadd.f32 0.0, %v3802
      %3804 = vmatmul.bf16.gmra.mxu0 %v3747
      %v3805 = vpop.f32.mrf.mxu0
      %v3806 = vadd.f32 0.0, %v3805
      %v3807 = vpop.f32.mrf.mxu0
      %v3808 = vadd.f32 0.0, %v3807
      %3809 = vmatmul.bf16.gmra.mxu0 %v3750
      %v3810 = vpop.f32.mrf.mxu0
      %v3811 = vadd.f32 0.0, %v3810
      %v3812 = vpop.f32.mrf.mxu0
      %v3813 = vadd.f32 0.0, %v3812
      %3814 = vmatmul.bf16.gmra.mxu0 %v3753
      %v3815 = vpop.f32.mrf.mxu0
      %v3816 = vadd.f32 0.0, %v3815
      %v3817 = vpop.f32.mrf.mxu0
      %v3818 = vadd.f32 0.0, %v3817
      %3819 = vmatmul.bf16.gmra.mxu0 %v3756
      %v3820 = vpop.f32.mrf.mxu0
      %v3821 = vadd.f32 0.0, %v3820
      %v3822 = vpop.f32.mrf.mxu0
      %v3823 = vadd.f32 0.0, %v3822
      %3824 = vmatmul.bf16.gmra.mxu0 %v3759
      %v3825 = vpop.f32.mrf.mxu0
      %v3826 = vadd.f32 0.0, %v3825
      %v3827 = vpop.f32.mrf.mxu0
      %v3828 = vadd.f32 0.0, %v3827
      %3829 = vmatmul.bf16.gmra.mxu0 %v3762
      %v3830 = vpop.f32.mrf.mxu0
      %v3831 = vadd.f32 0.0, %v3830
      %v3832 = vpop.f32.mrf.mxu0
      %v3833 = vadd.f32 0.0, %v3832
      %3834 = vmatmul.bf16.gmra.mxu0 %v3765
      %v3835 = vpop.f32.mrf.mxu0
      %v3836 = vadd.f32 0.0, %v3835
      %v3837 = vpop.f32.mrf.mxu0
      %v3838 = vadd.f32 0.0, %v3837
      %3839 = vmatmul.bf16.gmra.mxu0 %v3768
      %v3840 = vpop.f32.mrf.mxu0
      %v3841 = vadd.f32 0.0, %v3840
      %v3842 = vpop.f32.mrf.mxu0
      %v3843 = vadd.f32 0.0, %v3842
      %3844 = vmatmul.bf16.gmra.mxu0 %v3771
      %v3845 = vpop.f32.mrf.mxu0
      %v3846 = vadd.f32 0.0, %v3845
      %v3847 = vpop.f32.mrf.mxu0
      %v3848 = vadd.f32 0.0, %v3847
      %3849 = vmatmul.bf16.gmra.mxu0 %v3774
      %v3850 = vpop.f32.mrf.mxu0
      %v3851 = vadd.f32 0.0, %v3850
      %v3852 = vpop.f32.mrf.mxu0
      %v3853 = vadd.f32 0.0, %v3852
      %3854 = vmatmul.bf16.gmra.mxu0 %v3777
      %v3855 = vpop.f32.mrf.mxu0
      %v3856 = vadd.f32 0.0, %v3855
      %v3857 = vpop.f32.mrf.mxu0
      %v3858 = vadd.f32 0.0, %v3857
      %3859 = vmatmul.bf16.gmra.mxu0 %v3780
      %v3860 = vpop.f32.mrf.mxu0
      %v3861 = vadd.f32 0.0, %v3860
      %v3862 = vpop.f32.mrf.mxu0
      %v3863 = vadd.f32 0.0, %v3862
      %3864 = vmatmul.bf16.gmra.mxu0 %v3783
      %v3865 = vpop.f32.mrf.mxu0
      %v3866 = vadd.f32 0.0, %v3865
      %v3867 = vpop.f32.mrf.mxu0
      %v3868 = vadd.f32 0.0, %v3867
      %3869 = vmatmul.bf16.gmra.mxu0 %v3786
      %v3870 = vpop.f32.mrf.mxu0
      %v3871 = vadd.f32 0.0, %v3870
      %v3872 = vpop.f32.mrf.mxu0
      %v3873 = vadd.f32 0.0, %v3872
      %3874 = vmatmul.bf16.gmra.mxu0 %v3789
      %v3875 = vpop.f32.mrf.mxu0
      %v3876 = vadd.f32 0.0, %v3875
      %v3877 = vpop.f32.mrf.mxu0
      %v3878 = vadd.f32 0.0, %v3877
      %3879 = vdwg.mxu0
      %v3880 = vadd.f32 %v3199, %v3801
      %v3881 = vadd.f32 %v3200, %v3803
      %v3882 = vadd.f32 %v3201, %v3806
      %v3883 = vadd.f32 %v3202, %v3808
      %v3884 = vadd.f32 %v3203, %v3811
      %v3885 = vadd.f32 %v3204, %v3813
      %v3886 = vadd.f32 %v3205, %v3816
      %v3887 = vadd.f32 %v3206, %v3818
      %v3888 = vadd.f32 %v3207, %v3821
      %v3889 = vadd.f32 %v3208, %v3823
      %v3890 = vadd.f32 %v3209, %v3826
      %v3891 = vadd.f32 %v3210, %v3828
      %v3892 = vadd.f32 %v3211, %v3831
      %v3893 = vadd.f32 %v3212, %v3833
      %v3894 = vadd.f32 %v3213, %v3836
      %v3895 = vadd.f32 %v3214, %v3838
      %v3896 = vadd.f32 %v3215, %v3841
      %v3897 = vadd.f32 %v3216, %v3843
      %v3898 = vadd.f32 %v3217, %v3846
      %v3899 = vadd.f32 %v3218, %v3848
      %v3900 = vadd.f32 %v3219, %v3851
      %v3901 = vadd.f32 %v3220, %v3853
      %v3902 = vadd.f32 %v3221, %v3856
      %v3903 = vadd.f32 %v3222, %v3858
      %v3904 = vadd.f32 %v3223, %v3861
      %v3905 = vadd.f32 %v3224, %v3863
      %v3906 = vadd.f32 %v3225, %v3866
      %v3907 = vadd.f32 %v3226, %v3868
      %v3908 = vadd.f32 %v3227, %v3871
      %v3909 = vadd.f32 %v3228, %v3873
      %v3910 = vadd.f32 %v3229, %v3876
      %v3911 = vadd.f32 %v3230, %v3878
      %v3912 = vld [vmem:[%s2917] sm:$0xe]
      %v3913 = vld [vmem:[%s2917 + $0xc] sm:$0xe]
      %v3914 = vld [vmem:[%s2917 + $0x18] sm:$0xe]
      %v3915 = vld [vmem:[%s2917 + $0x24] sm:$0xe]
      %v3916 = vld [vmem:[%s2917 + $0x30] sm:$0xe]
      %v3917 = vld [vmem:[%s2917 + $0x3c] sm:$0xe]
      %v3918 = vld [vmem:[%s2917 + $0x48] sm:$0xe]
      %v3919 = vld [vmem:[%s2917 + $0x54] sm:$0xe]
      %v3920 = vld [vmem:[%s2917 + $0x60] sm:$0xe]
      %v3921 = vld [vmem:[%s2917 + $0x6c] sm:$0xe]
      %v3922 = vld [vmem:[%s2917 + $0x78] sm:$0xe]
      %v3923 = vld [vmem:[%s2917 + $0x84] sm:$0xe]
      %v3924 = vld [vmem:[%s2917 + $0x90] sm:$0xe]
      %v3925 = vld [vmem:[%s2917 + $0x9c] sm:$0xe]
      %v3926 = vld [vmem:[%s2917 + $0xa8] sm:$0xe]
      %v3927 = vld [vmem:[%s2917 + $0xb4] sm:$0xe]
      %v3976 = vrot.slane %v3912, 5
      %v3977 = vrot.slane %v3976, 4
      %v3978 = vrot.slane %v3232, 5
      %v3979 = vsel %vm1135, %v3977, %v3978
      %v3980 = vrot.slane %v3978, 4
      %v3981 = vrot.slane %v3233, 5
      %v3982 = vsel %vm1135, %v3980, %v3981
      %v3983 = vrot.slane %v3913, 5
      %v3984 = vrot.slane %v3983, 4
      %v3985 = vrot.slane %v3235, 5
      %v3986 = vsel %vm1135, %v3984, %v3985
      %v3987 = vrot.slane %v3985, 4
      %v3988 = vrot.slane %v3236, 5
      %v3989 = vsel %vm1135, %v3987, %v3988
      %v3990 = vrot.slane %v3914, 5
      %v3991 = vrot.slane %v3990, 4
      %v3992 = vrot.slane %v3238, 5
      %v3993 = vsel %vm1135, %v3991, %v3992
      %v3994 = vrot.slane %v3992, 4
      %v3995 = vrot.slane %v3239, 5
      %v3996 = vsel %vm1135, %v3994, %v3995
      %v3997 = vrot.slane %v3915, 5
      %v3998 = vrot.slane %v3997, 4
      %v3999 = vrot.slane %v3241, 5
      %v4000 = vsel %vm1135, %v3998, %v3999
      %v4001 = vrot.slane %v3999, 4
      %v4002 = vrot.slane %v3242, 5
      %v4003 = vsel %vm1135, %v4001, %v4002
      %v4004 = vrot.slane %v3916, 5
      %v4005 = vrot.slane %v4004, 4
      %v4006 = vrot.slane %v3244, 5
      %v4007 = vsel %vm1135, %v4005, %v4006
      %v4008 = vrot.slane %v4006, 4
      %v4009 = vrot.slane %v3245, 5
      %v4010 = vsel %vm1135, %v4008, %v4009
      %v4011 = vrot.slane %v3917, 5
      %v4012 = vrot.slane %v4011, 4
      %v4013 = vrot.slane %v3247, 5
      %v4014 = vsel %vm1135, %v4012, %v4013
      %v4015 = vrot.slane %v4013, 4
      %v4016 = vrot.slane %v3248, 5
      %v4017 = vsel %vm1135, %v4015, %v4016
      %v4018 = vrot.slane %v3918, 5
      %v4019 = vrot.slane %v4018, 4
      %v4020 = vrot.slane %v3250, 5
      %v4021 = vsel %vm1135, %v4019, %v4020
      %v4022 = vrot.slane %v4020, 4
      %v4023 = vrot.slane %v3251, 5
      %v4024 = vsel %vm1135, %v4022, %v4023
      %v4025 = vrot.slane %v3919, 5
      %v4026 = vrot.slane %v4025, 4
      %v4027 = vrot.slane %v3253, 5
      %v4028 = vsel %vm1135, %v4026, %v4027
      %v4029 = vrot.slane %v4027, 4
      %v4030 = vrot.slane %v3254, 5
      %v4031 = vsel %vm1135, %v4029, %v4030
      %v4032 = vrot.slane %v3920, 5
      %v4033 = vrot.slane %v4032, 4
      %v4034 = vrot.slane %v3256, 5
      %v4035 = vsel %vm1135, %v4033, %v4034
      %v4036 = vrot.slane %v4034, 4
      %v4037 = vrot.slane %v3257, 5
      %v4038 = vsel %vm1135, %v4036, %v4037
      %v4039 = vrot.slane %v3921, 5
      %v4040 = vrot.slane %v4039, 4
      %v4041 = vrot.slane %v3259, 5
      %v4042 = vsel %vm1135, %v4040, %v4041
      %v4043 = vrot.slane %v4041, 4
      %v4044 = vrot.slane %v3260, 5
      %v4045 = vsel %vm1135, %v4043, %v4044
      %v4046 = vrot.slane %v3922, 5
      %v4047 = vrot.slane %v4046, 4
      %v4048 = vrot.slane %v3262, 5
      %v4049 = vsel %vm1135, %v4047, %v4048
      %v4050 = vrot.slane %v4048, 4
      %v4051 = vrot.slane %v3263, 5
      %v4052 = vsel %vm1135, %v4050, %v4051
      %v4053 = vrot.slane %v3923, 5
      %v4054 = vrot.slane %v4053, 4
      %v4055 = vrot.slane %v3265, 5
      %v4056 = vsel %vm1135, %v4054, %v4055
      %v4057 = vrot.slane %v4055, 4
      %v4058 = vrot.slane %v3266, 5
      %v4059 = vsel %vm1135, %v4057, %v4058
      %v4060 = vrot.slane %v3924, 5
      %v4061 = vrot.slane %v4060, 4
      %v4062 = vrot.slane %v3268, 5
      %v4063 = vsel %vm1135, %v4061, %v4062
      %v4064 = vrot.slane %v4062, 4
      %v4065 = vrot.slane %v3269, 5
      %v4066 = vsel %vm1135, %v4064, %v4065
      %v4067 = vrot.slane %v3925, 5
      %v4068 = vrot.slane %v4067, 4
      %v4069 = vrot.slane %v3271, 5
      %v4070 = vsel %vm1135, %v4068, %v4069
      %v4071 = vrot.slane %v4069, 4
      %v4072 = vrot.slane %v3272, 5
      %v4073 = vsel %vm1135, %v4071, %v4072
      %v4074 = vrot.slane %v3926, 5
      %v4075 = vrot.slane %v4074, 4
      %v4076 = vrot.slane %v3274, 5
      %v4077 = vsel %vm1135, %v4075, %v4076
      %v4078 = vrot.slane %v4076, 4
      %v4079 = vrot.slane %v3275, 5
      %v4080 = vsel %vm1135, %v4078, %v4079
      %v4081 = vrot.slane %v3927, 5
      %v4082 = vrot.slane %v4081, 4
      %v4083 = vrot.slane %v3277, 5
      %v4084 = vsel %vm1135, %v4082, %v4083
      %v4085 = vrot.slane %v4083, 4
      %v4086 = vrot.slane %v3278, 5
      %v4087 = vsel %vm1135, %v4085, %v4086
      %v4088 = vld [vmem:[%s1 + $0x100] sm:$0xf]
      %v4089 = vld [vmem:[%s1 + $0x104] sm:$0xf]
      %v4090 = vld [vmem:[%s1 + $0x108] sm:$0xf]
      %v4091 = vld [vmem:[%s1 + $0x10c] sm:$0xf]
      %v4092 = vld [vmem:[%s1 + $0x110] sm:$0xf]
      %v4093 = vld [vmem:[%s1 + $0x114] sm:$0xf]
      %v4094 = vld [vmem:[%s1 + $0x118] sm:$0xf]
      %v4095 = vld [vmem:[%s1 + $0x11c] sm:$0xf]
      %v4096 = vunpack.c.l.b16 %v3979
      %v4097 = vunpack.c.l.b16 %v3982
      %v4098 = vunpack.c.l.b16 %v3986
      %v4099 = vunpack.c.l.b16 %v3989
      %v4100 = vunpack.c.l.b16 %v3993
      %v4101 = vunpack.c.l.b16 %v3996
      %v4102 = vunpack.c.l.b16 %v4000
      %v4103 = vunpack.c.l.b16 %v4003
      %v4104 = vunpack.c.l.b16 %v4007
      %v4105 = vunpack.c.l.b16 %v4010
      %v4106 = vunpack.c.l.b16 %v4014
      %v4107 = vunpack.c.l.b16 %v4017
      %v4108 = vunpack.c.l.b16 %v4021
      %v4109 = vunpack.c.l.b16 %v4024
      %v4110 = vunpack.c.l.b16 %v4028
      %v4111 = vunpack.c.l.b16 %v4031
      %v4112 = vunpack.c.l.b16 %v4035
      %v4113 = vunpack.c.l.b16 %v4038
      %v4114 = vunpack.c.l.b16 %v4042
      %v4115 = vunpack.c.l.b16 %v4045
      %v4116 = vunpack.c.l.b16 %v4049
      %v4117 = vunpack.c.l.b16 %v4052
      %v4118 = vunpack.c.l.b16 %v4056
      %v4119 = vunpack.c.l.b16 %v4059
      %v4120 = vunpack.c.l.b16 %v4063
      %v4121 = vunpack.c.l.b16 %v4066
      %v4122 = vunpack.c.l.b16 %v4070
      %v4123 = vunpack.c.l.b16 %v4073
      %v4124 = vunpack.c.l.b16 %v4077
      %v4125 = vunpack.c.l.b16 %v4080
      %v4126 = vunpack.c.l.b16 %v4084
      %v4127 = vunpack.c.l.b16 %v4087
      %v4128 = vpack.c.b16 %v4097, %v4096
      %v4129 = vpack.c.b16 %v4099, %v4098
      %v4130 = vpack.c.b16 %v4101, %v4100
      %v4131 = vpack.c.b16 %v4103, %v4102
      %v4132 = vpack.c.b16 %v4105, %v4104
      %v4133 = vpack.c.b16 %v4107, %v4106
      %v4134 = vpack.c.b16 %v4109, %v4108
      %v4135 = vpack.c.b16 %v4111, %v4110
      %v4136 = vpack.c.b16 %v4113, %v4112
      %v4137 = vpack.c.b16 %v4115, %v4114
      %v4138 = vpack.c.b16 %v4117, %v4116
      %v4139 = vpack.c.b16 %v4119, %v4118
      %v4140 = vpack.c.b16 %v4121, %v4120
      %v4141 = vpack.c.b16 %v4123, %v4122
      %v4142 = vpack.c.b16 %v4125, %v4124
      %v4143 = vpack.c.b16 %v4127, %v4126
      %v4152 = vunpack.c.l.b16 %v4088
      %v4153 = vunpack.c.l.b16 %v4089
      %v4154 = vunpack.c.l.b16 %v4090
      %v4155 = vunpack.c.l.b16 %v4091
      %v4156 = vunpack.c.l.b16 %v4092
      %v4157 = vunpack.c.l.b16 %v4093
      %v4158 = vunpack.c.l.b16 %v4094
      %v4159 = vunpack.c.l.b16 %v4095
      %v4160 = vpack.c.b16 %v4153, %v4152
      %v4161 = vpack.c.b16 %v4155, %v4154
      %v4162 = vpack.c.b16 %v4157, %v4156
      %v4163 = vpack.c.b16 %v4159, %v4158
      %v4169 = vsel %vm706, %v4128, 0
      %v4172 = vsel %vm706, %v4129, 0
      %v4175 = vsel %vm706, %v4130, 0
      %v4178 = vsel %vm706, %v4131, 0
      %v4181 = vsel %vm706, %v4132, 0
      %v4184 = vsel %vm706, %v4133, 0
      %v4187 = vsel %vm706, %v4134, 0
      %v4190 = vsel %vm706, %v4135, 0
      %v4193 = vsel %vm706, %v4136, 0
      %v4196 = vsel %vm706, %v4137, 0
      %v4199 = vsel %vm706, %v4138, 0
      %v4202 = vsel %vm706, %v4139, 0
      %v4205 = vsel %vm706, %v4140, 0
      %v4208 = vsel %vm706, %v4141, 0
      %v4211 = vsel %vm706, %v4142, 0
      %v4214 = vsel %vm706, %v4143, 0
      %4216 = vmatpush.bf16.msra.mxu0 0
      %4217 = vmatpush.bf16.msra.mxu0 0
      %4218 = vmatpush.bf16.msra.mxu0 0
      %4219 = vmatpush.bf16.msra.mxu0 0
      %4220 = vmatpush.bf16.msra.mxu0 %v4163
      %4221 = vmatpush.bf16.msra.mxu0 %v4162
      %4222 = vmatpush.bf16.msra.mxu0 %v4161
      %4223 = vmatpush.bf16.msra.mxu0 %v4160
      %4224 = vmatmul.bf16.gmra.mxu0 %v4169
      %v4225 = vpop.f32.mrf.mxu0
      %v4226 = vadd.f32 0.0, %v4225
      %v4227 = vpop.f32.mrf.mxu0
      %v4228 = vadd.f32 0.0, %v4227
      %4229 = vmatmul.bf16.gmra.mxu0 %v4172
      %v4230 = vpop.f32.mrf.mxu0
      %v4231 = vadd.f32 0.0, %v4230
      %v4232 = vpop.f32.mrf.mxu0
      %v4233 = vadd.f32 0.0, %v4232
      %4234 = vmatmul.bf16.gmra.mxu0 %v4175
      %v4235 = vpop.f32.mrf.mxu0
      %v4236 = vadd.f32 0.0, %v4235
      %v4237 = vpop.f32.mrf.mxu0
      %v4238 = vadd.f32 0.0, %v4237
      %4239 = vmatmul.bf16.gmra.mxu0 %v4178
      %v4240 = vpop.f32.mrf.mxu0
      %v4241 = vadd.f32 0.0, %v4240
      %v4242 = vpop.f32.mrf.mxu0
      %v4243 = vadd.f32 0.0, %v4242
      %4244 = vmatmul.bf16.gmra.mxu0 %v4181
      %v4245 = vpop.f32.mrf.mxu0
      %v4246 = vadd.f32 0.0, %v4245
      %v4247 = vpop.f32.mrf.mxu0
      %v4248 = vadd.f32 0.0, %v4247
      %4249 = vmatmul.bf16.gmra.mxu0 %v4184
      %v4250 = vpop.f32.mrf.mxu0
      %v4251 = vadd.f32 0.0, %v4250
      %v4252 = vpop.f32.mrf.mxu0
      %v4253 = vadd.f32 0.0, %v4252
      %4254 = vmatmul.bf16.gmra.mxu0 %v4187
      %v4255 = vpop.f32.mrf.mxu0
      %v4256 = vadd.f32 0.0, %v4255
      %v4257 = vpop.f32.mrf.mxu0
      %v4258 = vadd.f32 0.0, %v4257
      %4259 = vmatmul.bf16.gmra.mxu0 %v4190
      %v4260 = vpop.f32.mrf.mxu0
      %v4261 = vadd.f32 0.0, %v4260
      %v4262 = vpop.f32.mrf.mxu0
      %v4263 = vadd.f32 0.0, %v4262
      %4264 = vmatmul.bf16.gmra.mxu0 %v4193
      %v4265 = vpop.f32.mrf.mxu0
      %v4266 = vadd.f32 0.0, %v4265
      %v4267 = vpop.f32.mrf.mxu0
      %v4268 = vadd.f32 0.0, %v4267
      %4269 = vmatmul.bf16.gmra.mxu0 %v4196
      %v4270 = vpop.f32.mrf.mxu0
      %v4271 = vadd.f32 0.0, %v4270
      %v4272 = vpop.f32.mrf.mxu0
      %v4273 = vadd.f32 0.0, %v4272
      %4274 = vmatmul.bf16.gmra.mxu0 %v4199
      %v4275 = vpop.f32.mrf.mxu0
      %v4276 = vadd.f32 0.0, %v4275
      %v4277 = vpop.f32.mrf.mxu0
      %v4278 = vadd.f32 0.0, %v4277
      %4279 = vmatmul.bf16.gmra.mxu0 %v4202
      %v4280 = vpop.f32.mrf.mxu0
      %v4281 = vadd.f32 0.0, %v4280
      %v4282 = vpop.f32.mrf.mxu0
      %v4283 = vadd.f32 0.0, %v4282
      %4284 = vmatmul.bf16.gmra.mxu0 %v4205
      %v4285 = vpop.f32.mrf.mxu0
      %v4286 = vadd.f32 0.0, %v4285
      %v4287 = vpop.f32.mrf.mxu0
      %v4288 = vadd.f32 0.0, %v4287
      %4289 = vmatmul.bf16.gmra.mxu0 %v4208
      %v4290 = vpop.f32.mrf.mxu0
      %v4291 = vadd.f32 0.0, %v4290
      %v4292 = vpop.f32.mrf.mxu0
      %v4293 = vadd.f32 0.0, %v4292
      %4294 = vmatmul.bf16.gmra.mxu0 %v4211
      %v4295 = vpop.f32.mrf.mxu0
      %v4296 = vadd.f32 0.0, %v4295
      %v4297 = vpop.f32.mrf.mxu0
      %v4298 = vadd.f32 0.0, %v4297
      %4299 = vmatmul.bf16.gmra.mxu0 %v4214
      %v4300 = vpop.f32.mrf.mxu0
      %v4301 = vadd.f32 0.0, %v4300
      %v4302 = vpop.f32.mrf.mxu0
      %v4303 = vadd.f32 0.0, %v4302
      %4304 = vdwg.mxu0
      %v4305 = vadd.f32 %v3880, %v4226
      %v4306 = vadd.f32 %v3881, %v4228
      %v4307 = vadd.f32 %v3882, %v4231
      %v4308 = vadd.f32 %v3883, %v4233
      %v4309 = vadd.f32 %v3884, %v4236
      %v4310 = vadd.f32 %v3885, %v4238
      %v4311 = vadd.f32 %v3886, %v4241
      %v4312 = vadd.f32 %v3887, %v4243
      %v4313 = vadd.f32 %v3888, %v4246
      %v4314 = vadd.f32 %v3889, %v4248
      %v4315 = vadd.f32 %v3890, %v4251
      %v4316 = vadd.f32 %v3891, %v4253
      %v4317 = vadd.f32 %v3892, %v4256
      %v4318 = vadd.f32 %v3893, %v4258
      %v4319 = vadd.f32 %v3894, %v4261
      %v4320 = vadd.f32 %v3895, %v4263
      %v4321 = vadd.f32 %v3896, %v4266
      %v4322 = vadd.f32 %v3897, %v4268
      %v4323 = vadd.f32 %v3898, %v4271
      %v4324 = vadd.f32 %v3899, %v4273
      %v4325 = vadd.f32 %v3900, %v4276
      %v4326 = vadd.f32 %v3901, %v4278
      %v4327 = vadd.f32 %v3902, %v4281
      %v4328 = vadd.f32 %v3903, %v4283
      %v4329 = vadd.f32 %v3904, %v4286
      %v4330 = vadd.f32 %v3905, %v4288
      %v4331 = vadd.f32 %v3906, %v4291
      %v4332 = vadd.f32 %v3907, %v4293
      %v4333 = vadd.f32 %v3908, %v4296
      %v4334 = vadd.f32 %v3909, %v4298
      %v4335 = vadd.f32 %v3910, %v4301
      %v4336 = vadd.f32 %v3911, %v4303
      %4337 = vst.msk [vmem:[%s177] sm:$0xff] %vm706, %v4305
      %4338 = vst.msk [vmem:[%s177 + $0x8] sm:$0xff] %vm706, %v4306
      %4339 = vst.msk [vmem:[%s177 + $0x10] sm:$0xff] %vm706, %v4307
      %4340 = vst.msk [vmem:[%s177 + $0x18] sm:$0xff] %vm706, %v4308
      %4341 = vst.msk [vmem:[%s177 + $0x20] sm:$0xff] %vm706, %v4309
      %4342 = vst.msk [vmem:[%s177 + $0x28] sm:$0xff] %vm706, %v4310
      %4343 = vst.msk [vmem:[%s177 + $0x30] sm:$0xff] %vm706, %v4311
      %4344 = vst.msk [vmem:[%s177 + $0x38] sm:$0xff] %vm706, %v4312
      %4345 = vst.msk [vmem:[%s177 + $0x40] sm:$0xff] %vm706, %v4313
      %4346 = vst.msk [vmem:[%s177 + $0x48] sm:$0xff] %vm706, %v4314
      %4347 = vst.msk [vmem:[%s177 + $0x50] sm:$0xff] %vm706, %v4315
      %4348 = vst.msk [vmem:[%s177 + $0x58] sm:$0xff] %vm706, %v4316
      %4349 = vst.msk [vmem:[%s177 + $0x60] sm:$0xff] %vm706, %v4317
      %4350 = vst.msk [vmem:[%s177 + $0x68] sm:$0xff] %vm706, %v4318
      %4351 = vst.msk [vmem:[%s177 + $0x70] sm:$0xff] %vm706, %v4319
      %4352 = vst.msk [vmem:[%s177 + $0x78] sm:$0xff] %vm706, %v4320
      %4353 = vst.msk [vmem:[%s177 + $0x80] sm:$0xff] %vm706, %v4321
      %4354 = vst.msk [vmem:[%s177 + $0x88] sm:$0xff] %vm706, %v4322
      %4355 = vst.msk [vmem:[%s177 + $0x90] sm:$0xff] %vm706, %v4323
      %4356 = vst.msk [vmem:[%s177 + $0x98] sm:$0xff] %vm706, %v4324
      %4357 = vst.msk [vmem:[%s177 + $0xa0] sm:$0xff] %vm706, %v4325
      %4358 = vst.msk [vmem:[%s177 + $0xa8] sm:$0xff] %vm706, %v4326
      %4359 = vst.msk [vmem:[%s177 + $0xb0] sm:$0xff] %vm706, %v4327
      %4360 = vst.msk [vmem:[%s177 + $0xb8] sm:$0xff] %vm706, %v4328
      %4361 = vst.msk [vmem:[%s177 + $0xc0] sm:$0xff] %vm706, %v4329
      %4362 = vst.msk [vmem:[%s177 + $0xc8] sm:$0xff] %vm706, %v4330
      %4363 = vst.msk [vmem:[%s177 + $0xd0] sm:$0xff] %vm706, %v4331
      %4364 = vst.msk [vmem:[%s177 + $0xd8] sm:$0xff] %vm706, %v4332
      %4365 = vst.msk [vmem:[%s177 + $0xe0] sm:$0xff] %vm706, %v4333
      %4366 = vst.msk [vmem:[%s177 + $0xe8] sm:$0xff] %vm706, %v4334
      %4367 = vst.msk [vmem:[%s177 + $0xf0] sm:$0xff] %vm706, %v4335
      %4368 = vst.msk [vmem:[%s177 + $0xf8] sm:$0xff] %vm706, %v4336
      %v4369 = vsel %vm706, %v4305, 0.0
      %v4370 = vsel %vm706, %v4306, 0.0
      %v4371 = vadd.f32 %v4369, %v4370
      %v4372 = vsel %vm706, %v4307, 0.0
      %v4373 = vadd.f32 %v4371, %v4372
      %v4374 = vsel %vm706, %v4308, 0.0
      %v4375 = vadd.f32 %v4373, %v4374
      %v4376 = vsel %vm706, %v4309, 0.0
      %v4377 = vadd.f32 %v4375, %v4376
      %v4378 = vsel %vm706, %v4310, 0.0
      %v4379 = vadd.f32 %v4377, %v4378
      %v4380 = vsel %vm706, %v4311, 0.0
      %v4381 = vadd.f32 %v4379, %v4380
      %v4382 = vsel %vm706, %v4312, 0.0
      %v4383 = vadd.f32 %v4381, %v4382
      %v4384 = vsel %vm706, %v4313, 0.0
      %v4385 = vadd.f32 %v4383, %v4384
      %v4386 = vsel %vm706, %v4314, 0.0
      %v4387 = vadd.f32 %v4385, %v4386
      %v4388 = vsel %vm706, %v4315, 0.0
      %v4389 = vadd.f32 %v4387, %v4388
      %v4390 = vsel %vm706, %v4316, 0.0
      %v4391 = vadd.f32 %v4389, %v4390
      %v4392 = vsel %vm706, %v4317, 0.0
      %v4393 = vadd.f32 %v4391, %v4392
      %v4394 = vsel %vm706, %v4318, 0.0
      %v4395 = vadd.f32 %v4393, %v4394
      %v4396 = vsel %vm706, %v4319, 0.0
      %v4397 = vadd.f32 %v4395, %v4396
      %v4398 = vsel %vm706, %v4320, 0.0
      %v4399 = vadd.f32 %v4397, %v4398
      %v4400 = vsel %vm706, %v4321, 0.0
      %v4401 = vadd.f32 %v4399, %v4400
      %v4402 = vsel %vm706, %v4322, 0.0
      %v4403 = vadd.f32 %v4401, %v4402
      %v4404 = vsel %vm706, %v4323, 0.0
      %v4405 = vadd.f32 %v4403, %v4404
      %v4406 = vsel %vm706, %v4324, 0.0
      %v4407 = vadd.f32 %v4405, %v4406
      %v4408 = vsel %vm706, %v4325, 0.0
      %v4409 = vadd.f32 %v4407, %v4408
      %v4410 = vsel %vm706, %v4326, 0.0
      %v4411 = vadd.f32 %v4409, %v4410
      %v4412 = vsel %vm706, %v4327, 0.0
      %v4413 = vadd.f32 %v4411, %v4412
      %v4414 = vsel %vm706, %v4328, 0.0
      %v4415 = vadd.f32 %v4413, %v4414
      %v4416 = vsel %vm706, %v4329, 0.0
      %v4417 = vadd.f32 %v4415, %v4416
      %v4418 = vsel %vm706, %v4330, 0.0
      %v4419 = vadd.f32 %v4417, %v4418
      %v4420 = vsel %vm706, %v4331, 0.0
      %v4421 = vadd.f32 %v4419, %v4420
      %v4422 = vsel %vm706, %v4332, 0.0
      %v4423 = vadd.f32 %v4421, %v4422
      %v4424 = vsel %vm706, %v4333, 0.0
      %v4425 = vadd.f32 %v4423, %v4424
      %v4426 = vsel %vm706, %v4334, 0.0
      %v4427 = vadd.f32 %v4425, %v4426
      %v4428 = vsel %vm706, %v4335, 0.0
      %v4429 = vadd.f32 %v4427, %v4428
      %v4430 = vsel %vm706, %v4336, 0.0
      %v4431 = vadd.f32 %v4429, %v4430
      %v4432 = vrot.slane %v4431, 4
      %v4433 = vadd.f32 %v4431, %v4432
      %v4434 = vrot.slane %v4433, 2
      %v4435 = vadd.f32 %v4433, %v4434
      %v4436 = vrot.slane %v4435, 1
      %v4437 = vadd.f32 %v4435, %v4436
      %v4438 = vmul.f32 %v4305, %v4305
      %v4439 = vmul.f32 %v4306, %v4306
      %v4440 = vmul.f32 %v4307, %v4307
      %v4441 = vmul.f32 %v4308, %v4308
      %v4442 = vmul.f32 %v4309, %v4309
      %v4443 = vmul.f32 %v4310, %v4310
      %v4444 = vmul.f32 %v4311, %v4311
      %v4445 = vmul.f32 %v4312, %v4312
      %v4446 = vmul.f32 %v4313, %v4313
      %v4447 = vmul.f32 %v4314, %v4314
      %v4448 = vmul.f32 %v4315, %v4315
      %v4449 = vmul.f32 %v4316, %v4316
      %v4450 = vmul.f32 %v4317, %v4317
      %v4451 = vmul.f32 %v4318, %v4318
      %v4452 = vmul.f32 %v4319, %v4319
      %v4453 = vmul.f32 %v4320, %v4320
      %v4454 = vmul.f32 %v4321, %v4321
      %v4455 = vmul.f32 %v4322, %v4322
      %v4456 = vmul.f32 %v4323, %v4323
      %v4457 = vmul.f32 %v4324, %v4324
      %v4458 = vmul.f32 %v4325, %v4325
      %v4459 = vmul.f32 %v4326, %v4326
      %v4460 = vmul.f32 %v4327, %v4327
      %v4461 = vmul.f32 %v4328, %v4328
      %v4462 = vmul.f32 %v4329, %v4329
      %v4463 = vmul.f32 %v4330, %v4330
      %v4464 = vmul.f32 %v4331, %v4331
      %v4465 = vmul.f32 %v4332, %v4332
      %v4466 = vmul.f32 %v4333, %v4333
      %v4467 = vmul.f32 %v4334, %v4334
      %v4468 = vmul.f32 %v4335, %v4335
      %v4469 = vmul.f32 %v4336, %v4336
      %v4470 = vsel %vm706, %v4438, 0.0
      %v4471 = vsel %vm706, %v4439, 0.0
      %v4472 = vadd.f32 %v4470, %v4471
      %v4473 = vsel %vm706, %v4440, 0.0
      %v4474 = vadd.f32 %v4472, %v4473
      %v4475 = vsel %vm706, %v4441, 0.0
      %v4476 = vadd.f32 %v4474, %v4475
      %v4477 = vsel %vm706, %v4442, 0.0
      %v4478 = vadd.f32 %v4476, %v4477
      %v4479 = vsel %vm706, %v4443, 0.0
      %v4480 = vadd.f32 %v4478, %v4479
      %v4481 = vsel %vm706, %v4444, 0.0
      %v4482 = vadd.f32 %v4480, %v4481
      %v4483 = vsel %vm706, %v4445, 0.0
      %v4484 = vadd.f32 %v4482, %v4483
      %v4485 = vsel %vm706, %v4446, 0.0
      %v4486 = vadd.f32 %v4484, %v4485
      %v4487 = vsel %vm706, %v4447, 0.0
      %v4488 = vadd.f32 %v4486, %v4487
      %v4489 = vsel %vm706, %v4448, 0.0
      %v4490 = vadd.f32 %v4488, %v4489
      %v4491 = vsel %vm706, %v4449, 0.0
      %v4492 = vadd.f32 %v4490, %v4491
      %v4493 = vsel %vm706, %v4450, 0.0
      %v4494 = vadd.f32 %v4492, %v4493
      %v4495 = vsel %vm706, %v4451, 0.0
      %v4496 = vadd.f32 %v4494, %v4495
      %v4497 = vsel %vm706, %v4452, 0.0
      %v4498 = vadd.f32 %v4496, %v4497
      %v4499 = vsel %vm706, %v4453, 0.0
      %v4500 = vadd.f32 %v4498, %v4499
      %v4501 = vsel %vm706, %v4454, 0.0
      %v4502 = vadd.f32 %v4500, %v4501
      %v4503 = vsel %vm706, %v4455, 0.0
      %v4504 = vadd.f32 %v4502, %v4503
      %v4505 = vsel %vm706, %v4456, 0.0
      %v4506 = vadd.f32 %v4504, %v4505
      %v4507 = vsel %vm706, %v4457, 0.0
      %v4508 = vadd.f32 %v4506, %v4507
      %v4509 = vsel %vm706, %v4458, 0.0
      %v4510 = vadd.f32 %v4508, %v4509
      %v4511 = vsel %vm706, %v4459, 0.0
      %v4512 = vadd.f32 %v4510, %v4511
      %v4513 = vsel %vm706, %v4460, 0.0
      %v4514 = vadd.f32 %v4512, %v4513
      %v4515 = vsel %vm706, %v4461, 0.0
      %v4516 = vadd.f32 %v4514, %v4515
      %v4517 = vsel %vm706, %v4462, 0.0
      %v4518 = vadd.f32 %v4516, %v4517
      %v4519 = vsel %vm706, %v4463, 0.0
      %v4520 = vadd.f32 %v4518, %v4519
      %v4521 = vsel %vm706, %v4464, 0.0
      %v4522 = vadd.f32 %v4520, %v4521
      %v4523 = vsel %vm706, %v4465, 0.0
      %v4524 = vadd.f32 %v4522, %v4523
      %v4525 = vsel %vm706, %v4466, 0.0
      %v4526 = vadd.f32 %v4524, %v4525
      %v4527 = vsel %vm706, %v4467, 0.0
      %v4528 = vadd.f32 %v4526, %v4527
      %v4529 = vsel %vm706, %v4468, 0.0
      %v4530 = vadd.f32 %v4528, %v4529
      %v4531 = vsel %vm706, %v4469, 0.0
      %v4532 = vadd.f32 %v4530, %v4531
      %v4533 = vrot.slane %v4532, 4
      %v4534 = vadd.f32 %v4532, %v4533
      %v4535 = vrot.slane %v4534, 2
      %v4536 = vadd.f32 %v4534, %v4535
      %v4537 = vrot.slane %v4536, 1
      %v4538 = vadd.f32 %v4536, %v4537
      %vm4539 = vcmask 1040384
      %v4540 = vsel %vm4539, %v4437, %v4538
      %vm4541 = vcmask 517120
      %4542 = vst.msk [vmem:[%s181] sm:$0x3] %vm4541, %v4540
      %p4543 = scmp.lt.s32.totalorder %s15, 1
      %s4544 = scalar_select %p4543, %s15, 1
      %s4545 = smul.addr %s4544, 32
      %s4546 = smul.addr %s4545, 8
      %s4547 = scalar_lea.vmem %s2, %s4546
      %p4548 = scmp.lt.s32.totalorder %s15, 1
      %s4549 = scalar_select %p4548, %s15, 1
      %s4550 = smul.addr %s4549, 2
      %s4551 = scalar_lea.vmem %s3, %s4550
      // Predicated region
      $region29: #{residual_block_forward.4} parent=27 // pred_check
        %p4552 = pneg %p80
      $region30: #{residual_block_forward.4} parent=27 // pred_check_branch
        %4554 = sbr.rel (%p4552) target = $region32
      $region31: #{residual_block_forward.4} parent=27 // pred_region
        _
      $region32: #{residual_block_forward.4} parent=27 // pred_fallthru
        _
      // Predicated region
      $region33: #{residual_block_forward.4} parent=27 // pred_check
        %p4555 = pneg %p106
      $region34: #{residual_block_forward.4} parent=27 // pred_check_branch
        %4557 = sbr.rel (%p4555) target = $region36
      $region35: #{residual_block_forward.4} parent=27 // pred_region
        _
      $region36: #{residual_block_forward.4} parent=27 // pred_fallthru
        _
    $region28: #{residual_block_forward.4} parent=5 // pred_fallthru
      _
    %p4558 = scmp.le.s32.totalorder 2, %s10
    // Predicated region
    $region37: #{residual_block_forward.4} parent=5 // pred_check
      %p4559 = pneg %p4558
    $region38: #{residual_block_forward.4} parent=5 // pred_check_branch
      %4561 = sbr.rel (%p4559) target = $region40
    $region39: #{residual_block_forward.4} parent=5 // pred_region
      %s4562 = ssub.s32 %s10, 2
      // Predicated region
      $region41: #{residual_block_forward.4} parent=39 // pred_check
        %p4563 = pneg %p86
      $region42: #{residual_block_forward.4} parent=39 // pred_check_branch
        %4565 = sbr.rel (%p4563) target = $region44
      $region43: #{residual_block_forward.4} parent=39 // pred_region
        %p4566 = scmp.lt.s32.totalorder %s16, 1
        %s4567 = scalar_select %p4566, %s16, 1
        %s4568 = smul.addr %s4567, 32
        %s4569 = smul.addr %s4568, 8
        %s4570 = scalar_lea.vmem %s2, %s4569
      $region44: #{residual_block_forward.4} parent=39 // pred_fallthru
        _
      // Predicated region
      $region45: #{residual_block_forward.4} parent=39 // pred_check
        %p4571 = pneg %p112
      $region46: #{residual_block_forward.4} parent=39 // pred_check_branch
        %4573 = sbr.rel (%p4571) target = $region48
      $region47: #{residual_block_forward.4} parent=39 // pred_region
        %p4574 = scmp.lt.s32.totalorder %s16, 1
        %s4575 = scalar_select %p4574, %s16, 1
        %s4576 = smul.addr %s4575, 2
        %s4577 = scalar_lea.vmem %s3, %s4576
      $region48: #{residual_block_forward.4} parent=39 // pred_fallthru
        _
    $region40: #{residual_block_forward.4} parent=5 // pred_fallthru
      _
  $region6: #{residual_block_forward.4} parent=0 // loop_footer
    %s14 = sadd.s32 1, %s10
  $region7: #{residual_block_forward.4} parent=0 // loop_footer_branch
    %9 = sbr.rel target = $region3
  $region8: #{residual_block_forward.4} parent=0 // loop_exit
    _

</llo_original>
